<compile_context>
chip_gen: v6e
topology: v6e:2x2x1
jax: 0.10.0
libtpu: 0.0.40
codegen_flags: <defaults>
</compile_context>

<pallas_src>
import functools

import jax
import jax.numpy as jnp
import numpy as np
from jax.experimental import pallas as pl
from jax.experimental.pallas import tpu as pltpu


# Taps of the original 3x3 kernel that collapse onto each 2x2 effective tap
# under nearest-2x upsampling.  _TAPS[d][s] = 3x3 taps reading low-res support
# offset s (0 = row/col "i-1+d", 1 = the next one) for output parity d.
#   d == 0:  O[2i]   = w0*X[i-1] + (w1+w2)*X[i]
#   d == 1:  O[2i+1] = (w0+w1)*X[i] + w2*X[i+1]
_TAPS = (((0,), (1, 2)),
         ((0, 1), (2,)))


def _upconv_kernel(x_ref, w_ref, b_ref, o_ref):
    """Fused 2x-nearest-upsample + 3x3 conv for one row tile.

    x_ref: (1, 1, TH+2, W+2, C)  overlapping padded low-res row tile (compute dtype)
    w_ref: (2, 2, 4C, C)         folded effective weights (compute dtype)
    b_ref: (1, C)                bias, float32
    o_ref: (1, 2, 2, TH*W, C)    phase-separated output (dy, dx, i*W+j, c)
    """
    th = x_ref.shape[2] - 2
    wp = x_ref.shape[3]
    c = x_ref.shape[4]
    w_lo = wp - 2

    bias = b_ref[...]  # (1, C): read once, hoisted out of the phase loop.
    for dy in range(2):
        for dx in range(2):
            # Fused 4C-contraction: lane-concat the four shifted low-res
            # windows; a single MXU launch per phase, no live accumulator.
            wins = [x_ref[0, 0, dy + a:dy + a + th, dx + b:dx + b + w_lo, :]
                    for a in (0, 1) for b in (0, 1)]
            lhs = jnp.concatenate(wins, axis=-1).reshape(th * w_lo, 4 * c)
            y = jnp.dot(lhs, w_ref[dy, dx],
                        preferred_element_type=jnp.float32) + bias
            o_ref[0, dy, dx] = y.astype(o_ref.dtype)


def _fold_weights(w_hwio, compute_dtype):
    """Fold the 3x3 HWIO kernel into (2, 2, 4*Cin, Cout) effective weights."""
    c_in, c_out = w_hwio.shape[2], w_hwio.shape[3]
    phases = []
    for dy in range(2):
        for dx in range(2):
            blocks = []
            for a in range(2):
                for b in range(2):
                    taps = [w_hwio[ky, kx]
                            for ky in _TAPS[dy][a] for kx in _TAPS[dx][b]]
                    acc = taps[0]
                    for t in taps[1:]:
                        acc = acc + t
                    blocks.append(acc)               # (Cin, Cout)
            phases.append(jnp.concatenate(blocks, axis=0))   # (4*Cin, Cout)
    weff = jnp.stack(phases, axis=0).reshape(2, 2, 4 * c_in, c_out)
    return weff.astype(compute_dtype)


def _resolve_compute_dtype(x_dtype, compute_dtype):
    if compute_dtype == "auto":
        # bf16 is the native MXU rate on v5e/v6e/v7x; accumulation stays f32.
        if jnp.dtype(x_dtype) == jnp.dtype(jnp.float32):
            return jnp.dtype(jnp.bfloat16)
        return jnp.dtype(x_dtype)
    if compute_dtype is None:
        return jnp.dtype(x_dtype)
    return jnp.dtype(compute_dtype)


def _vmem_budgets():
    """(row-tile budget, vmem_limit cap) — generation aware, safe fallback."""
    cap = 64 * 2 ** 20                       # conservative fallback (v7x-class)
    try:
        cap = int(pltpu.get_tpu_info().vmem_capacity_bytes)
    except Exception:
        pass
    if cap <= 64 * 2 ** 20:                  # v7x: 64 MiB VMEM per TensorCore
        return 28 * 2 ** 20, 48 * 2 ** 20
    return 56 * 2 ** 20, 100 * 2 ** 20       # v5e / v6e: 128 MiB VMEM


def _vmem_bytes_estimate(th, w_lo, c, in_item, out_item):
    """Rough VMEM footprint for one row tile (double-buffered I/O + temps)."""
    wp = w_lo + 2
    in_block = (th + 2) * wp * c * in_item            # overlapping input tile
    out_block = 4 * th * w_lo * c * out_item          # 4 parity phases
    weights = 16 * c * c * in_item + 4 * c            # folded Weff + f32 bias
    temps = th * w_lo * c * (4 * in_item + 4)         # fused lhs + f32 dot result
    return 2 * in_block + 2 * out_block + weights + temps


def _choose_row_tile(h, w_lo, c, in_item, out_item, budget, max_rows=64):
    """Largest legal divisor-of-H row tile that fits the VMEM budget."""
    divisors = [d for d in range(1, h + 1) if h % d == 0]
    # The out block's sublane dim is th*W: must be a multiple of 8 unless it
    # spans the whole H*W axis (th == h).
    legal = [d for d in divisors if (d * w_lo) % 8 == 0 or d == h]
    cands = [d for d in legal if d <= max_rows] or legal
    for th in sorted(cands, reverse=True):
        if _vmem_bytes_estimate(th, w_lo, c, in_item, out_item) <= budget:
            return th
    return min(cands)   # smallest legal tile: minimal-footprint fallback


@functools.partial(jax.jit, static_argnames=("with_conv", "compute_dtype"))
def upsample_forward(x_nchw, w_hwio, bias, with_conv=True, compute_dtype="auto"):
    """Forward of VQGAN Upsample.  x_nchw: (N, C, H, W) -> (N, C, 2H, 2W).

    w_hwio: (3, 3, C, C) conv weights in HWIO layout
            (PyTorch OIHW weights -> w.permute(2, 3, 1, 0)).
    compute_dtype: "auto" (bf16 MXU for f32 inputs, f32 accumulation),
                   None (use input dtype), or an explicit dtype.
    """
    N, C, H, W = x_nchw.shape

    # NCHW -> NHWC once, on the LOW-res tensor (channels on the lane axis).
    x_nhwc = jnp.transpose(x_nchw, (0, 2, 3, 1))

    if not with_conv:
        # TODO(synk): pure data-movement path (nearest upsample only) left to XLA.
        x_up = jnp.repeat(jnp.repeat(x_nhwc, 2, axis=1), 2, axis=2)
        return jnp.transpose(x_up, (0, 3, 1, 2))

    out_dtype = x_nchw.dtype
    cdt = _resolve_compute_dtype(x_nchw.dtype, compute_dtype)
    cdt_item = jnp.dtype(cdt).itemsize
    out_item = jnp.dtype(out_dtype).itemsize

    # Cast once in the wrapper (fuses with the transpose); no in-kernel casts.
    x_nhwc = x_nhwc.astype(cdt)

    # Zero-pad the low-res input once; the 2x upsample is fused into the
    # kernel so the 4x-sized upsampled image never touches HBM.
    xl = jnp.pad(x_nhwc, ((0, 0), (1, 1), (1, 1), (0, 0)))   # (N, H+2, W+2, C)
    Wp = W + 2

    tile_budget, limit_cap = _vmem_budgets()
    th = _choose_row_tile(H, W, C, cdt_item, out_item, budget=tile_budget)
    n_tiles = H // th
    # v7x has 2 TensorCores: make sure the "parallel" grid has >= 2 steps.
    if N * n_tiles < 2:
        smaller = [d for d in range(1, th) if H % d == 0 and (d * W) % 8 == 0]
        if smaller:
            th = max(smaller)
            n_tiles = H // th

    # Overlapping (th+2)-row tiles of the padded low-res input (vectorized
    # gather: no Python-loop halo stack, no in-kernel scratch assembly copy).
    if n_tiles == 1:
        xt = xl[:, None]                                   # (N, 1, H+2, Wp, C)
    else:
        row_idx = (jnp.arange(n_tiles)[:, None] * th
                   + jnp.arange(th + 2)[None, :])          # (n_tiles, th+2)
        xt = xl[:, row_idx]                                # (N, n_tiles, th+2, Wp, C)

    weff = _fold_weights(w_hwio, cdt)                      # (2, 2, 4C, C)
    b2d = bias.reshape(1, C).astype(jnp.float32)

    est = _vmem_bytes_estimate(th, W, C, cdt_item, out_item)
    vmem_limit = int(min(max(est * 2, 32 * 2 ** 20), limit_cap))

    out = pl.pallas_call(
        _upconv_kernel,
        out_shape=jax.ShapeDtypeStruct((N, 2, 2, H * W, C), out_dtype),
        grid_spec=pltpu.PrefetchScalarGridSpec(
            num_scalar_prefetch=0,
            grid=(N, n_tiles),
            in_specs=[
                pl.BlockSpec((1, 1, th + 2, Wp, C),
                             lambda n, h: (n, h, 0, 0, 0)),
                pl.BlockSpec((2, 2, 4 * C, C), lambda n, h: (0, 0, 0, 0)),
                pl.BlockSpec((1, C), lambda n, h: (0, 0)),
            ],
            out_specs=pl.BlockSpec((1, 2, 2, th * W, C),
                                   lambda n, h: (n, 0, 0, h, 0)),
        ),
        compiler_params=pltpu.CompilerParams(
            dimension_semantics=("parallel", "parallel"),
            vmem_limit_bytes=vmem_limit,
        ),
    )(xt, weff, b2d)

    # Interleave the 4 parity phases and return to NCHW.  This is the one XLA
    # transpose pass the NCHW API contract forces (see module TODO above).
    out6 = out.reshape(N, 2, 2, H, W, C)                   # (n, dy, dx, i, j, c)
    out_nchw = jnp.transpose(out6, (0, 5, 3, 1, 4, 2)).reshape(N, C, 2 * H, 2 * W)
    return out_nchw


def _reference(x_nchw, w_hwio, bias):
    """Pure-JAX reference for correctness check."""
    x_nhwc = jnp.transpose(x_nchw, (0, 2, 3, 1))
    x_up = jnp.repeat(jnp.repeat(x_nhwc, 2, axis=1), 2, axis=2)
    y = jax.lax.conv_general_dilated(
        x_up, w_hwio, window_strides=(1, 1), padding="SAME",
        dimension_numbers=("NHWC", "HWIO", "NHWC"))
    y = y + bias[None, None, None, :]
    return jnp.transpose(y, (0, 3, 1, 2))


if __name__ == "__main__":
    N, C, H, W = 2, 4, 16, 16
    key = jax.random.PRNGKey(0)
    kx, kw, kb = jax.random.split(key, 3)

    x = jax.random.normal(kx, (N, C, H, W), dtype=jnp.float32)
    # Conv2d(C, C, 3) parameters, deterministic init (HWIO layout).
    fan_in = C * 3 * 3
    bound = 1.0 / np.sqrt(fan_in)
    w = jax.random.uniform(kw, (3, 3, C, C), jnp.float32, -bound, bound)
    b = jax.random.uniform(kb, (C,), jnp.float32, -bound, bound)

    ref = jax.block_until_ready(_reference(x, w, b))

    # Exact-dtype path (f32 matmul): tight tolerance.
    out_f32 = jax.block_until_ready(
        upsample_forward(x, w, b, with_conv=True, compute_dtype=jnp.float32))
    assert out_f32.shape == (N, C, 2 * H, 2 * W), out_f32.shape
    np.testing.assert_allclose(np.asarray(out_f32), np.asarray(ref),
                               rtol=1e-5, atol=1e-5)

    # Default path (bf16 MXU inputs/weights, f32 accumulation): looser tolerance.
    out_def = jax.block_until_ready(upsample_forward(x, w, b, with_conv=True))
    assert out_def.shape == (N, C, 2 * H, 2 * W), out_def.shape
    np.testing.assert_allclose(np.asarray(out_def), np.asarray(ref),
                               rtol=5e-2, atol=5e-2)

    # Upsample-only path (with_conv=False).
    out_nc = jax.block_until_ready(upsample_forward(x, w, b, with_conv=False))
    assert out_nc.shape == (N, C, 2 * H, 2 * W), out_nc.shape

    print("KERNEL_OK")
</pallas_src>

<mosaic_0001>
module attributes {stable_mosaic.version = 11 : i64} {
  func.func @_upconv_kernel(%arg0: i32, %arg1: i32, %arg2: memref<1x1x18x18x4xf32, #tpu.memory_space<vmem>>, %arg3: memref<2x2x16x4xf32, #tpu.memory_space<vmem>>, %arg4: memref<1x4xf32, #tpu.memory_space<vmem>>, %arg5: memref<1x2x2x256x4xf32, #tpu.memory_space<vmem>>) attributes {dimension_semantics = [#tpu.dimension_semantics<parallel>, #tpu.dimension_semantics<parallel>], iteration_bounds = array<i64: 2, 1>, scalar_prefetch = 0 : i64, scratch_operands = 0 : i64, tpu.core_type = #tpu.core_type<tc>, window_params = [{transform_indices = @transform_0, window_bounds = array<i64: 1, 1, 18, 18, 4>}, {pipeline_mode = #tpu.pipeline_mode<synchronous>, transform_indices = @transform_1, window_bounds = array<i64: 2, 2, 16, 4>}, {pipeline_mode = #tpu.pipeline_mode<synchronous>, transform_indices = @transform_2, window_bounds = array<i64: 1, 4>}, {transform_indices = @transform_3, window_bounds = array<i64: 1, 2, 2, 256, 4>}]} {
    %c0 = arith.constant 0 : index
    %c0_0 = arith.constant 0 : index
    %0 = vector.load %arg4[%c0, %c0_0] : memref<1x4xf32, #tpu.memory_space<vmem>>, vector<1x4xf32>
    %c0_1 = arith.constant 0 : index
    %c0_2 = arith.constant 0 : index
    %c0_3 = arith.constant 0 : index
    %c0_4 = arith.constant 0 : index
    %c0_5 = arith.constant 0 : index
    %1 = vector.load %arg2[%c0_1, %c0_2, %c0_3, %c0_4, %c0_5] : memref<1x1x18x18x4xf32, #tpu.memory_space<vmem>>, vector<1x1x16x16x4xf32>
    %2 = vector.shape_cast %1 : vector<1x1x16x16x4xf32> to vector<16x16x4xf32>
    %c0_6 = arith.constant 0 : index
    %c0_7 = arith.constant 0 : index
    %c0_8 = arith.constant 0 : index
    %c1 = arith.constant 1 : index
    %c0_9 = arith.constant 0 : index
    %3 = vector.load %arg2[%c0_6, %c0_7, %c0_8, %c1, %c0_9] : memref<1x1x18x18x4xf32, #tpu.memory_space<vmem>>, vector<1x1x16x16x4xf32>
    %4 = vector.shape_cast %3 : vector<1x1x16x16x4xf32> to vector<16x16x4xf32>
    %c0_10 = arith.constant 0 : index
    %c0_11 = arith.constant 0 : index
    %c1_12 = arith.constant 1 : index
    %c0_13 = arith.constant 0 : index
    %c0_14 = arith.constant 0 : index
    %5 = vector.load %arg2[%c0_10, %c0_11, %c1_12, %c0_13, %c0_14] : memref<1x1x18x18x4xf32, #tpu.memory_space<vmem>>, vector<1x1x16x16x4xf32>
    %6 = vector.shape_cast %5 : vector<1x1x16x16x4xf32> to vector<16x16x4xf32>
    %c0_15 = arith.constant 0 : index
    %c0_16 = arith.constant 0 : index
    %c1_17 = arith.constant 1 : index
    %c1_18 = arith.constant 1 : index
    %c0_19 = arith.constant 0 : index
    %7 = vector.load %arg2[%c0_15, %c0_16, %c1_17, %c1_18, %c0_19] : memref<1x1x18x18x4xf32, #tpu.memory_space<vmem>>, vector<1x1x16x16x4xf32>
    %8 = vector.shape_cast %7 : vector<1x1x16x16x4xf32> to vector<16x16x4xf32>
    %9 = tpu.concatenate %2, %4, %6, %8 in 2 : vector<16x16x4xf32>, vector<16x16x4xf32>, vector<16x16x4xf32>, vector<16x16x4xf32> -> vector<16x16x16xf32>
    %10 = vector.shape_cast %9 : vector<16x16x16xf32> to vector<256x16xf32>
    %c0_20 = arith.constant 0 : index
    %c0_21 = arith.constant 0 : index
    %c0_22 = arith.constant 0 : index
    %c0_23 = arith.constant 0 : index
    %11 = vector.load %arg3[%c0_20, %c0_21, %c0_22, %c0_23] : memref<2x2x16x4xf32, #tpu.memory_space<vmem>>, vector<1x1x16x4xf32>
    %12 = vector.shape_cast %11 : vector<1x1x16x4xf32> to vector<16x4xf32>
    %cst = arith.constant dense<0.000000e+00> : vector<256x4xf32>
    %13 = tpu.matmul %10, %12, %cst {dimension_numbers = #tpu.dot_dimension_numbers<[1], [0], [0], [1], [0, 0, 1, 1], [], []>} : vector<256x16xf32>, vector<16x4xf32>, vector<256x4xf32> -> vector<256x4xf32>
    %14 = vector.broadcast %0 : vector<1x4xf32> to vector<256x4xf32>
    %15 = arith.addf %13, %14 : vector<256x4xf32>
    %c0_24 = arith.constant 0 : index
    %c0_25 = arith.constant 0 : index
    %c0_26 = arith.constant 0 : index
    %c0_27 = arith.constant 0 : index
    %c0_28 = arith.constant 0 : index
    %16 = vector.load %arg5[%c0_24, %c0_25, %c0_26, %c0_27, %c0_28] : memref<1x2x2x256x4xf32, #tpu.memory_space<vmem>>, vector<1x1x1x256x4xf32>
    %17 = vector.shape_cast %16 : vector<1x1x1x256x4xf32> to vector<256x4xf32>
    %18 = vector.shape_cast %15 : vector<256x4xf32> to vector<1x1x1x256x4xf32>
    tpu.vector_store %arg5[%c0_24, %c0_25, %c0_26, %c0_27, %c0_28], %18 {strides = array<i32>} : memref<1x2x2x256x4xf32, #tpu.memory_space<vmem>>, vector<1x1x1x256x4xf32>,
    %c0_29 = arith.constant 0 : index
    %c0_30 = arith.constant 0 : index
    %c0_31 = arith.constant 0 : index
    %c1_32 = arith.constant 1 : index
    %c0_33 = arith.constant 0 : index
    %19 = vector.load %arg2[%c0_29, %c0_30, %c0_31, %c1_32, %c0_33] : memref<1x1x18x18x4xf32, #tpu.memory_space<vmem>>, vector<1x1x16x16x4xf32>
    %20 = vector.shape_cast %19 : vector<1x1x16x16x4xf32> to vector<16x16x4xf32>
    %c0_34 = arith.constant 0 : index
    %c0_35 = arith.constant 0 : index
    %c0_36 = arith.constant 0 : index
    %c2 = arith.constant 2 : index
    %c0_37 = arith.constant 0 : index
    %21 = vector.load %arg2[%c0_34, %c0_35, %c0_36, %c2, %c0_37] : memref<1x1x18x18x4xf32, #tpu.memory_space<vmem>>, vector<1x1x16x16x4xf32>
    %22 = vector.shape_cast %21 : vector<1x1x16x16x4xf32> to vector<16x16x4xf32>
    %c0_38 = arith.constant 0 : index
    %c0_39 = arith.constant 0 : index
    %c1_40 = arith.constant 1 : index
    %c1_41 = arith.constant 1 : index
    %c0_42 = arith.constant 0 : index
    %23 = vector.load %arg2[%c0_38, %c0_39, %c1_40, %c1_41, %c0_42] : memref<1x1x18x18x4xf32, #tpu.memory_space<vmem>>, vector<1x1x16x16x4xf32>
    %24 = vector.shape_cast %23 : vector<1x1x16x16x4xf32> to vector<16x16x4xf32>
    %c0_43 = arith.constant 0 : index
    %c0_44 = arith.constant 0 : index
    %c1_45 = arith.constant 1 : index
    %c2_46 = arith.constant 2 : index
    %c0_47 = arith.constant 0 : index
    %25 = vector.load %arg2[%c0_43, %c0_44, %c1_45, %c2_46, %c0_47] : memref<1x1x18x18x4xf32, #tpu.memory_space<vmem>>, vector<1x1x16x16x4xf32>
    %26 = vector.shape_cast %25 : vector<1x1x16x16x4xf32> to vector<16x16x4xf32>
    %27 = tpu.concatenate %20, %22, %24, %26 in 2 : vector<16x16x4xf32>, vector<16x16x4xf32>, vector<16x16x4xf32>, vector<16x16x4xf32> -> vector<16x16x16xf32>
    %28 = vector.shape_cast %27 : vector<16x16x16xf32> to vector<256x16xf32>
    %c0_48 = arith.constant 0 : index
    %c1_49 = arith.constant 1 : index
    %c0_50 = arith.constant 0 : index
    %c0_51 = arith.constant 0 : index
    %29 = vector.load %arg3[%c0_48, %c1_49, %c0_50, %c0_51] : memref<2x2x16x4xf32, #tpu.memory_space<vmem>>, vector<1x1x16x4xf32>
    %30 = vector.shape_cast %29 : vector<1x1x16x4xf32> to vector<16x4xf32>
    %cst_52 = arith.constant dense<0.000000e+00> : vector<256x4xf32>
    %31 = tpu.matmul %28, %30, %cst_52 {dimension_numbers = #tpu.dot_dimension_numbers<[1], [0], [0], [1], [0, 0, 1, 1], [], []>} : vector<256x16xf32>, vector<16x4xf32>, vector<256x4xf32> -> vector<256x4xf32>
    %32 = vector.broadcast %0 : vector<1x4xf32> to vector<256x4xf32>
    %33 = arith.addf %31, %32 : vector<256x4xf32>
    %c0_53 = arith.constant 0 : index
    %c0_54 = arith.constant 0 : index
    %c1_55 = arith.constant 1 : index
    %c0_56 = arith.constant 0 : index
    %c0_57 = arith.constant 0 : index
    %34 = vector.load %arg5[%c0_53, %c0_54, %c1_55, %c0_56, %c0_57] : memref<1x2x2x256x4xf32, #tpu.memory_space<vmem>>, vector<1x1x1x256x4xf32>
    %35 = vector.shape_cast %34 : vector<1x1x1x256x4xf32> to vector<256x4xf32>
    %36 = vector.shape_cast %33 : vector<256x4xf32> to vector<1x1x1x256x4xf32>
    tpu.vector_store %arg5[%c0_53, %c0_54, %c1_55, %c0_56, %c0_57], %36 {strides = array<i32>} : memref<1x2x2x256x4xf32, #tpu.memory_space<vmem>>, vector<1x1x1x256x4xf32>,
    %c0_58 = arith.constant 0 : index
    %c0_59 = arith.constant 0 : index
    %c1_60 = arith.constant 1 : index
    %c0_61 = arith.constant 0 : index
    %c0_62 = arith.constant 0 : index
    %37 = vector.load %arg2[%c0_58, %c0_59, %c1_60, %c0_61, %c0_62] : memref<1x1x18x18x4xf32, #tpu.memory_space<vmem>>, vector<1x1x16x16x4xf32>
    %38 = vector.shape_cast %37 : vector<1x1x16x16x4xf32> to vector<16x16x4xf32>
    %c0_63 = arith.constant 0 : index
    %c0_64 = arith.constant 0 : index
    %c1_65 = arith.constant 1 : index
    %c1_66 = arith.constant 1 : index
    %c0_67 = arith.constant 0 : index
    %39 = vector.load %arg2[%c0_63, %c0_64, %c1_65, %c1_66, %c0_67] : memref<1x1x18x18x4xf32, #tpu.memory_space<vmem>>, vector<1x1x16x16x4xf32>
    %40 = vector.shape_cast %39 : vector<1x1x16x16x4xf32> to vector<16x16x4xf32>
    %c0_68 = arith.constant 0 : index
    %c0_69 = arith.constant 0 : index
    %c2_70 = arith.constant 2 : index
    %c0_71 = arith.constant 0 : index
    %c0_72 = arith.constant 0 : index
    %41 = vector.load %arg2[%c0_68, %c0_69, %c2_70, %c0_71, %c0_72] : memref<1x1x18x18x4xf32, #tpu.memory_space<vmem>>, vector<1x1x16x16x4xf32>
    %42 = vector.shape_cast %41 : vector<1x1x16x16x4xf32> to vector<16x16x4xf32>
    %c0_73 = arith.constant 0 : index
    %c0_74 = arith.constant 0 : index
    %c2_75 = arith.constant 2 : index
    %c1_76 = arith.constant 1 : index
    %c0_77 = arith.constant 0 : index
    %43 = vector.load %arg2[%c0_73, %c0_74, %c2_75, %c1_76, %c0_77] : memref<1x1x18x18x4xf32, #tpu.memory_space<vmem>>, vector<1x1x16x16x4xf32>
    %44 = vector.shape_cast %43 : vector<1x1x16x16x4xf32> to vector<16x16x4xf32>
    %45 = tpu.concatenate %38, %40, %42, %44 in 2 : vector<16x16x4xf32>, vector<16x16x4xf32>, vector<16x16x4xf32>, vector<16x16x4xf32> -> vector<16x16x16xf32>
    %46 = vector.shape_cast %45 : vector<16x16x16xf32> to vector<256x16xf32>
    %c1_78 = arith.constant 1 : index
    %c0_79 = arith.constant 0 : index
    %c0_80 = arith.constant 0 : index
    %c0_81 = arith.constant 0 : index
    %47 = vector.load %arg3[%c1_78, %c0_79, %c0_80, %c0_81] : memref<2x2x16x4xf32, #tpu.memory_space<vmem>>, vector<1x1x16x4xf32>
    %48 = vector.shape_cast %47 : vector<1x1x16x4xf32> to vector<16x4xf32>
    %cst_82 = arith.constant dense<0.000000e+00> : vector<256x4xf32>
    %49 = tpu.matmul %46, %48, %cst_82 {dimension_numbers = #tpu.dot_dimension_numbers<[1], [0], [0], [1], [0, 0, 1, 1], [], []>} : vector<256x16xf32>, vector<16x4xf32>, vector<256x4xf32> -> vector<256x4xf32>
    %50 = vector.broadcast %0 : vector<1x4xf32> to vector<256x4xf32>
    %51 = arith.addf %49, %50 : vector<256x4xf32>
    %c0_83 = arith.constant 0 : index
    %c1_84 = arith.constant 1 : index
    %c0_85 = arith.constant 0 : index
    %c0_86 = arith.constant 0 : index
    %c0_87 = arith.constant 0 : index
    %52 = vector.load %arg5[%c0_83, %c1_84, %c0_85, %c0_86, %c0_87] : memref<1x2x2x256x4xf32, #tpu.memory_space<vmem>>, vector<1x1x1x256x4xf32>
    %53 = vector.shape_cast %52 : vector<1x1x1x256x4xf32> to vector<256x4xf32>
    %54 = vector.shape_cast %51 : vector<256x4xf32> to vector<1x1x1x256x4xf32>
    tpu.vector_store %arg5[%c0_83, %c1_84, %c0_85, %c0_86, %c0_87], %54 {strides = array<i32>} : memref<1x2x2x256x4xf32, #tpu.memory_space<vmem>>, vector<1x1x1x256x4xf32>,
    %c0_88 = arith.constant 0 : index
    %c0_89 = arith.constant 0 : index
    %c1_90 = arith.constant 1 : index
    %c1_91 = arith.constant 1 : index
    %c0_92 = arith.constant 0 : index
    %55 = vector.load %arg2[%c0_88, %c0_89, %c1_90, %c1_91, %c0_92] : memref<1x1x18x18x4xf32, #tpu.memory_space<vmem>>, vector<1x1x16x16x4xf32>
    %56 = vector.shape_cast %55 : vector<1x1x16x16x4xf32> to vector<16x16x4xf32>
    %c0_93 = arith.constant 0 : index
    %c0_94 = arith.constant 0 : index
    %c1_95 = arith.constant 1 : index
    %c2_96 = arith.constant 2 : index
    %c0_97 = arith.constant 0 : index
    %57 = vector.load %arg2[%c0_93, %c0_94, %c1_95, %c2_96, %c0_97] : memref<1x1x18x18x4xf32, #tpu.memory_space<vmem>>, vector<1x1x16x16x4xf32>
    %58 = vector.shape_cast %57 : vector<1x1x16x16x4xf32> to vector<16x16x4xf32>
    %c0_98 = arith.constant 0 : index
    %c0_99 = arith.constant 0 : index
    %c2_100 = arith.constant 2 : index
    %c1_101 = arith.constant 1 : index
    %c0_102 = arith.constant 0 : index
    %59 = vector.load %arg2[%c0_98, %c0_99, %c2_100, %c1_101, %c0_102] : memref<1x1x18x18x4xf32, #tpu.memory_space<vmem>>, vector<1x1x16x16x4xf32>
    %60 = vector.shape_cast %59 : vector<1x1x16x16x4xf32> to vector<16x16x4xf32>
    %c0_103 = arith.constant 0 : index
    %c0_104 = arith.constant 0 : index
    %c2_105 = arith.constant 2 : index
    %c2_106 = arith.constant 2 : index
    %c0_107 = arith.constant 0 : index
    %61 = vector.load %arg2[%c0_103, %c0_104, %c2_105, %c2_106, %c0_107] : memref<1x1x18x18x4xf32, #tpu.memory_space<vmem>>, vector<1x1x16x16x4xf32>
    %62 = vector.shape_cast %61 : vector<1x1x16x16x4xf32> to vector<16x16x4xf32>
    %63 = tpu.concatenate %56, %58, %60, %62 in 2 : vector<16x16x4xf32>, vector<16x16x4xf32>, vector<16x16x4xf32>, vector<16x16x4xf32> -> vector<16x16x16xf32>
    %64 = vector.shape_cast %63 : vector<16x16x16xf32> to vector<256x16xf32>
    %c1_108 = arith.constant 1 : index
    %c1_109 = arith.constant 1 : index
    %c0_110 = arith.constant 0 : index
    %c0_111 = arith.constant 0 : index
    %65 = vector.load %arg3[%c1_108, %c1_109, %c0_110, %c0_111] : memref<2x2x16x4xf32, #tpu.memory_space<vmem>>, vector<1x1x16x4xf32>
    %66 = vector.shape_cast %65 : vector<1x1x16x4xf32> to vector<16x4xf32>
    %cst_112 = arith.constant dense<0.000000e+00> : vector<256x4xf32>
    %67 = tpu.matmul %64, %66, %cst_112 {dimension_numbers = #tpu.dot_dimension_numbers<[1], [0], [0], [1], [0, 0, 1, 1], [], []>} : vector<256x16xf32>, vector<16x4xf32>, vector<256x4xf32> -> vector<256x4xf32>
    %68 = vector.broadcast %0 : vector<1x4xf32> to vector<256x4xf32>
    %69 = arith.addf %67, %68 : vector<256x4xf32>
    %c0_113 = arith.constant 0 : index
    %c1_114 = arith.constant 1 : index
    %c1_115 = arith.constant 1 : index
    %c0_116 = arith.constant 0 : index
    %c0_117 = arith.constant 0 : index
    %70 = vector.load %arg5[%c0_113, %c1_114, %c1_115, %c0_116, %c0_117] : memref<1x2x2x256x4xf32, #tpu.memory_space<vmem>>, vector<1x1x1x256x4xf32>
    %71 = vector.shape_cast %70 : vector<1x1x1x256x4xf32> to vector<256x4xf32>
    %72 = vector.shape_cast %69 : vector<256x4xf32> to vector<1x1x1x256x4xf32>
    tpu.vector_store %arg5[%c0_113, %c1_114, %c1_115, %c0_116, %c0_117], %72 {strides = array<i32>} : memref<1x2x2x256x4xf32, #tpu.memory_space<vmem>>, vector<1x1x1x256x4xf32>,
    return
  }
  func.func @transform_0(%arg0: i32, %arg1: i32) -> (i32, i32, i32, i32, i32) {
    %c0_i32 = arith.constant 0 : i32
    %c0_i32_0 = arith.constant 0 : i32
    %c0_i32_1 = arith.constant 0 : i32
    %c0_i32_2 = arith.constant 0 : i32
    return %arg0, %arg1, %c0_i32, %c0_i32_0, %c0_i32_1 : i32, i32, i32, i32, i32
  }
  func.func @transform_1(%arg0: i32, %arg1: i32) -> (i32, i32, i32, i32) {
    %c0_i32 = arith.constant 0 : i32
    %c0_i32_0 = arith.constant 0 : i32
    %c0_i32_1 = arith.constant 0 : i32
    %c0_i32_2 = arith.constant 0 : i32
    %c0_i32_3 = arith.constant 0 : i32
    return %c0_i32, %c0_i32_0, %c0_i32_1, %c0_i32_2 : i32, i32, i32, i32
  }
  func.func @transform_2(%arg0: i32, %arg1: i32) -> (i32, i32) {
    %c0_i32 = arith.constant 0 : i32
    %c0_i32_0 = arith.constant 0 : i32
    %c0_i32_1 = arith.constant 0 : i32
    return %c0_i32, %c0_i32_0 : i32, i32
  }
  func.func @transform_3(%arg0: i32, %arg1: i32) -> (i32, i32, i32, i32, i32) {
    %c0_i32 = arith.constant 0 : i32
    %c0_i32_0 = arith.constant 0 : i32
    %c0_i32_1 = arith.constant 0 : i32
    %c0_i32_2 = arith.constant 0 : i32
    return %arg0, %c0_i32, %c0_i32_0, %arg1, %c0_i32_1 : i32, i32, i32, i32, i32
  }
}

</mosaic_0001>

<llo_original>
// kernel: upsample_forward.1
$region0: #{upsample_forward.1}
  #allocation0 [shape = 'u32[]', space=smem, size = 0x4, offset = 0x4, fixed_abs, tag = 'smem constant byte address 0x4 - core index']
  #allocation1 [shape = 'u32[144,128]{1,0:T(1,128)}', space=vmem, size = 0x12000, scoped, tag = 'internal scratch']
  %s0 = inlined_call_operand.vmem [shape: f32[2,1,18,18,4], index: 0, kind: input, shape index: {}]
  %s1 = inlined_call_operand.vmem [shape: f32[2,2,16,4], index: 1, kind: input, shape index: {}]
  %s2 = inlined_call_operand.vmem [shape: f32[1,4], index: 2, kind: input, shape index: {}]
  %s3 = inlined_call_operand.vmem [shape: f32[2,2,2,256,4], index: 3, kind: output, shape index: {}]
  %s4 = sld [smem:[#allocation0]]
  $region45: #{upsample_forward.1} parent=0
    _
  %s6 = ssub.s32 1, %s4
  %s7 = scalar_select 0, %s6, %s4
  loop: start=0, step=1, limit=4
  $region2: #{upsample_forward.1} parent=0 // loop_pre_header
    _
  $region3: #{upsample_forward.1} parent=0 // loop_header
    %s9 = sphi 0, %s13
    %p10 = scmp.ge.s32.totalorder %s9, 4
    %s16 = sphi 0, %s28
    %s17 = sphi 0, %s24
    %s18 = sphi 0, %s16
    %s19 = sphi 0, %s17
    %s20 = sphi 0, %s18
    %s21 = sphi 0, %s19
    %s33 = sphi 0, %s35
    %s36 = sphi 0, %s33
    %s37 = sphi 0, %s36
    %s53 = sphi 0, %s37
    %s57 = sphi 0, %s57
    %s59 = sphi 0, %s57
    %s60 = sphi 0, %s59
    %s74 = sphi 0, %s60
    %s78 = sphi 0, %s78
    %s80 = sphi 0, %s78
    %s81 = sphi 0, %s80
    %s95 = sphi 0, %s81
    %s103 = sphi 0, %s105
    %s106 = sphi 0, %s103
    %s107 = sphi 0, %s106
    %s123 = sphi 0, %s107
  $region4: #{upsample_forward.1} parent=0 // loop_header_branch
    %12 = sbr.rel (%p10) target = $region8
  $region5: #{upsample_forward.1} parent=0 // loop_body
    %s14 = ssub.s32 %s9, 1
    %s15 = ssub.s32 %s9, 2
    %s22 = sadd.s32 1, %s17
    %p23 = scmp.ge.s32.totalorder %s22, 1
    %s24 = scalar_select %p23, 0, %s22
    %s25 = sadd.s32 1, %s16
    %s26 = scalar_select %p23, %s25, %s16
    %p27 = scmp.ge.s32.totalorder %s26, 2
    %s28 = scalar_select %p27, 0, %s26
    %s29 = ssub.s32 %s16, %s28
    %s30 = ssub.s32 %s17, %s24
    %s31 = sor.u32 %s29, %s30
    %p32 = scmp.eq.s32.totalorder %s31, 0
    %s34 = sadd.s32 %s33, 1
    %s35 = scalar_select %p32, %s33, %s34
    %p38 = pneg %p32
    %p39 = scmp.eq.s32.totalorder %s9, 1
    %p40 = por %p38, %p39
    %p41 = scmp.ne.s32.totalorder %s33, %s36
    %p42 = scmp.eq.s32.totalorder %s9, 0
    %p43 = por %p41, %p42
    %p44 = scmp.ne.s32.totalorder %s33, %s36
    %p45 = scmp.eq.s32.totalorder %s14, 1
    %p46 = por %p44, %p45
    %p47 = scmp.ne.s32.totalorder %s36, %s37
    %p48 = scmp.eq.s32.totalorder %s14, 0
    %p49 = por %p47, %p48
    %p50 = scmp.ne.s32.totalorder %s36, %s37
    %p51 = scmp.eq.s32.totalorder %s15, 1
    %p52 = por %p50, %p51
    %p54 = scmp.ne.s32.totalorder %s37, %s53
    %p55 = scmp.eq.s32.totalorder %s15, 0
    %p56 = por %p54, %p55
    %s58 = sadd.s32 %s57, 1
    %p61 = scmp.eq.s32.totalorder %s9, 1
    %p62 = scmp.ne.s32.totalorder %s57, %s59
    %p63 = scmp.eq.s32.totalorder %s9, 0
    %p64 = por %p62, %p63
    %p65 = scmp.ne.s32.totalorder %s57, %s59
    %p66 = scmp.eq.s32.totalorder %s14, 1
    %p67 = por %p65, %p66
    %p68 = scmp.ne.s32.totalorder %s59, %s60
    %p69 = scmp.eq.s32.totalorder %s14, 0
    %p70 = por %p68, %p69
    %p71 = scmp.ne.s32.totalorder %s59, %s60
    %p72 = scmp.eq.s32.totalorder %s15, 1
    %p73 = por %p71, %p72
    %p75 = scmp.ne.s32.totalorder %s60, %s74
    %p76 = scmp.eq.s32.totalorder %s15, 0
    %p77 = por %p75, %p76
    %s79 = sadd.s32 %s78, 1
    %p82 = scmp.eq.s32.totalorder %s9, 1
    %p83 = scmp.ne.s32.totalorder %s78, %s80
    %p84 = scmp.eq.s32.totalorder %s9, 0
    %p85 = por %p83, %p84
    %p86 = scmp.ne.s32.totalorder %s78, %s80
    %p87 = scmp.eq.s32.totalorder %s14, 1
    %p88 = por %p86, %p87
    %p89 = scmp.ne.s32.totalorder %s80, %s81
    %p90 = scmp.eq.s32.totalorder %s14, 0
    %p91 = por %p89, %p90
    %p92 = scmp.ne.s32.totalorder %s80, %s81
    %p93 = scmp.eq.s32.totalorder %s15, 1
    %p94 = por %p92, %p93
    %p96 = scmp.ne.s32.totalorder %s81, %s95
    %p97 = scmp.eq.s32.totalorder %s15, 0
    %p98 = por %p96, %p97
    %s99 = ssub.s32 %s16, %s28
    %s100 = ssub.s32 %s17, %s24
    %s101 = sor.u32 %s99, %s100
    %p102 = scmp.eq.s32.totalorder %s101, 0
    %s104 = sadd.s32 %s103, 1
    %s105 = scalar_select %p102, %s103, %s104
    %p108 = pneg %p102
    %p109 = scmp.eq.s32.totalorder %s9, 1
    %p110 = por %p108, %p109
    %p111 = scmp.ne.s32.totalorder %s103, %s106
    %p112 = scmp.eq.s32.totalorder %s9, 0
    %p113 = por %p111, %p112
    %p114 = scmp.ne.s32.totalorder %s103, %s106
    %p115 = scmp.eq.s32.totalorder %s14, 1
    %p116 = por %p114, %p115
    %p117 = scmp.ne.s32.totalorder %s106, %s107
    %p118 = scmp.eq.s32.totalorder %s14, 0
    %p119 = por %p117, %p118
    %p120 = scmp.ne.s32.totalorder %s106, %s107
    %p121 = scmp.eq.s32.totalorder %s15, 1
    %p122 = por %p120, %p121
    %p124 = scmp.ne.s32.totalorder %s107, %s123
    %p125 = scmp.eq.s32.totalorder %s15, 0
    %p126 = por %p124, %p125
    %p127 = scmp.le.s32.totalorder 1, %s9
    %p128 = scmp.lt.s32.totalorder %s9, 3
    %p129 = pnand %p127, %p128
    %p130 = pneg %p129
    // Predicated region
    $region9: #{upsample_forward.1} parent=5 // pred_check
      _
    $region10: #{upsample_forward.1} parent=5 // pred_check_branch
      %132 = sbr.rel (%p129) target = $region12
    $region11: #{upsample_forward.1} parent=5 // pred_region
      %s133 = ssub.s32 %s9, 1
      // Predicated region
      $region13: #{upsample_forward.1} parent=11 // pred_check
        %p134 = pneg %p70
      $region14: #{upsample_forward.1} parent=11 // pred_check_branch
        %136 = sbr.rel (%p134) target = $region16
      $region15: #{upsample_forward.1} parent=11 // pred_region
        _
      $region16: #{upsample_forward.1} parent=11 // pred_fallthru
        _
      // Predicated region
      $region17: #{upsample_forward.1} parent=11 // pred_check
        %p137 = pneg %p91
      $region18: #{upsample_forward.1} parent=11 // pred_check_branch
        %139 = sbr.rel (%p137) target = $region20
      $region19: #{upsample_forward.1} parent=11 // pred_region
        _
      $region20: #{upsample_forward.1} parent=11 // pred_fallthru
        _
    $region12: #{upsample_forward.1} parent=5 // pred_fallthru
      _
    %p140 = scmp.lt.s32.totalorder %s9, 2
    // Predicated region
    $region21: #{upsample_forward.1} parent=5 // pred_check
      %p141 = pneg %p140
    $region22: #{upsample_forward.1} parent=5 // pred_check_branch
      %143 = sbr.rel (%p141) target = $region24
    $region23: #{upsample_forward.1} parent=5 // pred_region
      // Predicated region
      $region25: #{upsample_forward.1} parent=23 // pred_check
        %p144 = pneg %p43
      $region26: #{upsample_forward.1} parent=23 // pred_check_branch
        %146 = sbr.rel (%p144) target = $region28
      $region27: #{upsample_forward.1} parent=23 // pred_region
        %p147 = scmp.lt.s32.totalorder %s16, 1
        %s148 = scalar_select %p147, %s16, 1
        %p149 = scmp.lt.s32.totalorder %s17, 0
        %s150 = scalar_select %p149, %s17, 0
        %s151 = smul.addr %s150, 54
        %s152 = smul.addr %s148, 54
        %s153 = sadd.s32 %s151, %s152
        %s154 = smul.addr %s153, 8
        %s155 = scalar_lea.vmem %s0, %s154
      $region28: #{upsample_forward.1} parent=23 // pred_fallthru
        _
    $region24: #{upsample_forward.1} parent=5 // pred_fallthru
      _
    %p156 = scmp.le.s32.totalorder 1, %s9
    %p157 = scmp.lt.s32.totalorder %s9, 3
    %p158 = pnand %p156, %p157
    %p159 = pneg %p158
    // Predicated region
    $region29: #{upsample_forward.1} parent=5 // pred_check
      _
    $region30: #{upsample_forward.1} parent=5 // pred_check_branch
      %161 = sbr.rel (%p158) target = $region32
    $region31: #{upsample_forward.1} parent=5 // pred_region
      %s162 = ssub.s32 %s9, 1
      %p163 = scmp.lt.s32.totalorder %s18, 1
      %s164 = scalar_select %p163, %s18, 1
      %p165 = scmp.lt.s32.totalorder %s19, 0
      %s166 = scalar_select %p165, %s19, 0
      %s167 = smul.addr %s166, 54
      %s168 = smul.addr %s164, 54
      %s169 = sadd.s32 %s167, %s168
      %s170 = smul.addr %s169, 8
      %s171 = scalar_lea.vmem %s0, %s170
      %p172 = pneg %p49
      %p173 = pneg %p46
      %p174 = pneg %p70
      %p175 = pneg %p67
      %p176 = pneg %p91
      %p177 = pneg %p88
      %p178 = pneg %p119
      %p179 = pneg %p116
      %s180 = smul.u32 32, %s19
      %p181 = scmp.lt.s32.totalorder %s18, 1
      %s182 = scalar_select %p181, %s18, 1
      %p183 = scmp.lt.s32.totalorder %s180, 31
      %s184 = scalar_select %p183, %s180, 31
      %s185 = smul.addr %s182, 128
      %s186 = sadd.s32 %s184, %s185
      %s187 = smul.addr %s186, 8
      %s188 = scalar_lea.vmem %s3, %s187
      %p189 = scmp.lt.s32.totalorder %s18, 1
      %s190 = scalar_select %p189, %s18, 1
      %p191 = scmp.lt.s32.totalorder %s19, 0
      %s192 = scalar_select %p191, %s19, 0
      %s193 = smul.addr %s192, 54
      %s194 = smul.addr %s190, 54
      %s195 = sadd.s32 %s193, %s194
      %s196 = smul.addr %s195, 8
      %s197 = scalar_lea.vmem %s0, %s196
      %s198 = smul.u32 32, %s19
      %p199 = scmp.lt.s32.totalorder %s18, 1
      %s200 = scalar_select %p199, %s18, 1
      %p201 = scmp.lt.s32.totalorder %s198, 31
      %s202 = scalar_select %p201, %s198, 31
      %s203 = smul.addr %s200, 128
      %s204 = sadd.s32 %s202, %s203
      %s205 = smul.addr %s204, 8
      %s206 = scalar_lea.vmem %s3, %s205
      %s207 = smul.u32 32, %s19
      %v208 = vld [vmem:[%s2] sm:$0x1]
      %v209 = vld [vmem:[%s197] sm:$0xff]
      %v210 = vld [vmem:[%s197 + $0x8] sm:$0xff]
      %v211 = vld [vmem:[%s197 + $0x18] sm:$0xff]
      %v212 = vld [vmem:[%s197 + $0x20] sm:$0xff]
      %v213 = vld [vmem:[%s197 + $0x30] sm:$0xff]
      %v214 = vld [vmem:[%s197 + $0x38] sm:$0xff]
      %v215 = vld [vmem:[%s197 + $0x48] sm:$0xff]
      %v216 = vld [vmem:[%s197 + $0x50] sm:$0xff]
      %v217 = vld [vmem:[%s197 + $0x60] sm:$0xff]
      %v218 = vld [vmem:[%s197 + $0x68] sm:$0xff]
      %v219 = vld [vmem:[%s197 + $0x78] sm:$0xff]
      %v220 = vld [vmem:[%s197 + $0x80] sm:$0xff]
      %v221 = vld [vmem:[%s197 + $0x90] sm:$0xff]
      %v222 = vld [vmem:[%s197 + $0x98] sm:$0xff]
      %v223 = vld [vmem:[%s197 + $0xa8] sm:$0xff]
      %v224 = vld [vmem:[%s197 + $0xb0] sm:$0xff]
      %v225 = vld [vmem:[%s197 + $0xc0] sm:$0xff]
      %v226 = vld [vmem:[%s197 + $0xc8] sm:$0xff]
      %v227 = vld [vmem:[%s197 + $0xd8] sm:$0xff]
      %v228 = vld [vmem:[%s197 + $0xe0] sm:$0xff]
      %v229 = vld [vmem:[%s197 + $0xf0] sm:$0xff]
      %v230 = vld [vmem:[%s197 + $0xf8] sm:$0xff]
      %v231 = vld [vmem:[%s197 + $0x108] sm:$0xff]
      %v232 = vld [vmem:[%s197 + $0x110] sm:$0xff]
      %v233 = vld [vmem:[%s197 + $0x120] sm:$0xff]
      %v234 = vld [vmem:[%s197 + $0x128] sm:$0xff]
      %v235 = vld [vmem:[%s197 + $0x138] sm:$0xff]
      %v236 = vld [vmem:[%s197 + $0x140] sm:$0xff]
      %v237 = vld [vmem:[%s197 + $0x150] sm:$0xff]
      %v238 = vld [vmem:[%s197 + $0x158] sm:$0xff]
      %v239 = vld [vmem:[%s197 + $0x168] sm:$0xff]
      %v240 = vld [vmem:[%s197 + $0x170] sm:$0xff]
      %v241 = vld [vmem:[%s197 + $0x1] sm:$0xff]
      %v242 = vld [vmem:[%s197 + $0x9] sm:$0xff]
      %v243 = vld [vmem:[%s197 + $0x19] sm:$0xff]
      %v244 = vld [vmem:[%s197 + $0x21] sm:$0xff]
      %v245 = vld [vmem:[%s197 + $0x31] sm:$0xff]
      %v246 = vld [vmem:[%s197 + $0x39] sm:$0xff]
      %v247 = vld [vmem:[%s197 + $0x49] sm:$0xff]
      %v248 = vld [vmem:[%s197 + $0x51] sm:$0xff]
      %v249 = vld [vmem:[%s197 + $0x61] sm:$0xff]
      %v250 = vld [vmem:[%s197 + $0x69] sm:$0xff]
      %v251 = vld [vmem:[%s197 + $0x79] sm:$0xff]
      %v252 = vld [vmem:[%s197 + $0x81] sm:$0xff]
      %v253 = vld [vmem:[%s197 + $0x91] sm:$0xff]
      %v254 = vld [vmem:[%s197 + $0x99] sm:$0xff]
      %v255 = vld [vmem:[%s197 + $0xa9] sm:$0xff]
      %v256 = vld [vmem:[%s197 + $0xb1] sm:$0xff]
      %v257 = vld [vmem:[%s197 + $0xc1] sm:$0xff]
      %v258 = vld [vmem:[%s197 + $0xc9] sm:$0xff]
      %v259 = vld [vmem:[%s197 + $0xd9] sm:$0xff]
      %v260 = vld [vmem:[%s197 + $0xe1] sm:$0xff]
      %v261 = vld [vmem:[%s197 + $0xf1] sm:$0xff]
      %v262 = vld [vmem:[%s197 + $0xf9] sm:$0xff]
      %v263 = vld [vmem:[%s197 + $0x109] sm:$0xff]
      %v264 = vld [vmem:[%s197 + $0x111] sm:$0xff]
      %v265 = vld [vmem:[%s197 + $0x121] sm:$0xff]
      %v266 = vld [vmem:[%s197 + $0x129] sm:$0xff]
      %v267 = vld [vmem:[%s197 + $0x139] sm:$0xff]
      %v268 = vld [vmem:[%s197 + $0x141] sm:$0xff]
      %v269 = vld [vmem:[%s197 + $0x151] sm:$0xff]
      %v270 = vld [vmem:[%s197 + $0x159] sm:$0xff]
      %v271 = vld [vmem:[%s197 + $0x169] sm:$0xff]
      %v272 = vld [vmem:[%s197 + $0x171] sm:$0xff]
      %s273 = scalar_lea.vmem %s197, 24
      %v274 = vld [vmem:[%s273] sm:$0xff]
      %v275 = vld [vmem:[%s273 + $0x8] sm:$0xff]
      %v276 = vld [vmem:[%s273 + $0x18] sm:$0xff]
      %v277 = vld [vmem:[%s273 + $0x20] sm:$0xff]
      %v278 = vld [vmem:[%s273 + $0x30] sm:$0xff]
      %v279 = vld [vmem:[%s273 + $0x38] sm:$0xff]
      %v280 = vld [vmem:[%s273 + $0x48] sm:$0xff]
      %v281 = vld [vmem:[%s273 + $0x50] sm:$0xff]
      %v282 = vld [vmem:[%s273 + $0x60] sm:$0xff]
      %v283 = vld [vmem:[%s273 + $0x68] sm:$0xff]
      %v284 = vld [vmem:[%s273 + $0x78] sm:$0xff]
      %v285 = vld [vmem:[%s273 + $0x80] sm:$0xff]
      %v286 = vld [vmem:[%s273 + $0x90] sm:$0xff]
      %v287 = vld [vmem:[%s273 + $0x98] sm:$0xff]
      %v288 = vld [vmem:[%s273 + $0xa8] sm:$0xff]
      %v289 = vld [vmem:[%s273 + $0xb0] sm:$0xff]
      %v290 = vld [vmem:[%s273 + $0xc0] sm:$0xff]
      %v291 = vld [vmem:[%s273 + $0xc8] sm:$0xff]
      %v292 = vld [vmem:[%s273 + $0xd8] sm:$0xff]
      %v293 = vld [vmem:[%s273 + $0xe0] sm:$0xff]
      %v294 = vld [vmem:[%s273 + $0xf0] sm:$0xff]
      %v295 = vld [vmem:[%s273 + $0xf8] sm:$0xff]
      %v296 = vld [vmem:[%s273 + $0x108] sm:$0xff]
      %v297 = vld [vmem:[%s273 + $0x110] sm:$0xff]
      %v298 = vld [vmem:[%s273 + $0x120] sm:$0xff]
      %v299 = vld [vmem:[%s273 + $0x128] sm:$0xff]
      %v300 = vld [vmem:[%s273 + $0x138] sm:$0xff]
      %v301 = vld [vmem:[%s273 + $0x140] sm:$0xff]
      %v302 = vld [vmem:[%s273 + $0x150] sm:$0xff]
      %v303 = vld [vmem:[%s273 + $0x158] sm:$0xff]
      %v304 = vld [vmem:[%s273 + $0x168] sm:$0xff]
      %v305 = vld [vmem:[%s273 + $0x170] sm:$0xff]
      %v306 = vld [vmem:[%s273 + $0x1] sm:$0xff]
      %v307 = vld [vmem:[%s273 + $0x9] sm:$0xff]
      %v308 = vld [vmem:[%s273 + $0x19] sm:$0xff]
      %v309 = vld [vmem:[%s273 + $0x21] sm:$0xff]
      %v310 = vld [vmem:[%s273 + $0x31] sm:$0xff]
      %v311 = vld [vmem:[%s273 + $0x39] sm:$0xff]
      %v312 = vld [vmem:[%s273 + $0x49] sm:$0xff]
      %v313 = vld [vmem:[%s273 + $0x51] sm:$0xff]
      %v314 = vld [vmem:[%s273 + $0x61] sm:$0xff]
      %v315 = vld [vmem:[%s273 + $0x69] sm:$0xff]
      %v316 = vld [vmem:[%s273 + $0x79] sm:$0xff]
      %v317 = vld [vmem:[%s273 + $0x81] sm:$0xff]
      %v318 = vld [vmem:[%s273 + $0x91] sm:$0xff]
      %v319 = vld [vmem:[%s273 + $0x99] sm:$0xff]
      %v320 = vld [vmem:[%s273 + $0xa9] sm:$0xff]
      %v321 = vld [vmem:[%s273 + $0xb1] sm:$0xff]
      %v322 = vld [vmem:[%s273 + $0xc1] sm:$0xff]
      %v323 = vld [vmem:[%s273 + $0xc9] sm:$0xff]
      %v324 = vld [vmem:[%s273 + $0xd9] sm:$0xff]
      %v325 = vld [vmem:[%s273 + $0xe1] sm:$0xff]
      %v326 = vld [vmem:[%s273 + $0xf1] sm:$0xff]
      %v327 = vld [vmem:[%s273 + $0xf9] sm:$0xff]
      %v328 = vld [vmem:[%s273 + $0x109] sm:$0xff]
      %v329 = vld [vmem:[%s273 + $0x111] sm:$0xff]
      %v330 = vld [vmem:[%s273 + $0x121] sm:$0xff]
      %v331 = vld [vmem:[%s273 + $0x129] sm:$0xff]
      %v332 = vld [vmem:[%s273 + $0x139] sm:$0xff]
      %v333 = vld [vmem:[%s273 + $0x141] sm:$0xff]
      %v334 = vld [vmem:[%s273 + $0x151] sm:$0xff]
      %v335 = vld [vmem:[%s273 + $0x159] sm:$0xff]
      %v336 = vld [vmem:[%s273 + $0x169] sm:$0xff]
      %v337 = vld [vmem:[%s273 + $0x171] sm:$0xff]
      %370 = vrot.lane.b32.xlu0 %v241, 4
      %v371 = vpop.permute.xlu0 %370
      %372 = vrot.lane.b32.xlu0 %v242, 4
      %v373 = vpop.permute.xlu0 %372
      %374 = vrot.lane.b32.xlu0 %v243, 4
      %v375 = vpop.permute.xlu0 %374
      %376 = vrot.lane.b32.xlu0 %v244, 4
      %v377 = vpop.permute.xlu0 %376
      %378 = vrot.lane.b32.xlu0 %v245, 4
      %v379 = vpop.permute.xlu0 %378
      %380 = vrot.lane.b32.xlu0 %v246, 4
      %v381 = vpop.permute.xlu0 %380
      %382 = vrot.lane.b32.xlu0 %v247, 4
      %v383 = vpop.permute.xlu0 %382
      %384 = vrot.lane.b32.xlu0 %v248, 4
      %v385 = vpop.permute.xlu0 %384
      %386 = vrot.lane.b32.xlu0 %v249, 4
      %v387 = vpop.permute.xlu0 %386
      %388 = vrot.lane.b32.xlu0 %v250, 4
      %v389 = vpop.permute.xlu0 %388
      %390 = vrot.lane.b32.xlu0 %v251, 4
      %v391 = vpop.permute.xlu0 %390
      %392 = vrot.lane.b32.xlu0 %v252, 4
      %v393 = vpop.permute.xlu0 %392
      %394 = vrot.lane.b32.xlu0 %v253, 4
      %v395 = vpop.permute.xlu0 %394
      %396 = vrot.lane.b32.xlu0 %v254, 4
      %v397 = vpop.permute.xlu0 %396
      %398 = vrot.lane.b32.xlu0 %v255, 4
      %v399 = vpop.permute.xlu0 %398
      %400 = vrot.lane.b32.xlu0 %v256, 4
      %v401 = vpop.permute.xlu0 %400
      %402 = vrot.lane.b32.xlu0 %v257, 4
      %v403 = vpop.permute.xlu0 %402
      %404 = vrot.lane.b32.xlu0 %v258, 4
      %v405 = vpop.permute.xlu0 %404
      %406 = vrot.lane.b32.xlu0 %v259, 4
      %v407 = vpop.permute.xlu0 %406
      %408 = vrot.lane.b32.xlu0 %v260, 4
      %v409 = vpop.permute.xlu0 %408
      %410 = vrot.lane.b32.xlu0 %v261, 4
      %v411 = vpop.permute.xlu0 %410
      %412 = vrot.lane.b32.xlu0 %v262, 4
      %v413 = vpop.permute.xlu0 %412
      %414 = vrot.lane.b32.xlu0 %v263, 4
      %v415 = vpop.permute.xlu0 %414
      %416 = vrot.lane.b32.xlu0 %v264, 4
      %v417 = vpop.permute.xlu0 %416
      %418 = vrot.lane.b32.xlu0 %v265, 4
      %v419 = vpop.permute.xlu0 %418
      %420 = vrot.lane.b32.xlu0 %v266, 4
      %v421 = vpop.permute.xlu0 %420
      %422 = vrot.lane.b32.xlu0 %v267, 4
      %v423 = vpop.permute.xlu0 %422
      %424 = vrot.lane.b32.xlu0 %v268, 4
      %v425 = vpop.permute.xlu0 %424
      %426 = vrot.lane.b32.xlu0 %v269, 4
      %v427 = vpop.permute.xlu0 %426
      %428 = vrot.lane.b32.xlu0 %v270, 4
      %v429 = vpop.permute.xlu0 %428
      %430 = vrot.lane.b32.xlu0 %v271, 4
      %v431 = vpop.permute.xlu0 %430
      %432 = vrot.lane.b32.xlu0 %v272, 4
      %v433 = vpop.permute.xlu0 %432
      %498 = vrot.lane.b32.xlu0 %v274, 8
      %v499 = vpop.permute.xlu0 %498
      %500 = vrot.lane.b32.xlu0 %v275, 8
      %v501 = vpop.permute.xlu0 %500
      %502 = vrot.lane.b32.xlu0 %v276, 8
      %v503 = vpop.permute.xlu0 %502
      %504 = vrot.lane.b32.xlu0 %v277, 8
      %v505 = vpop.permute.xlu0 %504
      %506 = vrot.lane.b32.xlu0 %v278, 8
      %v507 = vpop.permute.xlu0 %506
      %508 = vrot.lane.b32.xlu0 %v279, 8
      %v509 = vpop.permute.xlu0 %508
      %510 = vrot.lane.b32.xlu0 %v280, 8
      %v511 = vpop.permute.xlu0 %510
      %512 = vrot.lane.b32.xlu0 %v281, 8
      %v513 = vpop.permute.xlu0 %512
      %514 = vrot.lane.b32.xlu0 %v282, 8
      %v515 = vpop.permute.xlu0 %514
      %516 = vrot.lane.b32.xlu0 %v283, 8
      %v517 = vpop.permute.xlu0 %516
      %518 = vrot.lane.b32.xlu0 %v284, 8
      %v519 = vpop.permute.xlu0 %518
      %520 = vrot.lane.b32.xlu0 %v285, 8
      %v521 = vpop.permute.xlu0 %520
      %522 = vrot.lane.b32.xlu0 %v286, 8
      %v523 = vpop.permute.xlu0 %522
      %524 = vrot.lane.b32.xlu0 %v287, 8
      %v525 = vpop.permute.xlu0 %524
      %526 = vrot.lane.b32.xlu0 %v288, 8
      %v527 = vpop.permute.xlu0 %526
      %528 = vrot.lane.b32.xlu0 %v289, 8
      %v529 = vpop.permute.xlu0 %528
      %530 = vrot.lane.b32.xlu0 %v290, 8
      %v531 = vpop.permute.xlu0 %530
      %532 = vrot.lane.b32.xlu0 %v291, 8
      %v533 = vpop.permute.xlu0 %532
      %534 = vrot.lane.b32.xlu0 %v292, 8
      %v535 = vpop.permute.xlu0 %534
      %536 = vrot.lane.b32.xlu0 %v293, 8
      %v537 = vpop.permute.xlu0 %536
      %538 = vrot.lane.b32.xlu0 %v294, 8
      %v539 = vpop.permute.xlu0 %538
      %540 = vrot.lane.b32.xlu0 %v295, 8
      %v541 = vpop.permute.xlu0 %540
      %542 = vrot.lane.b32.xlu0 %v296, 8
      %v543 = vpop.permute.xlu0 %542
      %544 = vrot.lane.b32.xlu0 %v297, 8
      %v545 = vpop.permute.xlu0 %544
      %546 = vrot.lane.b32.xlu0 %v298, 8
      %v547 = vpop.permute.xlu0 %546
      %548 = vrot.lane.b32.xlu0 %v299, 8
      %v549 = vpop.permute.xlu0 %548
      %550 = vrot.lane.b32.xlu0 %v300, 8
      %v551 = vpop.permute.xlu0 %550
      %552 = vrot.lane.b32.xlu0 %v301, 8
      %v553 = vpop.permute.xlu0 %552
      %554 = vrot.lane.b32.xlu0 %v302, 8
      %v555 = vpop.permute.xlu0 %554
      %556 = vrot.lane.b32.xlu0 %v303, 8
      %v557 = vpop.permute.xlu0 %556
      %558 = vrot.lane.b32.xlu0 %v304, 8
      %v559 = vpop.permute.xlu0 %558
      %560 = vrot.lane.b32.xlu0 %v305, 8
      %v561 = vpop.permute.xlu0 %560
      %626 = vrot.lane.b32.xlu0 %v306, 12
      %v627 = vpop.permute.xlu0 %626
      %628 = vrot.lane.b32.xlu0 %v307, 12
      %v629 = vpop.permute.xlu0 %628
      %630 = vrot.lane.b32.xlu0 %v308, 12
      %v631 = vpop.permute.xlu0 %630
      %632 = vrot.lane.b32.xlu0 %v309, 12
      %v633 = vpop.permute.xlu0 %632
      %634 = vrot.lane.b32.xlu0 %v310, 12
      %v635 = vpop.permute.xlu0 %634
      %636 = vrot.lane.b32.xlu0 %v311, 12
      %v637 = vpop.permute.xlu0 %636
      %638 = vrot.lane.b32.xlu0 %v312, 12
      %v639 = vpop.permute.xlu0 %638
      %640 = vrot.lane.b32.xlu0 %v313, 12
      %v641 = vpop.permute.xlu0 %640
      %642 = vrot.lane.b32.xlu0 %v314, 12
      %v643 = vpop.permute.xlu0 %642
      %644 = vrot.lane.b32.xlu0 %v315, 12
      %v645 = vpop.permute.xlu0 %644
      %646 = vrot.lane.b32.xlu0 %v316, 12
      %v647 = vpop.permute.xlu0 %646
      %648 = vrot.lane.b32.xlu0 %v317, 12
      %v649 = vpop.permute.xlu0 %648
      %650 = vrot.lane.b32.xlu0 %v318, 12
      %v651 = vpop.permute.xlu0 %650
      %652 = vrot.lane.b32.xlu0 %v319, 12
      %v653 = vpop.permute.xlu0 %652
      %654 = vrot.lane.b32.xlu0 %v320, 12
      %v655 = vpop.permute.xlu0 %654
      %656 = vrot.lane.b32.xlu0 %v321, 12
      %v657 = vpop.permute.xlu0 %656
      %658 = vrot.lane.b32.xlu0 %v322, 12
      %v659 = vpop.permute.xlu0 %658
      %660 = vrot.lane.b32.xlu0 %v323, 12
      %v661 = vpop.permute.xlu0 %660
      %662 = vrot.lane.b32.xlu0 %v324, 12
      %v663 = vpop.permute.xlu0 %662
      %664 = vrot.lane.b32.xlu0 %v325, 12
      %v665 = vpop.permute.xlu0 %664
      %666 = vrot.lane.b32.xlu0 %v326, 12
      %v667 = vpop.permute.xlu0 %666
      %668 = vrot.lane.b32.xlu0 %v327, 12
      %v669 = vpop.permute.xlu0 %668
      %670 = vrot.lane.b32.xlu0 %v328, 12
      %v671 = vpop.permute.xlu0 %670
      %672 = vrot.lane.b32.xlu0 %v329, 12
      %v673 = vpop.permute.xlu0 %672
      %674 = vrot.lane.b32.xlu0 %v330, 12
      %v675 = vpop.permute.xlu0 %674
      %676 = vrot.lane.b32.xlu0 %v331, 12
      %v677 = vpop.permute.xlu0 %676
      %678 = vrot.lane.b32.xlu0 %v332, 12
      %v679 = vpop.permute.xlu0 %678
      %680 = vrot.lane.b32.xlu0 %v333, 12
      %v681 = vpop.permute.xlu0 %680
      %682 = vrot.lane.b32.xlu0 %v334, 12
      %v683 = vpop.permute.xlu0 %682
      %684 = vrot.lane.b32.xlu0 %v335, 12
      %v685 = vpop.permute.xlu0 %684
      %686 = vrot.lane.b32.xlu0 %v336, 12
      %v687 = vpop.permute.xlu0 %686
      %688 = vrot.lane.b32.xlu0 %v337, 12
      %v689 = vpop.permute.xlu0 %688
      %vm722 = vcmask 31744
      %v723 = vsel %vm722, %v209, %v371
      %v724 = vsel %vm722, %v210, %v373
      %v725 = vsel %vm722, %v211, %v375
      %v726 = vsel %vm722, %v212, %v377
      %v727 = vsel %vm722, %v213, %v379
      %v728 = vsel %vm722, %v214, %v381
      %v729 = vsel %vm722, %v215, %v383
      %v730 = vsel %vm722, %v216, %v385
      %v731 = vsel %vm722, %v217, %v387
      %v732 = vsel %vm722, %v218, %v389
      %v733 = vsel %vm722, %v219, %v391
      %v734 = vsel %vm722, %v220, %v393
      %v735 = vsel %vm722, %v221, %v395
      %v736 = vsel %vm722, %v222, %v397
      %v737 = vsel %vm722, %v223, %v399
      %v738 = vsel %vm722, %v224, %v401
      %v739 = vsel %vm722, %v225, %v403
      %v740 = vsel %vm722, %v226, %v405
      %v741 = vsel %vm722, %v227, %v407
      %v742 = vsel %vm722, %v228, %v409
      %v743 = vsel %vm722, %v229, %v411
      %v744 = vsel %vm722, %v230, %v413
      %v745 = vsel %vm722, %v231, %v415
      %v746 = vsel %vm722, %v232, %v417
      %v747 = vsel %vm722, %v233, %v419
      %v748 = vsel %vm722, %v234, %v421
      %v749 = vsel %vm722, %v235, %v423
      %v750 = vsel %vm722, %v236, %v425
      %v751 = vsel %vm722, %v237, %v427
      %v752 = vsel %vm722, %v238, %v429
      %v753 = vsel %vm722, %v239, %v431
      %v754 = vsel %vm722, %v240, %v433
      %vm755 = vcmask 64512
      %v756 = vsel %vm755, %v723, %v499
      %v757 = vsel %vm755, %v724, %v501
      %v758 = vsel %vm755, %v725, %v503
      %v759 = vsel %vm755, %v726, %v505
      %v760 = vsel %vm755, %v727, %v507
      %v761 = vsel %vm755, %v728, %v509
      %v762 = vsel %vm755, %v729, %v511
      %v763 = vsel %vm755, %v730, %v513
      %v764 = vsel %vm755, %v731, %v515
      %v765 = vsel %vm755, %v732, %v517
      %v766 = vsel %vm755, %v733, %v519
      %v767 = vsel %vm755, %v734, %v521
      %v768 = vsel %vm755, %v735, %v523
      %v769 = vsel %vm755, %v736, %v525
      %v770 = vsel %vm755, %v737, %v527
      %v771 = vsel %vm755, %v738, %v529
      %v772 = vsel %vm755, %v739, %v531
      %v773 = vsel %vm755, %v740, %v533
      %v774 = vsel %vm755, %v741, %v535
      %v775 = vsel %vm755, %v742, %v537
      %v776 = vsel %vm755, %v743, %v539
      %v777 = vsel %vm755, %v744, %v541
      %v778 = vsel %vm755, %v745, %v543
      %v779 = vsel %vm755, %v746, %v545
      %v780 = vsel %vm755, %v747, %v547
      %v781 = vsel %vm755, %v748, %v549
      %v782 = vsel %vm755, %v749, %v551
      %v783 = vsel %vm755, %v750, %v553
      %v784 = vsel %vm755, %v751, %v555
      %v785 = vsel %vm755, %v752, %v557
      %v786 = vsel %vm755, %v753, %v559
      %v787 = vsel %vm755, %v754, %v561
      %vm788 = vcmask 97280
      %v789 = vsel %vm788, %v756, %v627
      %v790 = vsel %vm788, %v757, %v629
      %v791 = vsel %vm788, %v758, %v631
      %v792 = vsel %vm788, %v759, %v633
      %v793 = vsel %vm788, %v760, %v635
      %v794 = vsel %vm788, %v761, %v637
      %v795 = vsel %vm788, %v762, %v639
      %v796 = vsel %vm788, %v763, %v641
      %v797 = vsel %vm788, %v764, %v643
      %v798 = vsel %vm788, %v765, %v645
      %v799 = vsel %vm788, %v766, %v647
      %v800 = vsel %vm788, %v767, %v649
      %v801 = vsel %vm788, %v768, %v651
      %v802 = vsel %vm788, %v769, %v653
      %v803 = vsel %vm788, %v770, %v655
      %v804 = vsel %vm788, %v771, %v657
      %v805 = vsel %vm788, %v772, %v659
      %v806 = vsel %vm788, %v773, %v661
      %v807 = vsel %vm788, %v774, %v663
      %v808 = vsel %vm788, %v775, %v665
      %v809 = vsel %vm788, %v776, %v667
      %v810 = vsel %vm788, %v777, %v669
      %v811 = vsel %vm788, %v778, %v671
      %v812 = vsel %vm788, %v779, %v673
      %v813 = vsel %vm788, %v780, %v675
      %v814 = vsel %vm788, %v781, %v677
      %v815 = vsel %vm788, %v782, %v679
      %v816 = vsel %vm788, %v783, %v681
      %v817 = vsel %vm788, %v784, %v683
      %v818 = vsel %vm788, %v785, %v685
      %v819 = vsel %vm788, %v786, %v687
      %v820 = vsel %vm788, %v787, %v689
      %v821 = vld [vmem:[%s1] sm:$0xff]
      %v822 = vld [vmem:[%s1 + $0x8] sm:$0xff]
      %v824 = vlaneseq
      %v825 = vshrl.u32 %v824, 7
      %v826 = vsub.s32 0, %v825
      %v827 = vrot.slane %v208, %v826
      %vm829 = vcmask 130048
      %v831 = vsel %vm829, %v789, 0
      %v834 = vsel %vm829, %v790, 0
      %v837 = vsel %vm829, %v791, 0
      %v840 = vsel %vm829, %v792, 0
      %v843 = vsel %vm829, %v793, 0
      %v846 = vsel %vm829, %v794, 0
      %v849 = vsel %vm829, %v795, 0
      %v852 = vsel %vm829, %v796, 0
      %v855 = vsel %vm829, %v797, 0
      %v858 = vsel %vm829, %v798, 0
      %v861 = vsel %vm829, %v799, 0
      %v864 = vsel %vm829, %v800, 0
      %v867 = vsel %vm829, %v801, 0
      %v870 = vsel %vm829, %v802, 0
      %v873 = vsel %vm829, %v803, 0
      %v876 = vsel %vm829, %v804, 0
      %v879 = vsel %vm829, %v805, 0
      %v882 = vsel %vm829, %v806, 0
      %v885 = vsel %vm829, %v807, 0
      %v888 = vsel %vm829, %v808, 0
      %v891 = vsel %vm829, %v809, 0
      %v894 = vsel %vm829, %v810, 0
      %v897 = vsel %vm829, %v811, 0
      %v900 = vsel %vm829, %v812, 0
      %v903 = vsel %vm829, %v813, 0
      %v906 = vsel %vm829, %v814, 0
      %v909 = vsel %vm829, %v815, 0
      %v912 = vsel %vm829, %v816, 0
      %v915 = vsel %vm829, %v817, 0
      %v918 = vsel %vm829, %v818, 0
      %v921 = vsel %vm829, %v819, 0
      %v924 = vsel %vm829, %v820, 0
      %926 = vmatprep.subr.mxu0 0.0
      %927 = vmatpush1.msra.mxu0 0.0
      %928 = vmatprep.subr.mxu0 0.0
      %929 = vmatpush1.msra.mxu0 0.0
      %930 = vmatprep.subr.mxu0 0.0
      %931 = vmatpush1.msra.mxu0 0.0
      %932 = vmatprep.subr.mxu0 0.0
      %933 = vmatpush1.msra.mxu0 0.0
      %934 = vmatprep.subr.mxu0 0.0
      %935 = vmatpush1.msra.mxu0 0.0
      %936 = vmatprep.subr.mxu0 0.0
      %937 = vmatpush1.msra.mxu0 0.0
      %938 = vmatprep.subr.mxu0 0.0
      %939 = vmatpush1.msra.mxu0 0.0
      %940 = vmatprep.subr.mxu0 0.0
      %941 = vmatpush1.msra.mxu0 0.0
      %942 = vmatprep.subr.mxu0 0.0
      %943 = vmatpush1.msra.mxu0 0.0
      %944 = vmatprep.subr.mxu0 0.0
      %945 = vmatpush1.msra.mxu0 0.0
      %946 = vmatprep.subr.mxu0 0.0
      %947 = vmatpush1.msra.mxu0 0.0
      %948 = vmatprep.subr.mxu0 0.0
      %949 = vmatpush1.msra.mxu0 0.0
      %950 = vmatprep.subr.mxu0 0.0
      %951 = vmatpush1.msra.mxu0 0.0
      %952 = vmatprep.subr.mxu0 0.0
      %953 = vmatpush1.msra.mxu0 0.0
      %954 = vmatprep.subr.mxu0 0.0
      %955 = vmatpush1.msra.mxu0 %v822
      %956 = vmatprep.subr.mxu0 0.0
      %957 = vmatpush1.msra.mxu0 %v821
      %958 = vmatprep.subr.mxu0 0.0
      %959 = vmatpush2.msra.mxu0 0.0
      %960 = vmatprep.subr.mxu0 0.0
      %961 = vmatpush2.msra.mxu0 0.0
      %962 = vmatprep.subr.mxu0 0.0
      %963 = vmatpush2.msra.mxu0 0.0
      %964 = vmatprep.subr.mxu0 0.0
      %965 = vmatpush2.msra.mxu0 0.0
      %966 = vmatprep.subr.mxu0 0.0
      %967 = vmatpush2.msra.mxu0 0.0
      %968 = vmatprep.subr.mxu0 0.0
      %969 = vmatpush2.msra.mxu0 0.0
      %970 = vmatprep.subr.mxu0 0.0
      %971 = vmatpush2.msra.mxu0 0.0
      %972 = vmatprep.subr.mxu0 0.0
      %973 = vmatpush2.msra.mxu0 0.0
      %974 = vmatprep.subr.mxu0 0.0
      %975 = vmatpush2.msra.mxu0 0.0
      %976 = vmatprep.subr.mxu0 0.0
      %977 = vmatpush2.msra.mxu0 0.0
      %978 = vmatprep.subr.mxu0 0.0
      %979 = vmatpush2.msra.mxu0 0.0
      %980 = vmatprep.subr.mxu0 0.0
      %981 = vmatpush2.msra.mxu0 0.0
      %982 = vmatprep.subr.mxu0 0.0
      %983 = vmatpush2.msra.mxu0 0.0
      %984 = vmatprep.subr.mxu0 0.0
      %985 = vmatpush2.msra.mxu0 0.0
      %986 = vmatprep.subr.mxu0 0.0
      %987 = vmatpush2.msra.mxu0 0.0
      %988 = vmatprep.subr.mxu0 0.0
      %989 = vmatpush2.msra.mxu0 0.0
      %990 = vmatprep.mubr.f32.mxu0 0.0
      %991 = vmatmul.mubr.f32.gmra.mxu0 %v831
      %v992 = vpop.f32.mrf.mxu0
      %v993 = vadd.f32 %v827, %v992
      %v994 = vpop.f32.mrf.mxu0
      %995 = vmatprep.mubr.f32.mxu0 0.0
      %996 = vmatmul.mubr.f32.gmra.mxu0 %v834
      %v997 = vpop.f32.mrf.mxu0
      %v998 = vadd.f32 %v827, %v997
      %v999 = vpop.f32.mrf.mxu0
      %1000 = vmatprep.mubr.f32.mxu0 0.0
      %1001 = vmatmul.mubr.f32.gmra.mxu0 %v837
      %v1002 = vpop.f32.mrf.mxu0
      %v1003 = vadd.f32 %v827, %v1002
      %v1004 = vpop.f32.mrf.mxu0
      %1005 = vmatprep.mubr.f32.mxu0 0.0
      %1006 = vmatmul.mubr.f32.gmra.mxu0 %v840
      %v1007 = vpop.f32.mrf.mxu0
      %v1008 = vadd.f32 %v827, %v1007
      %v1009 = vpop.f32.mrf.mxu0
      %1010 = vmatprep.mubr.f32.mxu0 0.0
      %1011 = vmatmul.mubr.f32.gmra.mxu0 %v843
      %v1012 = vpop.f32.mrf.mxu0
      %v1013 = vadd.f32 %v827, %v1012
      %v1014 = vpop.f32.mrf.mxu0
      %1015 = vmatprep.mubr.f32.mxu0 0.0
      %1016 = vmatmul.mubr.f32.gmra.mxu0 %v846
      %v1017 = vpop.f32.mrf.mxu0
      %v1018 = vadd.f32 %v827, %v1017
      %v1019 = vpop.f32.mrf.mxu0
      %1020 = vmatprep.mubr.f32.mxu0 0.0
      %1021 = vmatmul.mubr.f32.gmra.mxu0 %v849
      %v1022 = vpop.f32.mrf.mxu0
      %v1023 = vadd.f32 %v827, %v1022
      %v1024 = vpop.f32.mrf.mxu0
      %1025 = vmatprep.mubr.f32.mxu0 0.0
      %1026 = vmatmul.mubr.f32.gmra.mxu0 %v852
      %v1027 = vpop.f32.mrf.mxu0
      %v1028 = vadd.f32 %v827, %v1027
      %v1029 = vpop.f32.mrf.mxu0
      %1030 = vmatprep.mubr.f32.mxu0 0.0
      %1031 = vmatmul.mubr.f32.gmra.mxu0 %v855
      %v1032 = vpop.f32.mrf.mxu0
      %v1033 = vadd.f32 %v827, %v1032
      %v1034 = vpop.f32.mrf.mxu0
      %1035 = vmatprep.mubr.f32.mxu0 0.0
      %1036 = vmatmul.mubr.f32.gmra.mxu0 %v858
      %v1037 = vpop.f32.mrf.mxu0
      %v1038 = vadd.f32 %v827, %v1037
      %v1039 = vpop.f32.mrf.mxu0
      %1040 = vmatprep.mubr.f32.mxu0 0.0
      %1041 = vmatmul.mubr.f32.gmra.mxu0 %v861
      %v1042 = vpop.f32.mrf.mxu0
      %v1043 = vadd.f32 %v827, %v1042
      %v1044 = vpop.f32.mrf.mxu0
      %1045 = vmatprep.mubr.f32.mxu0 0.0
      %1046 = vmatmul.mubr.f32.gmra.mxu0 %v864
      %v1047 = vpop.f32.mrf.mxu0
      %v1048 = vadd.f32 %v827, %v1047
      %v1049 = vpop.f32.mrf.mxu0
      %1050 = vmatprep.mubr.f32.mxu0 0.0
      %1051 = vmatmul.mubr.f32.gmra.mxu0 %v867
      %v1052 = vpop.f32.mrf.mxu0
      %v1053 = vadd.f32 %v827, %v1052
      %v1054 = vpop.f32.mrf.mxu0
      %1055 = vmatprep.mubr.f32.mxu0 0.0
      %1056 = vmatmul.mubr.f32.gmra.mxu0 %v870
      %v1057 = vpop.f32.mrf.mxu0
      %v1058 = vadd.f32 %v827, %v1057
      %v1059 = vpop.f32.mrf.mxu0
      %1060 = vmatprep.mubr.f32.mxu0 0.0
      %1061 = vmatmul.mubr.f32.gmra.mxu0 %v873
      %v1062 = vpop.f32.mrf.mxu0
      %v1063 = vadd.f32 %v827, %v1062
      %v1064 = vpop.f32.mrf.mxu0
      %1065 = vmatprep.mubr.f32.mxu0 0.0
      %1066 = vmatmul.mubr.f32.gmra.mxu0 %v876
      %v1067 = vpop.f32.mrf.mxu0
      %v1068 = vadd.f32 %v827, %v1067
      %v1069 = vpop.f32.mrf.mxu0
      %1070 = vmatprep.mubr.f32.mxu0 0.0
      %1071 = vmatmul.mubr.f32.gmra.mxu0 %v879
      %v1072 = vpop.f32.mrf.mxu0
      %v1073 = vadd.f32 %v827, %v1072
      %v1074 = vpop.f32.mrf.mxu0
      %1075 = vmatprep.mubr.f32.mxu0 0.0
      %1076 = vmatmul.mubr.f32.gmra.mxu0 %v882
      %v1077 = vpop.f32.mrf.mxu0
      %v1078 = vadd.f32 %v827, %v1077
      %v1079 = vpop.f32.mrf.mxu0
      %1080 = vmatprep.mubr.f32.mxu0 0.0
      %1081 = vmatmul.mubr.f32.gmra.mxu0 %v885
      %v1082 = vpop.f32.mrf.mxu0
      %v1083 = vadd.f32 %v827, %v1082
      %v1084 = vpop.f32.mrf.mxu0
      %1085 = vmatprep.mubr.f32.mxu0 0.0
      %1086 = vmatmul.mubr.f32.gmra.mxu0 %v888
      %v1087 = vpop.f32.mrf.mxu0
      %v1088 = vadd.f32 %v827, %v1087
      %v1089 = vpop.f32.mrf.mxu0
      %1090 = vmatprep.mubr.f32.mxu0 0.0
      %1091 = vmatmul.mubr.f32.gmra.mxu0 %v891
      %v1092 = vpop.f32.mrf.mxu0
      %v1093 = vadd.f32 %v827, %v1092
      %v1094 = vpop.f32.mrf.mxu0
      %1095 = vmatprep.mubr.f32.mxu0 0.0
      %1096 = vmatmul.mubr.f32.gmra.mxu0 %v894
      %v1097 = vpop.f32.mrf.mxu0
      %v1098 = vadd.f32 %v827, %v1097
      %v1099 = vpop.f32.mrf.mxu0
      %1100 = vmatprep.mubr.f32.mxu0 0.0
      %1101 = vmatmul.mubr.f32.gmra.mxu0 %v897
      %v1102 = vpop.f32.mrf.mxu0
      %v1103 = vadd.f32 %v827, %v1102
      %v1104 = vpop.f32.mrf.mxu0
      %1105 = vmatprep.mubr.f32.mxu0 0.0
      %1106 = vmatmul.mubr.f32.gmra.mxu0 %v900
      %v1107 = vpop.f32.mrf.mxu0
      %v1108 = vadd.f32 %v827, %v1107
      %v1109 = vpop.f32.mrf.mxu0
      %1110 = vmatprep.mubr.f32.mxu0 0.0
      %1111 = vmatmul.mubr.f32.gmra.mxu0 %v903
      %v1112 = vpop.f32.mrf.mxu0
      %v1113 = vadd.f32 %v827, %v1112
      %v1114 = vpop.f32.mrf.mxu0
      %1115 = vmatprep.mubr.f32.mxu0 0.0
      %1116 = vmatmul.mubr.f32.gmra.mxu0 %v906
      %v1117 = vpop.f32.mrf.mxu0
      %v1118 = vadd.f32 %v827, %v1117
      %v1119 = vpop.f32.mrf.mxu0
      %1120 = vmatprep.mubr.f32.mxu0 0.0
      %1121 = vmatmul.mubr.f32.gmra.mxu0 %v909
      %v1122 = vpop.f32.mrf.mxu0
      %v1123 = vadd.f32 %v827, %v1122
      %v1124 = vpop.f32.mrf.mxu0
      %1125 = vmatprep.mubr.f32.mxu0 0.0
      %1126 = vmatmul.mubr.f32.gmra.mxu0 %v912
      %v1127 = vpop.f32.mrf.mxu0
      %v1128 = vadd.f32 %v827, %v1127
      %v1129 = vpop.f32.mrf.mxu0
      %1130 = vmatprep.mubr.f32.mxu0 0.0
      %1131 = vmatmul.mubr.f32.gmra.mxu0 %v915
      %v1132 = vpop.f32.mrf.mxu0
      %v1133 = vadd.f32 %v827, %v1132
      %v1134 = vpop.f32.mrf.mxu0
      %1135 = vmatprep.mubr.f32.mxu0 0.0
      %1136 = vmatmul.mubr.f32.gmra.mxu0 %v918
      %v1137 = vpop.f32.mrf.mxu0
      %v1138 = vadd.f32 %v827, %v1137
      %v1139 = vpop.f32.mrf.mxu0
      %1140 = vmatprep.mubr.f32.mxu0 0.0
      %1141 = vmatmul.mubr.f32.gmra.mxu0 %v921
      %v1142 = vpop.f32.mrf.mxu0
      %v1143 = vadd.f32 %v827, %v1142
      %v1144 = vpop.f32.mrf.mxu0
      %1145 = vmatprep.mubr.f32.mxu0 0.0
      %1146 = vmatmul.mubr.f32.gmra.mxu0 %v924
      %v1147 = vpop.f32.mrf.mxu0
      %v1148 = vadd.f32 %v827, %v1147
      %v1149 = vpop.f32.mrf.mxu0
      %1150 = vdwg.mxu0
      %1151 = vst.msk [vmem:[%s206] sm:$0xff] %vm722, %v993
      %1152 = vst.msk [vmem:[%s206 + $0x8] sm:$0xff] %vm722, %v998
      %1153 = vst.msk [vmem:[%s206 + $0x10] sm:$0xff] %vm722, %v1003
      %1154 = vst.msk [vmem:[%s206 + $0x18] sm:$0xff] %vm722, %v1008
      %1155 = vst.msk [vmem:[%s206 + $0x20] sm:$0xff] %vm722, %v1013
      %1156 = vst.msk [vmem:[%s206 + $0x28] sm:$0xff] %vm722, %v1018
      %1157 = vst.msk [vmem:[%s206 + $0x30] sm:$0xff] %vm722, %v1023
      %1158 = vst.msk [vmem:[%s206 + $0x38] sm:$0xff] %vm722, %v1028
      %1159 = vst.msk [vmem:[%s206 + $0x40] sm:$0xff] %vm722, %v1033
      %1160 = vst.msk [vmem:[%s206 + $0x48] sm:$0xff] %vm722, %v1038
      %1161 = vst.msk [vmem:[%s206 + $0x50] sm:$0xff] %vm722, %v1043
      %1162 = vst.msk [vmem:[%s206 + $0x58] sm:$0xff] %vm722, %v1048
      %1163 = vst.msk [vmem:[%s206 + $0x60] sm:$0xff] %vm722, %v1053
      %1164 = vst.msk [vmem:[%s206 + $0x68] sm:$0xff] %vm722, %v1058
      %1165 = vst.msk [vmem:[%s206 + $0x70] sm:$0xff] %vm722, %v1063
      %1166 = vst.msk [vmem:[%s206 + $0x78] sm:$0xff] %vm722, %v1068
      %1167 = vst.msk [vmem:[%s206 + $0x80] sm:$0xff] %vm722, %v1073
      %1168 = vst.msk [vmem:[%s206 + $0x88] sm:$0xff] %vm722, %v1078
      %1169 = vst.msk [vmem:[%s206 + $0x90] sm:$0xff] %vm722, %v1083
      %1170 = vst.msk [vmem:[%s206 + $0x98] sm:$0xff] %vm722, %v1088
      %1171 = vst.msk [vmem:[%s206 + $0xa0] sm:$0xff] %vm722, %v1093
      %1172 = vst.msk [vmem:[%s206 + $0xa8] sm:$0xff] %vm722, %v1098
      %1173 = vst.msk [vmem:[%s206 + $0xb0] sm:$0xff] %vm722, %v1103
      %1174 = vst.msk [vmem:[%s206 + $0xb8] sm:$0xff] %vm722, %v1108
      %1175 = vst.msk [vmem:[%s206 + $0xc0] sm:$0xff] %vm722, %v1113
      %1176 = vst.msk [vmem:[%s206 + $0xc8] sm:$0xff] %vm722, %v1118
      %1177 = vst.msk [vmem:[%s206 + $0xd0] sm:$0xff] %vm722, %v1123
      %1178 = vst.msk [vmem:[%s206 + $0xd8] sm:$0xff] %vm722, %v1128
      %1179 = vst.msk [vmem:[%s206 + $0xe0] sm:$0xff] %vm722, %v1133
      %1180 = vst.msk [vmem:[%s206 + $0xe8] sm:$0xff] %vm722, %v1138
      %1181 = vst.msk [vmem:[%s206 + $0xf0] sm:$0xff] %vm722, %v1143
      %1182 = vst.msk [vmem:[%s206 + $0xf8] sm:$0xff] %vm722, %v1148
      %v1183 = vld [vmem:[%s197 + $0x1] sm:$0xff]
      %v1184 = vld [vmem:[%s197 + $0x9] sm:$0xff]
      %v1185 = vld [vmem:[%s197 + $0x19] sm:$0xff]
      %v1186 = vld [vmem:[%s197 + $0x21] sm:$0xff]
      %v1187 = vld [vmem:[%s197 + $0x31] sm:$0xff]
      %v1188 = vld [vmem:[%s197 + $0x39] sm:$0xff]
      %v1189 = vld [vmem:[%s197 + $0x49] sm:$0xff]
      %v1190 = vld [vmem:[%s197 + $0x51] sm:$0xff]
      %v1191 = vld [vmem:[%s197 + $0x61] sm:$0xff]
      %v1192 = vld [vmem:[%s197 + $0x69] sm:$0xff]
      %v1193 = vld [vmem:[%s197 + $0x79] sm:$0xff]
      %v1194 = vld [vmem:[%s197 + $0x81] sm:$0xff]
      %v1195 = vld [vmem:[%s197 + $0x91] sm:$0xff]
      %v1196 = vld [vmem:[%s197 + $0x99] sm:$0xff]
      %v1197 = vld [vmem:[%s197 + $0xa9] sm:$0xff]
      %v1198 = vld [vmem:[%s197 + $0xb1] sm:$0xff]
      %v1199 = vld [vmem:[%s197 + $0xc1] sm:$0xff]
      %v1200 = vld [vmem:[%s197 + $0xc9] sm:$0xff]
      %v1201 = vld [vmem:[%s197 + $0xd9] sm:$0xff]
      %v1202 = vld [vmem:[%s197 + $0xe1] sm:$0xff]
      %v1203 = vld [vmem:[%s197 + $0xf1] sm:$0xff]
      %v1204 = vld [vmem:[%s197 + $0xf9] sm:$0xff]
      %v1205 = vld [vmem:[%s197 + $0x109] sm:$0xff]
      %v1206 = vld [vmem:[%s197 + $0x111] sm:$0xff]
      %v1207 = vld [vmem:[%s197 + $0x121] sm:$0xff]
      %v1208 = vld [vmem:[%s197 + $0x129] sm:$0xff]
      %v1209 = vld [vmem:[%s197 + $0x139] sm:$0xff]
      %v1210 = vld [vmem:[%s197 + $0x141] sm:$0xff]
      %v1211 = vld [vmem:[%s197 + $0x151] sm:$0xff]
      %v1212 = vld [vmem:[%s197 + $0x159] sm:$0xff]
      %v1213 = vld [vmem:[%s197 + $0x169] sm:$0xff]
      %v1214 = vld [vmem:[%s197 + $0x171] sm:$0xff]
      %v1215 = vld [vmem:[%s197 + $0x2] sm:$0xff]
      %v1216 = vld [vmem:[%s197 + $0xa] sm:$0xff]
      %v1217 = vld [vmem:[%s197 + $0x1a] sm:$0xff]
      %v1218 = vld [vmem:[%s197 + $0x22] sm:$0xff]
      %v1219 = vld [vmem:[%s197 + $0x32] sm:$0xff]
      %v1220 = vld [vmem:[%s197 + $0x3a] sm:$0xff]
      %v1221 = vld [vmem:[%s197 + $0x4a] sm:$0xff]
      %v1222 = vld [vmem:[%s197 + $0x52] sm:$0xff]
      %v1223 = vld [vmem:[%s197 + $0x62] sm:$0xff]
      %v1224 = vld [vmem:[%s197 + $0x6a] sm:$0xff]
      %v1225 = vld [vmem:[%s197 + $0x7a] sm:$0xff]
      %v1226 = vld [vmem:[%s197 + $0x82] sm:$0xff]
      %v1227 = vld [vmem:[%s197 + $0x92] sm:$0xff]
      %v1228 = vld [vmem:[%s197 + $0x9a] sm:$0xff]
      %v1229 = vld [vmem:[%s197 + $0xaa] sm:$0xff]
      %v1230 = vld [vmem:[%s197 + $0xb2] sm:$0xff]
      %v1231 = vld [vmem:[%s197 + $0xc2] sm:$0xff]
      %v1232 = vld [vmem:[%s197 + $0xca] sm:$0xff]
      %v1233 = vld [vmem:[%s197 + $0xda] sm:$0xff]
      %v1234 = vld [vmem:[%s197 + $0xe2] sm:$0xff]
      %v1235 = vld [vmem:[%s197 + $0xf2] sm:$0xff]
      %v1236 = vld [vmem:[%s197 + $0xfa] sm:$0xff]
      %v1237 = vld [vmem:[%s197 + $0x10a] sm:$0xff]
      %v1238 = vld [vmem:[%s197 + $0x112] sm:$0xff]
      %v1239 = vld [vmem:[%s197 + $0x122] sm:$0xff]
      %v1240 = vld [vmem:[%s197 + $0x12a] sm:$0xff]
      %v1241 = vld [vmem:[%s197 + $0x13a] sm:$0xff]
      %v1242 = vld [vmem:[%s197 + $0x142] sm:$0xff]
      %v1243 = vld [vmem:[%s197 + $0x152] sm:$0xff]
      %v1244 = vld [vmem:[%s197 + $0x15a] sm:$0xff]
      %v1245 = vld [vmem:[%s197 + $0x16a] sm:$0xff]
      %v1246 = vld [vmem:[%s197 + $0x172] sm:$0xff]
      %v1247 = vld [vmem:[%s273 + $0x1] sm:$0xff]
      %v1248 = vld [vmem:[%s273 + $0x9] sm:$0xff]
      %v1249 = vld [vmem:[%s273 + $0x19] sm:$0xff]
      %v1250 = vld [vmem:[%s273 + $0x21] sm:$0xff]
      %v1251 = vld [vmem:[%s273 + $0x31] sm:$0xff]
      %v1252 = vld [vmem:[%s273 + $0x39] sm:$0xff]
      %v1253 = vld [vmem:[%s273 + $0x49] sm:$0xff]
      %v1254 = vld [vmem:[%s273 + $0x51] sm:$0xff]
      %v1255 = vld [vmem:[%s273 + $0x61] sm:$0xff]
      %v1256 = vld [vmem:[%s273 + $0x69] sm:$0xff]
      %v1257 = vld [vmem:[%s273 + $0x79] sm:$0xff]
      %v1258 = vld [vmem:[%s273 + $0x81] sm:$0xff]
      %v1259 = vld [vmem:[%s273 + $0x91] sm:$0xff]
      %v1260 = vld [vmem:[%s273 + $0x99] sm:$0xff]
      %v1261 = vld [vmem:[%s273 + $0xa9] sm:$0xff]
      %v1262 = vld [vmem:[%s273 + $0xb1] sm:$0xff]
      %v1263 = vld [vmem:[%s273 + $0xc1] sm:$0xff]
      %v1264 = vld [vmem:[%s273 + $0xc9] sm:$0xff]
      %v1265 = vld [vmem:[%s273 + $0xd9] sm:$0xff]
      %v1266 = vld [vmem:[%s273 + $0xe1] sm:$0xff]
      %v1267 = vld [vmem:[%s273 + $0xf1] sm:$0xff]
      %v1268 = vld [vmem:[%s273 + $0xf9] sm:$0xff]
      %v1269 = vld [vmem:[%s273 + $0x109] sm:$0xff]
      %v1270 = vld [vmem:[%s273 + $0x111] sm:$0xff]
      %v1271 = vld [vmem:[%s273 + $0x121] sm:$0xff]
      %v1272 = vld [vmem:[%s273 + $0x129] sm:$0xff]
      %v1273 = vld [vmem:[%s273 + $0x139] sm:$0xff]
      %v1274 = vld [vmem:[%s273 + $0x141] sm:$0xff]
      %v1275 = vld [vmem:[%s273 + $0x151] sm:$0xff]
      %v1276 = vld [vmem:[%s273 + $0x159] sm:$0xff]
      %v1277 = vld [vmem:[%s273 + $0x169] sm:$0xff]
      %v1278 = vld [vmem:[%s273 + $0x171] sm:$0xff]
      %v1279 = vld [vmem:[%s273 + $0x2] sm:$0xff]
      %v1280 = vld [vmem:[%s273 + $0xa] sm:$0xff]
      %v1281 = vld [vmem:[%s273 + $0x1a] sm:$0xff]
      %v1282 = vld [vmem:[%s273 + $0x22] sm:$0xff]
      %v1283 = vld [vmem:[%s273 + $0x32] sm:$0xff]
      %v1284 = vld [vmem:[%s273 + $0x3a] sm:$0xff]
      %v1285 = vld [vmem:[%s273 + $0x4a] sm:$0xff]
      %v1286 = vld [vmem:[%s273 + $0x52] sm:$0xff]
      %v1287 = vld [vmem:[%s273 + $0x62] sm:$0xff]
      %v1288 = vld [vmem:[%s273 + $0x6a] sm:$0xff]
      %v1289 = vld [vmem:[%s273 + $0x7a] sm:$0xff]
      %v1290 = vld [vmem:[%s273 + $0x82] sm:$0xff]
      %v1291 = vld [vmem:[%s273 + $0x92] sm:$0xff]
      %v1292 = vld [vmem:[%s273 + $0x9a] sm:$0xff]
      %v1293 = vld [vmem:[%s273 + $0xaa] sm:$0xff]
      %v1294 = vld [vmem:[%s273 + $0xb2] sm:$0xff]
      %v1295 = vld [vmem:[%s273 + $0xc2] sm:$0xff]
      %v1296 = vld [vmem:[%s273 + $0xca] sm:$0xff]
      %v1297 = vld [vmem:[%s273 + $0xda] sm:$0xff]
      %v1298 = vld [vmem:[%s273 + $0xe2] sm:$0xff]
      %v1299 = vld [vmem:[%s273 + $0xf2] sm:$0xff]
      %v1300 = vld [vmem:[%s273 + $0xfa] sm:$0xff]
      %v1301 = vld [vmem:[%s273 + $0x10a] sm:$0xff]
      %v1302 = vld [vmem:[%s273 + $0x112] sm:$0xff]
      %v1303 = vld [vmem:[%s273 + $0x122] sm:$0xff]
      %v1304 = vld [vmem:[%s273 + $0x12a] sm:$0xff]
      %v1305 = vld [vmem:[%s273 + $0x13a] sm:$0xff]
      %v1306 = vld [vmem:[%s273 + $0x142] sm:$0xff]
      %v1307 = vld [vmem:[%s273 + $0x152] sm:$0xff]
      %v1308 = vld [vmem:[%s273 + $0x15a] sm:$0xff]
      %v1309 = vld [vmem:[%s273 + $0x16a] sm:$0xff]
      %v1310 = vld [vmem:[%s273 + $0x172] sm:$0xff]
      %1343 = vrot.lane.b32.xlu0 %v1215, 4
      %v1344 = vpop.permute.xlu0 %1343
      %1345 = vrot.lane.b32.xlu0 %v1216, 4
      %v1346 = vpop.permute.xlu0 %1345
      %1347 = vrot.lane.b32.xlu0 %v1217, 4
      %v1348 = vpop.permute.xlu0 %1347
      %1349 = vrot.lane.b32.xlu0 %v1218, 4
      %v1350 = vpop.permute.xlu0 %1349
      %1351 = vrot.lane.b32.xlu0 %v1219, 4
      %v1352 = vpop.permute.xlu0 %1351
      %1353 = vrot.lane.b32.xlu0 %v1220, 4
      %v1354 = vpop.permute.xlu0 %1353
      %1355 = vrot.lane.b32.xlu0 %v1221, 4
      %v1356 = vpop.permute.xlu0 %1355
      %1357 = vrot.lane.b32.xlu0 %v1222, 4
      %v1358 = vpop.permute.xlu0 %1357
      %1359 = vrot.lane.b32.xlu0 %v1223, 4
      %v1360 = vpop.permute.xlu0 %1359
      %1361 = vrot.lane.b32.xlu0 %v1224, 4
      %v1362 = vpop.permute.xlu0 %1361
      %1363 = vrot.lane.b32.xlu0 %v1225, 4
      %v1364 = vpop.permute.xlu0 %1363
      %1365 = vrot.lane.b32.xlu0 %v1226, 4
      %v1366 = vpop.permute.xlu0 %1365
      %1367 = vrot.lane.b32.xlu0 %v1227, 4
      %v1368 = vpop.permute.xlu0 %1367
      %1369 = vrot.lane.b32.xlu0 %v1228, 4
      %v1370 = vpop.permute.xlu0 %1369
      %1371 = vrot.lane.b32.xlu0 %v1229, 4
      %v1372 = vpop.permute.xlu0 %1371
      %1373 = vrot.lane.b32.xlu0 %v1230, 4
      %v1374 = vpop.permute.xlu0 %1373
      %1375 = vrot.lane.b32.xlu0 %v1231, 4
      %v1376 = vpop.permute.xlu0 %1375
      %1377 = vrot.lane.b32.xlu0 %v1232, 4
      %v1378 = vpop.permute.xlu0 %1377
      %1379 = vrot.lane.b32.xlu0 %v1233, 4
      %v1380 = vpop.permute.xlu0 %1379
      %1381 = vrot.lane.b32.xlu0 %v1234, 4
      %v1382 = vpop.permute.xlu0 %1381
      %1383 = vrot.lane.b32.xlu0 %v1235, 4
      %v1384 = vpop.permute.xlu0 %1383
      %1385 = vrot.lane.b32.xlu0 %v1236, 4
      %v1386 = vpop.permute.xlu0 %1385
      %1387 = vrot.lane.b32.xlu0 %v1237, 4
      %v1388 = vpop.permute.xlu0 %1387
      %1389 = vrot.lane.b32.xlu0 %v1238, 4
      %v1390 = vpop.permute.xlu0 %1389
      %1391 = vrot.lane.b32.xlu0 %v1239, 4
      %v1392 = vpop.permute.xlu0 %1391
      %1393 = vrot.lane.b32.xlu0 %v1240, 4
      %v1394 = vpop.permute.xlu0 %1393
      %1395 = vrot.lane.b32.xlu0 %v1241, 4
      %v1396 = vpop.permute.xlu0 %1395
      %1397 = vrot.lane.b32.xlu0 %v1242, 4
      %v1398 = vpop.permute.xlu0 %1397
      %1399 = vrot.lane.b32.xlu0 %v1243, 4
      %v1400 = vpop.permute.xlu0 %1399
      %1401 = vrot.lane.b32.xlu0 %v1244, 4
      %v1402 = vpop.permute.xlu0 %1401
      %1403 = vrot.lane.b32.xlu0 %v1245, 4
      %v1404 = vpop.permute.xlu0 %1403
      %1405 = vrot.lane.b32.xlu0 %v1246, 4
      %v1406 = vpop.permute.xlu0 %1405
      %1471 = vrot.lane.b32.xlu0 %v1247, 8
      %v1472 = vpop.permute.xlu0 %1471
      %1473 = vrot.lane.b32.xlu0 %v1248, 8
      %v1474 = vpop.permute.xlu0 %1473
      %1475 = vrot.lane.b32.xlu0 %v1249, 8
      %v1476 = vpop.permute.xlu0 %1475
      %1477 = vrot.lane.b32.xlu0 %v1250, 8
      %v1478 = vpop.permute.xlu0 %1477
      %1479 = vrot.lane.b32.xlu0 %v1251, 8
      %v1480 = vpop.permute.xlu0 %1479
      %1481 = vrot.lane.b32.xlu0 %v1252, 8
      %v1482 = vpop.permute.xlu0 %1481
      %1483 = vrot.lane.b32.xlu0 %v1253, 8
      %v1484 = vpop.permute.xlu0 %1483
      %1485 = vrot.lane.b32.xlu0 %v1254, 8
      %v1486 = vpop.permute.xlu0 %1485
      %1487 = vrot.lane.b32.xlu0 %v1255, 8
      %v1488 = vpop.permute.xlu0 %1487
      %1489 = vrot.lane.b32.xlu0 %v1256, 8
      %v1490 = vpop.permute.xlu0 %1489
      %1491 = vrot.lane.b32.xlu0 %v1257, 8
      %v1492 = vpop.permute.xlu0 %1491
      %1493 = vrot.lane.b32.xlu0 %v1258, 8
      %v1494 = vpop.permute.xlu0 %1493
      %1495 = vrot.lane.b32.xlu0 %v1259, 8
      %v1496 = vpop.permute.xlu0 %1495
      %1497 = vrot.lane.b32.xlu0 %v1260, 8
      %v1498 = vpop.permute.xlu0 %1497
      %1499 = vrot.lane.b32.xlu0 %v1261, 8
      %v1500 = vpop.permute.xlu0 %1499
      %1501 = vrot.lane.b32.xlu0 %v1262, 8
      %v1502 = vpop.permute.xlu0 %1501
      %1503 = vrot.lane.b32.xlu0 %v1263, 8
      %v1504 = vpop.permute.xlu0 %1503
      %1505 = vrot.lane.b32.xlu0 %v1264, 8
      %v1506 = vpop.permute.xlu0 %1505
      %1507 = vrot.lane.b32.xlu0 %v1265, 8
      %v1508 = vpop.permute.xlu0 %1507
      %1509 = vrot.lane.b32.xlu0 %v1266, 8
      %v1510 = vpop.permute.xlu0 %1509
      %1511 = vrot.lane.b32.xlu0 %v1267, 8
      %v1512 = vpop.permute.xlu0 %1511
      %1513 = vrot.lane.b32.xlu0 %v1268, 8
      %v1514 = vpop.permute.xlu0 %1513
      %1515 = vrot.lane.b32.xlu0 %v1269, 8
      %v1516 = vpop.permute.xlu0 %1515
      %1517 = vrot.lane.b32.xlu0 %v1270, 8
      %v1518 = vpop.permute.xlu0 %1517
      %1519 = vrot.lane.b32.xlu0 %v1271, 8
      %v1520 = vpop.permute.xlu0 %1519
      %1521 = vrot.lane.b32.xlu0 %v1272, 8
      %v1522 = vpop.permute.xlu0 %1521
      %1523 = vrot.lane.b32.xlu0 %v1273, 8
      %v1524 = vpop.permute.xlu0 %1523
      %1525 = vrot.lane.b32.xlu0 %v1274, 8
      %v1526 = vpop.permute.xlu0 %1525
      %1527 = vrot.lane.b32.xlu0 %v1275, 8
      %v1528 = vpop.permute.xlu0 %1527
      %1529 = vrot.lane.b32.xlu0 %v1276, 8
      %v1530 = vpop.permute.xlu0 %1529
      %1531 = vrot.lane.b32.xlu0 %v1277, 8
      %v1532 = vpop.permute.xlu0 %1531
      %1533 = vrot.lane.b32.xlu0 %v1278, 8
      %v1534 = vpop.permute.xlu0 %1533
      %1599 = vrot.lane.b32.xlu0 %v1279, 12
      %v1600 = vpop.permute.xlu0 %1599
      %1601 = vrot.lane.b32.xlu0 %v1280, 12
      %v1602 = vpop.permute.xlu0 %1601
      %1603 = vrot.lane.b32.xlu0 %v1281, 12
      %v1604 = vpop.permute.xlu0 %1603
      %1605 = vrot.lane.b32.xlu0 %v1282, 12
      %v1606 = vpop.permute.xlu0 %1605
      %1607 = vrot.lane.b32.xlu0 %v1283, 12
      %v1608 = vpop.permute.xlu0 %1607
      %1609 = vrot.lane.b32.xlu0 %v1284, 12
      %v1610 = vpop.permute.xlu0 %1609
      %1611 = vrot.lane.b32.xlu0 %v1285, 12
      %v1612 = vpop.permute.xlu0 %1611
      %1613 = vrot.lane.b32.xlu0 %v1286, 12
      %v1614 = vpop.permute.xlu0 %1613
      %1615 = vrot.lane.b32.xlu0 %v1287, 12
      %v1616 = vpop.permute.xlu0 %1615
      %1617 = vrot.lane.b32.xlu0 %v1288, 12
      %v1618 = vpop.permute.xlu0 %1617
      %1619 = vrot.lane.b32.xlu0 %v1289, 12
      %v1620 = vpop.permute.xlu0 %1619
      %1621 = vrot.lane.b32.xlu0 %v1290, 12
      %v1622 = vpop.permute.xlu0 %1621
      %1623 = vrot.lane.b32.xlu0 %v1291, 12
      %v1624 = vpop.permute.xlu0 %1623
      %1625 = vrot.lane.b32.xlu0 %v1292, 12
      %v1626 = vpop.permute.xlu0 %1625
      %1627 = vrot.lane.b32.xlu0 %v1293, 12
      %v1628 = vpop.permute.xlu0 %1627
      %1629 = vrot.lane.b32.xlu0 %v1294, 12
      %v1630 = vpop.permute.xlu0 %1629
      %1631 = vrot.lane.b32.xlu0 %v1295, 12
      %v1632 = vpop.permute.xlu0 %1631
      %1633 = vrot.lane.b32.xlu0 %v1296, 12
      %v1634 = vpop.permute.xlu0 %1633
      %1635 = vrot.lane.b32.xlu0 %v1297, 12
      %v1636 = vpop.permute.xlu0 %1635
      %1637 = vrot.lane.b32.xlu0 %v1298, 12
      %v1638 = vpop.permute.xlu0 %1637
      %1639 = vrot.lane.b32.xlu0 %v1299, 12
      %v1640 = vpop.permute.xlu0 %1639
      %1641 = vrot.lane.b32.xlu0 %v1300, 12
      %v1642 = vpop.permute.xlu0 %1641
      %1643 = vrot.lane.b32.xlu0 %v1301, 12
      %v1644 = vpop.permute.xlu0 %1643
      %1645 = vrot.lane.b32.xlu0 %v1302, 12
      %v1646 = vpop.permute.xlu0 %1645
      %1647 = vrot.lane.b32.xlu0 %v1303, 12
      %v1648 = vpop.permute.xlu0 %1647
      %1649 = vrot.lane.b32.xlu0 %v1304, 12
      %v1650 = vpop.permute.xlu0 %1649
      %1651 = vrot.lane.b32.xlu0 %v1305, 12
      %v1652 = vpop.permute.xlu0 %1651
      %1653 = vrot.lane.b32.xlu0 %v1306, 12
      %v1654 = vpop.permute.xlu0 %1653
      %1655 = vrot.lane.b32.xlu0 %v1307, 12
      %v1656 = vpop.permute.xlu0 %1655
      %1657 = vrot.lane.b32.xlu0 %v1308, 12
      %v1658 = vpop.permute.xlu0 %1657
      %1659 = vrot.lane.b32.xlu0 %v1309, 12
      %v1660 = vpop.permute.xlu0 %1659
      %1661 = vrot.lane.b32.xlu0 %v1310, 12
      %v1662 = vpop.permute.xlu0 %1661
      %v1695 = vsel %vm722, %v1183, %v1344
      %v1696 = vsel %vm722, %v1184, %v1346
      %v1697 = vsel %vm722, %v1185, %v1348
      %v1698 = vsel %vm722, %v1186, %v1350
      %v1699 = vsel %vm722, %v1187, %v1352
      %v1700 = vsel %vm722, %v1188, %v1354
      %v1701 = vsel %vm722, %v1189, %v1356
      %v1702 = vsel %vm722, %v1190, %v1358
      %v1703 = vsel %vm722, %v1191, %v1360
      %v1704 = vsel %vm722, %v1192, %v1362
      %v1705 = vsel %vm722, %v1193, %v1364
      %v1706 = vsel %vm722, %v1194, %v1366
      %v1707 = vsel %vm722, %v1195, %v1368
      %v1708 = vsel %vm722, %v1196, %v1370
      %v1709 = vsel %vm722, %v1197, %v1372
      %v1710 = vsel %vm722, %v1198, %v1374
      %v1711 = vsel %vm722, %v1199, %v1376
      %v1712 = vsel %vm722, %v1200, %v1378
      %v1713 = vsel %vm722, %v1201, %v1380
      %v1714 = vsel %vm722, %v1202, %v1382
      %v1715 = vsel %vm722, %v1203, %v1384
      %v1716 = vsel %vm722, %v1204, %v1386
      %v1717 = vsel %vm722, %v1205, %v1388
      %v1718 = vsel %vm722, %v1206, %v1390
      %v1719 = vsel %vm722, %v1207, %v1392
      %v1720 = vsel %vm722, %v1208, %v1394
      %v1721 = vsel %vm722, %v1209, %v1396
      %v1722 = vsel %vm722, %v1210, %v1398
      %v1723 = vsel %vm722, %v1211, %v1400
      %v1724 = vsel %vm722, %v1212, %v1402
      %v1725 = vsel %vm722, %v1213, %v1404
      %v1726 = vsel %vm722, %v1214, %v1406
      %v1727 = vsel %vm755, %v1695, %v1472
      %v1728 = vsel %vm755, %v1696, %v1474
      %v1729 = vsel %vm755, %v1697, %v1476
      %v1730 = vsel %vm755, %v1698, %v1478
      %v1731 = vsel %vm755, %v1699, %v1480
      %v1732 = vsel %vm755, %v1700, %v1482
      %v1733 = vsel %vm755, %v1701, %v1484
      %v1734 = vsel %vm755, %v1702, %v1486
      %v1735 = vsel %vm755, %v1703, %v1488
      %v1736 = vsel %vm755, %v1704, %v1490
      %v1737 = vsel %vm755, %v1705, %v1492
      %v1738 = vsel %vm755, %v1706, %v1494
      %v1739 = vsel %vm755, %v1707, %v1496
      %v1740 = vsel %vm755, %v1708, %v1498
      %v1741 = vsel %vm755, %v1709, %v1500
      %v1742 = vsel %vm755, %v1710, %v1502
      %v1743 = vsel %vm755, %v1711, %v1504
      %v1744 = vsel %vm755, %v1712, %v1506
      %v1745 = vsel %vm755, %v1713, %v1508
      %v1746 = vsel %vm755, %v1714, %v1510
      %v1747 = vsel %vm755, %v1715, %v1512
      %v1748 = vsel %vm755, %v1716, %v1514
      %v1749 = vsel %vm755, %v1717, %v1516
      %v1750 = vsel %vm755, %v1718, %v1518
      %v1751 = vsel %vm755, %v1719, %v1520
      %v1752 = vsel %vm755, %v1720, %v1522
      %v1753 = vsel %vm755, %v1721, %v1524
      %v1754 = vsel %vm755, %v1722, %v1526
      %v1755 = vsel %vm755, %v1723, %v1528
      %v1756 = vsel %vm755, %v1724, %v1530
      %v1757 = vsel %vm755, %v1725, %v1532
      %v1758 = vsel %vm755, %v1726, %v1534
      %v1759 = vsel %vm788, %v1727, %v1600
      %v1760 = vsel %vm788, %v1728, %v1602
      %v1761 = vsel %vm788, %v1729, %v1604
      %v1762 = vsel %vm788, %v1730, %v1606
      %v1763 = vsel %vm788, %v1731, %v1608
      %v1764 = vsel %vm788, %v1732, %v1610
      %v1765 = vsel %vm788, %v1733, %v1612
      %v1766 = vsel %vm788, %v1734, %v1614
      %v1767 = vsel %vm788, %v1735, %v1616
      %v1768 = vsel %vm788, %v1736, %v1618
      %v1769 = vsel %vm788, %v1737, %v1620
      %v1770 = vsel %vm788, %v1738, %v1622
      %v1771 = vsel %vm788, %v1739, %v1624
      %v1772 = vsel %vm788, %v1740, %v1626
      %v1773 = vsel %vm788, %v1741, %v1628
      %v1774 = vsel %vm788, %v1742, %v1630
      %v1775 = vsel %vm788, %v1743, %v1632
      %v1776 = vsel %vm788, %v1744, %v1634
      %v1777 = vsel %vm788, %v1745, %v1636
      %v1778 = vsel %vm788, %v1746, %v1638
      %v1779 = vsel %vm788, %v1747, %v1640
      %v1780 = vsel %vm788, %v1748, %v1642
      %v1781 = vsel %vm788, %v1749, %v1644
      %v1782 = vsel %vm788, %v1750, %v1646
      %v1783 = vsel %vm788, %v1751, %v1648
      %v1784 = vsel %vm788, %v1752, %v1650
      %v1785 = vsel %vm788, %v1753, %v1652
      %v1786 = vsel %vm788, %v1754, %v1654
      %v1787 = vsel %vm788, %v1755, %v1656
      %v1788 = vsel %vm788, %v1756, %v1658
      %v1789 = vsel %vm788, %v1757, %v1660
      %v1790 = vsel %vm788, %v1758, %v1662
      %s1791 = scalar_lea.vmem %s1, 16
      %v1792 = vld [vmem:[%s1791] sm:$0xff]
      %v1793 = vld [vmem:[%s1791 + $0x8] sm:$0xff]
      %v1795 = vsel %vm829, %v1759, 0
      %v1798 = vsel %vm829, %v1760, 0
      %v1801 = vsel %vm829, %v1761, 0
      %v1804 = vsel %vm829, %v1762, 0
      %v1807 = vsel %vm829, %v1763, 0
      %v1810 = vsel %vm829, %v1764, 0
      %v1813 = vsel %vm829, %v1765, 0
      %v1816 = vsel %vm829, %v1766, 0
      %v1819 = vsel %vm829, %v1767, 0
      %v1822 = vsel %vm829, %v1768, 0
      %v1825 = vsel %vm829, %v1769, 0
      %v1828 = vsel %vm829, %v1770, 0
      %v1831 = vsel %vm829, %v1771, 0
      %v1834 = vsel %vm829, %v1772, 0
      %v1837 = vsel %vm829, %v1773, 0
      %v1840 = vsel %vm829, %v1774, 0
      %v1843 = vsel %vm829, %v1775, 0
      %v1846 = vsel %vm829, %v1776, 0
      %v1849 = vsel %vm829, %v1777, 0
      %v1852 = vsel %vm829, %v1778, 0
      %v1855 = vsel %vm829, %v1779, 0
      %v1858 = vsel %vm829, %v1780, 0
      %v1861 = vsel %vm829, %v1781, 0
      %v1864 = vsel %vm829, %v1782, 0
      %v1867 = vsel %vm829, %v1783, 0
      %v1870 = vsel %vm829, %v1784, 0
      %v1873 = vsel %vm829, %v1785, 0
      %v1876 = vsel %vm829, %v1786, 0
      %v1879 = vsel %vm829, %v1787, 0
      %v1882 = vsel %vm829, %v1788, 0
      %v1885 = vsel %vm829, %v1789, 0
      %v1888 = vsel %vm829, %v1790, 0
      %1890 = vmatprep.subr.mxu0 0.0
      %1891 = vmatpush1.msra.mxu0 0.0
      %1892 = vmatprep.subr.mxu0 0.0
      %1893 = vmatpush1.msra.mxu0 0.0
      %1894 = vmatprep.subr.mxu0 0.0
      %1895 = vmatpush1.msra.mxu0 0.0
      %1896 = vmatprep.subr.mxu0 0.0
      %1897 = vmatpush1.msra.mxu0 0.0
      %1898 = vmatprep.subr.mxu0 0.0
      %1899 = vmatpush1.msra.mxu0 0.0
      %1900 = vmatprep.subr.mxu0 0.0
      %1901 = vmatpush1.msra.mxu0 0.0
      %1902 = vmatprep.subr.mxu0 0.0
      %1903 = vmatpush1.msra.mxu0 0.0
      %1904 = vmatprep.subr.mxu0 0.0
      %1905 = vmatpush1.msra.mxu0 0.0
      %1906 = vmatprep.subr.mxu0 0.0
      %1907 = vmatpush1.msra.mxu0 0.0
      %1908 = vmatprep.subr.mxu0 0.0
      %1909 = vmatpush1.msra.mxu0 0.0
      %1910 = vmatprep.subr.mxu0 0.0
      %1911 = vmatpush1.msra.mxu0 0.0
      %1912 = vmatprep.subr.mxu0 0.0
      %1913 = vmatpush1.msra.mxu0 0.0
      %1914 = vmatprep.subr.mxu0 0.0
      %1915 = vmatpush1.msra.mxu0 0.0
      %1916 = vmatprep.subr.mxu0 0.0
      %1917 = vmatpush1.msra.mxu0 0.0
      %1918 = vmatprep.subr.mxu0 0.0
      %1919 = vmatpush1.msra.mxu0 %v1793
      %1920 = vmatprep.subr.mxu0 0.0
      %1921 = vmatpush1.msra.mxu0 %v1792
      %1922 = vmatprep.subr.mxu0 0.0
      %1923 = vmatpush2.msra.mxu0 0.0
      %1924 = vmatprep.subr.mxu0 0.0
      %1925 = vmatpush2.msra.mxu0 0.0
      %1926 = vmatprep.subr.mxu0 0.0
      %1927 = vmatpush2.msra.mxu0 0.0
      %1928 = vmatprep.subr.mxu0 0.0
      %1929 = vmatpush2.msra.mxu0 0.0
      %1930 = vmatprep.subr.mxu0 0.0
      %1931 = vmatpush2.msra.mxu0 0.0
      %1932 = vmatprep.subr.mxu0 0.0
      %1933 = vmatpush2.msra.mxu0 0.0
      %1934 = vmatprep.subr.mxu0 0.0
      %1935 = vmatpush2.msra.mxu0 0.0
      %1936 = vmatprep.subr.mxu0 0.0
      %1937 = vmatpush2.msra.mxu0 0.0
      %1938 = vmatprep.subr.mxu0 0.0
      %1939 = vmatpush2.msra.mxu0 0.0
      %1940 = vmatprep.subr.mxu0 0.0
      %1941 = vmatpush2.msra.mxu0 0.0
      %1942 = vmatprep.subr.mxu0 0.0
      %1943 = vmatpush2.msra.mxu0 0.0
      %1944 = vmatprep.subr.mxu0 0.0
      %1945 = vmatpush2.msra.mxu0 0.0
      %1946 = vmatprep.subr.mxu0 0.0
      %1947 = vmatpush2.msra.mxu0 0.0
      %1948 = vmatprep.subr.mxu0 0.0
      %1949 = vmatpush2.msra.mxu0 0.0
      %1950 = vmatprep.subr.mxu0 0.0
      %1951 = vmatpush2.msra.mxu0 0.0
      %1952 = vmatprep.subr.mxu0 0.0
      %1953 = vmatpush2.msra.mxu0 0.0
      %1954 = vmatprep.mubr.f32.mxu0 0.0
      %1955 = vmatmul.mubr.f32.gmra.mxu0 %v1795
      %v1956 = vpop.f32.mrf.mxu0
      %v1957 = vadd.f32 %v827, %v1956
      %v1958 = vpop.f32.mrf.mxu0
      %1959 = vmatprep.mubr.f32.mxu0 0.0
      %1960 = vmatmul.mubr.f32.gmra.mxu0 %v1798
      %v1961 = vpop.f32.mrf.mxu0
      %v1962 = vadd.f32 %v827, %v1961
      %v1963 = vpop.f32.mrf.mxu0
      %1964 = vmatprep.mubr.f32.mxu0 0.0
      %1965 = vmatmul.mubr.f32.gmra.mxu0 %v1801
      %v1966 = vpop.f32.mrf.mxu0
      %v1967 = vadd.f32 %v827, %v1966
      %v1968 = vpop.f32.mrf.mxu0
      %1969 = vmatprep.mubr.f32.mxu0 0.0
      %1970 = vmatmul.mubr.f32.gmra.mxu0 %v1804
      %v1971 = vpop.f32.mrf.mxu0
      %v1972 = vadd.f32 %v827, %v1971
      %v1973 = vpop.f32.mrf.mxu0
      %1974 = vmatprep.mubr.f32.mxu0 0.0
      %1975 = vmatmul.mubr.f32.gmra.mxu0 %v1807
      %v1976 = vpop.f32.mrf.mxu0
      %v1977 = vadd.f32 %v827, %v1976
      %v1978 = vpop.f32.mrf.mxu0
      %1979 = vmatprep.mubr.f32.mxu0 0.0
      %1980 = vmatmul.mubr.f32.gmra.mxu0 %v1810
      %v1981 = vpop.f32.mrf.mxu0
      %v1982 = vadd.f32 %v827, %v1981
      %v1983 = vpop.f32.mrf.mxu0
      %1984 = vmatprep.mubr.f32.mxu0 0.0
      %1985 = vmatmul.mubr.f32.gmra.mxu0 %v1813
      %v1986 = vpop.f32.mrf.mxu0
      %v1987 = vadd.f32 %v827, %v1986
      %v1988 = vpop.f32.mrf.mxu0
      %1989 = vmatprep.mubr.f32.mxu0 0.0
      %1990 = vmatmul.mubr.f32.gmra.mxu0 %v1816
      %v1991 = vpop.f32.mrf.mxu0
      %v1992 = vadd.f32 %v827, %v1991
      %v1993 = vpop.f32.mrf.mxu0
      %1994 = vmatprep.mubr.f32.mxu0 0.0
      %1995 = vmatmul.mubr.f32.gmra.mxu0 %v1819
      %v1996 = vpop.f32.mrf.mxu0
      %v1997 = vadd.f32 %v827, %v1996
      %v1998 = vpop.f32.mrf.mxu0
      %1999 = vmatprep.mubr.f32.mxu0 0.0
      %2000 = vmatmul.mubr.f32.gmra.mxu0 %v1822
      %v2001 = vpop.f32.mrf.mxu0
      %v2002 = vadd.f32 %v827, %v2001
      %v2003 = vpop.f32.mrf.mxu0
      %2004 = vmatprep.mubr.f32.mxu0 0.0
      %2005 = vmatmul.mubr.f32.gmra.mxu0 %v1825
      %v2006 = vpop.f32.mrf.mxu0
      %v2007 = vadd.f32 %v827, %v2006
      %v2008 = vpop.f32.mrf.mxu0
      %2009 = vmatprep.mubr.f32.mxu0 0.0
      %2010 = vmatmul.mubr.f32.gmra.mxu0 %v1828
      %v2011 = vpop.f32.mrf.mxu0
      %v2012 = vadd.f32 %v827, %v2011
      %v2013 = vpop.f32.mrf.mxu0
      %2014 = vmatprep.mubr.f32.mxu0 0.0
      %2015 = vmatmul.mubr.f32.gmra.mxu0 %v1831
      %v2016 = vpop.f32.mrf.mxu0
      %v2017 = vadd.f32 %v827, %v2016
      %v2018 = vpop.f32.mrf.mxu0
      %2019 = vmatprep.mubr.f32.mxu0 0.0
      %2020 = vmatmul.mubr.f32.gmra.mxu0 %v1834
      %v2021 = vpop.f32.mrf.mxu0
      %v2022 = vadd.f32 %v827, %v2021
      %v2023 = vpop.f32.mrf.mxu0
      %2024 = vmatprep.mubr.f32.mxu0 0.0
      %2025 = vmatmul.mubr.f32.gmra.mxu0 %v1837
      %v2026 = vpop.f32.mrf.mxu0
      %v2027 = vadd.f32 %v827, %v2026
      %v2028 = vpop.f32.mrf.mxu0
      %2029 = vmatprep.mubr.f32.mxu0 0.0
      %2030 = vmatmul.mubr.f32.gmra.mxu0 %v1840
      %v2031 = vpop.f32.mrf.mxu0
      %v2032 = vadd.f32 %v827, %v2031
      %v2033 = vpop.f32.mrf.mxu0
      %2034 = vmatprep.mubr.f32.mxu0 0.0
      %2035 = vmatmul.mubr.f32.gmra.mxu0 %v1843
      %v2036 = vpop.f32.mrf.mxu0
      %v2037 = vadd.f32 %v827, %v2036
      %v2038 = vpop.f32.mrf.mxu0
      %2039 = vmatprep.mubr.f32.mxu0 0.0
      %2040 = vmatmul.mubr.f32.gmra.mxu0 %v1846
      %v2041 = vpop.f32.mrf.mxu0
      %v2042 = vadd.f32 %v827, %v2041
      %v2043 = vpop.f32.mrf.mxu0
      %2044 = vmatprep.mubr.f32.mxu0 0.0
      %2045 = vmatmul.mubr.f32.gmra.mxu0 %v1849
      %v2046 = vpop.f32.mrf.mxu0
      %v2047 = vadd.f32 %v827, %v2046
      %v2048 = vpop.f32.mrf.mxu0
      %2049 = vmatprep.mubr.f32.mxu0 0.0
      %2050 = vmatmul.mubr.f32.gmra.mxu0 %v1852
      %v2051 = vpop.f32.mrf.mxu0
      %v2052 = vadd.f32 %v827, %v2051
      %v2053 = vpop.f32.mrf.mxu0
      %2054 = vmatprep.mubr.f32.mxu0 0.0
      %2055 = vmatmul.mubr.f32.gmra.mxu0 %v1855
      %v2056 = vpop.f32.mrf.mxu0
      %v2057 = vadd.f32 %v827, %v2056
      %v2058 = vpop.f32.mrf.mxu0
      %2059 = vmatprep.mubr.f32.mxu0 0.0
      %2060 = vmatmul.mubr.f32.gmra.mxu0 %v1858
      %v2061 = vpop.f32.mrf.mxu0
      %v2062 = vadd.f32 %v827, %v2061
      %v2063 = vpop.f32.mrf.mxu0
      %2064 = vmatprep.mubr.f32.mxu0 0.0
      %2065 = vmatmul.mubr.f32.gmra.mxu0 %v1861
      %v2066 = vpop.f32.mrf.mxu0
      %v2067 = vadd.f32 %v827, %v2066
      %v2068 = vpop.f32.mrf.mxu0
      %2069 = vmatprep.mubr.f32.mxu0 0.0
      %2070 = vmatmul.mubr.f32.gmra.mxu0 %v1864
      %v2071 = vpop.f32.mrf.mxu0
      %v2072 = vadd.f32 %v827, %v2071
      %v2073 = vpop.f32.mrf.mxu0
      %2074 = vmatprep.mubr.f32.mxu0 0.0
      %2075 = vmatmul.mubr.f32.gmra.mxu0 %v1867
      %v2076 = vpop.f32.mrf.mxu0
      %v2077 = vadd.f32 %v827, %v2076
      %v2078 = vpop.f32.mrf.mxu0
      %2079 = vmatprep.mubr.f32.mxu0 0.0
      %2080 = vmatmul.mubr.f32.gmra.mxu0 %v1870
      %v2081 = vpop.f32.mrf.mxu0
      %v2082 = vadd.f32 %v827, %v2081
      %v2083 = vpop.f32.mrf.mxu0
      %2084 = vmatprep.mubr.f32.mxu0 0.0
      %2085 = vmatmul.mubr.f32.gmra.mxu0 %v1873
      %v2086 = vpop.f32.mrf.mxu0
      %v2087 = vadd.f32 %v827, %v2086
      %v2088 = vpop.f32.mrf.mxu0
      %2089 = vmatprep.mubr.f32.mxu0 0.0
      %2090 = vmatmul.mubr.f32.gmra.mxu0 %v1876
      %v2091 = vpop.f32.mrf.mxu0
      %v2092 = vadd.f32 %v827, %v2091
      %v2093 = vpop.f32.mrf.mxu0
      %2094 = vmatprep.mubr.f32.mxu0 0.0
      %2095 = vmatmul.mubr.f32.gmra.mxu0 %v1879
      %v2096 = vpop.f32.mrf.mxu0
      %v2097 = vadd.f32 %v827, %v2096
      %v2098 = vpop.f32.mrf.mxu0
      %2099 = vmatprep.mubr.f32.mxu0 0.0
      %2100 = vmatmul.mubr.f32.gmra.mxu0 %v1882
      %v2101 = vpop.f32.mrf.mxu0
      %v2102 = vadd.f32 %v827, %v2101
      %v2103 = vpop.f32.mrf.mxu0
      %2104 = vmatprep.mubr.f32.mxu0 0.0
      %2105 = vmatmul.mubr.f32.gmra.mxu0 %v1885
      %v2106 = vpop.f32.mrf.mxu0
      %v2107 = vadd.f32 %v827, %v2106
      %v2108 = vpop.f32.mrf.mxu0
      %2109 = vmatprep.mubr.f32.mxu0 0.0
      %2110 = vmatmul.mubr.f32.gmra.mxu0 %v1888
      %v2111 = vpop.f32.mrf.mxu0
      %v2112 = vadd.f32 %v827, %v2111
      %v2113 = vpop.f32.mrf.mxu0
      %2114 = vdwg.mxu0
      %s2115 = scalar_lea.vmem %s206, 256
      %2116 = vst.msk [vmem:[%s2115] sm:$0xff] %vm722, %v1957
      %2117 = vst.msk [vmem:[%s2115 + $0x8] sm:$0xff] %vm722, %v1962
      %2118 = vst.msk [vmem:[%s2115 + $0x10] sm:$0xff] %vm722, %v1967
      %2119 = vst.msk [vmem:[%s2115 + $0x18] sm:$0xff] %vm722, %v1972
      %2120 = vst.msk [vmem:[%s2115 + $0x20] sm:$0xff] %vm722, %v1977
      %2121 = vst.msk [vmem:[%s2115 + $0x28] sm:$0xff] %vm722, %v1982
      %2122 = vst.msk [vmem:[%s2115 + $0x30] sm:$0xff] %vm722, %v1987
      %2123 = vst.msk [vmem:[%s2115 + $0x38] sm:$0xff] %vm722, %v1992
      %2124 = vst.msk [vmem:[%s2115 + $0x40] sm:$0xff] %vm722, %v1997
      %2125 = vst.msk [vmem:[%s2115 + $0x48] sm:$0xff] %vm722, %v2002
      %2126 = vst.msk [vmem:[%s2115 + $0x50] sm:$0xff] %vm722, %v2007
      %2127 = vst.msk [vmem:[%s2115 + $0x58] sm:$0xff] %vm722, %v2012
      %2128 = vst.msk [vmem:[%s2115 + $0x60] sm:$0xff] %vm722, %v2017
      %2129 = vst.msk [vmem:[%s2115 + $0x68] sm:$0xff] %vm722, %v2022
      %2130 = vst.msk [vmem:[%s2115 + $0x70] sm:$0xff] %vm722, %v2027
      %2131 = vst.msk [vmem:[%s2115 + $0x78] sm:$0xff] %vm722, %v2032
      %2132 = vst.msk [vmem:[%s2115 + $0x80] sm:$0xff] %vm722, %v2037
      %2133 = vst.msk [vmem:[%s2115 + $0x88] sm:$0xff] %vm722, %v2042
      %2134 = vst.msk [vmem:[%s2115 + $0x90] sm:$0xff] %vm722, %v2047
      %2135 = vst.msk [vmem:[%s2115 + $0x98] sm:$0xff] %vm722, %v2052
      %2136 = vst.msk [vmem:[%s2115 + $0xa0] sm:$0xff] %vm722, %v2057
      %2137 = vst.msk [vmem:[%s2115 + $0xa8] sm:$0xff] %vm722, %v2062
      %2138 = vst.msk [vmem:[%s2115 + $0xb0] sm:$0xff] %vm722, %v2067
      %2139 = vst.msk [vmem:[%s2115 + $0xb8] sm:$0xff] %vm722, %v2072
      %2140 = vst.msk [vmem:[%s2115 + $0xc0] sm:$0xff] %vm722, %v2077
      %2141 = vst.msk [vmem:[%s2115 + $0xc8] sm:$0xff] %vm722, %v2082
      %2142 = vst.msk [vmem:[%s2115 + $0xd0] sm:$0xff] %vm722, %v2087
      %2143 = vst.msk [vmem:[%s2115 + $0xd8] sm:$0xff] %vm722, %v2092
      %2144 = vst.msk [vmem:[%s2115 + $0xe0] sm:$0xff] %vm722, %v2097
      %2145 = vst.msk [vmem:[%s2115 + $0xe8] sm:$0xff] %vm722, %v2102
      %2146 = vst.msk [vmem:[%s2115 + $0xf0] sm:$0xff] %vm722, %v2107
      %2147 = vst.msk [vmem:[%s2115 + $0xf8] sm:$0xff] %vm722, %v2112
      %v2148 = vld [vmem:[%s273] sm:$0xff]
      %v2149 = vld [vmem:[%s273 + $0x8] sm:$0xff]
      %v2150 = vld [vmem:[%s273 + $0x18] sm:$0xff]
      %v2151 = vld [vmem:[%s273 + $0x20] sm:$0xff]
      %v2152 = vld [vmem:[%s273 + $0x30] sm:$0xff]
      %v2153 = vld [vmem:[%s273 + $0x38] sm:$0xff]
      %v2154 = vld [vmem:[%s273 + $0x48] sm:$0xff]
      %v2155 = vld [vmem:[%s273 + $0x50] sm:$0xff]
      %v2156 = vld [vmem:[%s273 + $0x60] sm:$0xff]
      %v2157 = vld [vmem:[%s273 + $0x68] sm:$0xff]
      %v2158 = vld [vmem:[%s273 + $0x78] sm:$0xff]
      %v2159 = vld [vmem:[%s273 + $0x80] sm:$0xff]
      %v2160 = vld [vmem:[%s273 + $0x90] sm:$0xff]
      %v2161 = vld [vmem:[%s273 + $0x98] sm:$0xff]
      %v2162 = vld [vmem:[%s273 + $0xa8] sm:$0xff]
      %v2163 = vld [vmem:[%s273 + $0xb0] sm:$0xff]
      %v2164 = vld [vmem:[%s273 + $0xc0] sm:$0xff]
      %v2165 = vld [vmem:[%s273 + $0xc8] sm:$0xff]
      %v2166 = vld [vmem:[%s273 + $0xd8] sm:$0xff]
      %v2167 = vld [vmem:[%s273 + $0xe0] sm:$0xff]
      %v2168 = vld [vmem:[%s273 + $0xf0] sm:$0xff]
      %v2169 = vld [vmem:[%s273 + $0xf8] sm:$0xff]
      %v2170 = vld [vmem:[%s273 + $0x108] sm:$0xff]
      %v2171 = vld [vmem:[%s273 + $0x110] sm:$0xff]
      %v2172 = vld [vmem:[%s273 + $0x120] sm:$0xff]
      %v2173 = vld [vmem:[%s273 + $0x128] sm:$0xff]
      %v2174 = vld [vmem:[%s273 + $0x138] sm:$0xff]
      %v2175 = vld [vmem:[%s273 + $0x140] sm:$0xff]
      %v2176 = vld [vmem:[%s273 + $0x150] sm:$0xff]
      %v2177 = vld [vmem:[%s273 + $0x158] sm:$0xff]
      %v2178 = vld [vmem:[%s273 + $0x168] sm:$0xff]
      %v2179 = vld [vmem:[%s273 + $0x170] sm:$0xff]
      %v2180 = vld [vmem:[%s273 + $0x1] sm:$0xff]
      %v2181 = vld [vmem:[%s273 + $0x9] sm:$0xff]
      %v2182 = vld [vmem:[%s273 + $0x19] sm:$0xff]
      %v2183 = vld [vmem:[%s273 + $0x21] sm:$0xff]
      %v2184 = vld [vmem:[%s273 + $0x31] sm:$0xff]
      %v2185 = vld [vmem:[%s273 + $0x39] sm:$0xff]
      %v2186 = vld [vmem:[%s273 + $0x49] sm:$0xff]
      %v2187 = vld [vmem:[%s273 + $0x51] sm:$0xff]
      %v2188 = vld [vmem:[%s273 + $0x61] sm:$0xff]
      %v2189 = vld [vmem:[%s273 + $0x69] sm:$0xff]
      %v2190 = vld [vmem:[%s273 + $0x79] sm:$0xff]
      %v2191 = vld [vmem:[%s273 + $0x81] sm:$0xff]
      %v2192 = vld [vmem:[%s273 + $0x91] sm:$0xff]
      %v2193 = vld [vmem:[%s273 + $0x99] sm:$0xff]
      %v2194 = vld [vmem:[%s273 + $0xa9] sm:$0xff]
      %v2195 = vld [vmem:[%s273 + $0xb1] sm:$0xff]
      %v2196 = vld [vmem:[%s273 + $0xc1] sm:$0xff]
      %v2197 = vld [vmem:[%s273 + $0xc9] sm:$0xff]
      %v2198 = vld [vmem:[%s273 + $0xd9] sm:$0xff]
      %v2199 = vld [vmem:[%s273 + $0xe1] sm:$0xff]
      %v2200 = vld [vmem:[%s273 + $0xf1] sm:$0xff]
      %v2201 = vld [vmem:[%s273 + $0xf9] sm:$0xff]
      %v2202 = vld [vmem:[%s273 + $0x109] sm:$0xff]
      %v2203 = vld [vmem:[%s273 + $0x111] sm:$0xff]
      %v2204 = vld [vmem:[%s273 + $0x121] sm:$0xff]
      %v2205 = vld [vmem:[%s273 + $0x129] sm:$0xff]
      %v2206 = vld [vmem:[%s273 + $0x139] sm:$0xff]
      %v2207 = vld [vmem:[%s273 + $0x141] sm:$0xff]
      %v2208 = vld [vmem:[%s273 + $0x151] sm:$0xff]
      %v2209 = vld [vmem:[%s273 + $0x159] sm:$0xff]
      %v2210 = vld [vmem:[%s273 + $0x169] sm:$0xff]
      %v2211 = vld [vmem:[%s273 + $0x171] sm:$0xff]
      %s2212 = scalar_lea.vmem %s197, 48
      %v2213 = vld [vmem:[%s2212] sm:$0xff]
      %v2214 = vld [vmem:[%s2212 + $0x8] sm:$0xff]
      %v2215 = vld [vmem:[%s2212 + $0x18] sm:$0xff]
      %v2216 = vld [vmem:[%s2212 + $0x20] sm:$0xff]
      %v2217 = vld [vmem:[%s2212 + $0x30] sm:$0xff]
      %v2218 = vld [vmem:[%s2212 + $0x38] sm:$0xff]
      %v2219 = vld [vmem:[%s2212 + $0x48] sm:$0xff]
      %v2220 = vld [vmem:[%s2212 + $0x50] sm:$0xff]
      %v2221 = vld [vmem:[%s2212 + $0x60] sm:$0xff]
      %v2222 = vld [vmem:[%s2212 + $0x68] sm:$0xff]
      %v2223 = vld [vmem:[%s2212 + $0x78] sm:$0xff]
      %v2224 = vld [vmem:[%s2212 + $0x80] sm:$0xff]
      %v2225 = vld [vmem:[%s2212 + $0x90] sm:$0xff]
      %v2226 = vld [vmem:[%s2212 + $0x98] sm:$0xff]
      %v2227 = vld [vmem:[%s2212 + $0xa8] sm:$0xff]
      %v2228 = vld [vmem:[%s2212 + $0xb0] sm:$0xff]
      %v2229 = vld [vmem:[%s2212 + $0xc0] sm:$0xff]
      %v2230 = vld [vmem:[%s2212 + $0xc8] sm:$0xff]
      %v2231 = vld [vmem:[%s2212 + $0xd8] sm:$0xff]
      %v2232 = vld [vmem:[%s2212 + $0xe0] sm:$0xff]
      %v2233 = vld [vmem:[%s2212 + $0xf0] sm:$0xff]
      %v2234 = vld [vmem:[%s2212 + $0xf8] sm:$0xff]
      %v2235 = vld [vmem:[%s2212 + $0x108] sm:$0xff]
      %v2236 = vld [vmem:[%s2212 + $0x110] sm:$0xff]
      %v2237 = vld [vmem:[%s2212 + $0x120] sm:$0xff]
      %v2238 = vld [vmem:[%s2212 + $0x128] sm:$0xff]
      %v2239 = vld [vmem:[%s2212 + $0x138] sm:$0xff]
      %v2240 = vld [vmem:[%s2212 + $0x140] sm:$0xff]
      %v2241 = vld [vmem:[%s2212 + $0x150] sm:$0xff]
      %v2242 = vld [vmem:[%s2212 + $0x158] sm:$0xff]
      %v2243 = vld [vmem:[%s2212 + $0x168] sm:$0xff]
      %v2244 = vld [vmem:[%s2212 + $0x170] sm:$0xff]
      %v2245 = vld [vmem:[%s2212 + $0x1] sm:$0xff]
      %v2246 = vld [vmem:[%s2212 + $0x9] sm:$0xff]
      %v2247 = vld [vmem:[%s2212 + $0x19] sm:$0xff]
      %v2248 = vld [vmem:[%s2212 + $0x21] sm:$0xff]
      %v2249 = vld [vmem:[%s2212 + $0x31] sm:$0xff]
      %v2250 = vld [vmem:[%s2212 + $0x39] sm:$0xff]
      %v2251 = vld [vmem:[%s2212 + $0x49] sm:$0xff]
      %v2252 = vld [vmem:[%s2212 + $0x51] sm:$0xff]
      %v2253 = vld [vmem:[%s2212 + $0x61] sm:$0xff]
      %v2254 = vld [vmem:[%s2212 + $0x69] sm:$0xff]
      %v2255 = vld [vmem:[%s2212 + $0x79] sm:$0xff]
      %v2256 = vld [vmem:[%s2212 + $0x81] sm:$0xff]
      %v2257 = vld [vmem:[%s2212 + $0x91] sm:$0xff]
      %v2258 = vld [vmem:[%s2212 + $0x99] sm:$0xff]
      %v2259 = vld [vmem:[%s2212 + $0xa9] sm:$0xff]
      %v2260 = vld [vmem:[%s2212 + $0xb1] sm:$0xff]
      %v2261 = vld [vmem:[%s2212 + $0xc1] sm:$0xff]
      %v2262 = vld [vmem:[%s2212 + $0xc9] sm:$0xff]
      %v2263 = vld [vmem:[%s2212 + $0xd9] sm:$0xff]
      %v2264 = vld [vmem:[%s2212 + $0xe1] sm:$0xff]
      %v2265 = vld [vmem:[%s2212 + $0xf1] sm:$0xff]
      %v2266 = vld [vmem:[%s2212 + $0xf9] sm:$0xff]
      %v2267 = vld [vmem:[%s2212 + $0x109] sm:$0xff]
      %v2268 = vld [vmem:[%s2212 + $0x111] sm:$0xff]
      %v2269 = vld [vmem:[%s2212 + $0x121] sm:$0xff]
      %v2270 = vld [vmem:[%s2212 + $0x129] sm:$0xff]
      %v2271 = vld [vmem:[%s2212 + $0x139] sm:$0xff]
      %v2272 = vld [vmem:[%s2212 + $0x141] sm:$0xff]
      %v2273 = vld [vmem:[%s2212 + $0x151] sm:$0xff]
      %v2274 = vld [vmem:[%s2212 + $0x159] sm:$0xff]
      %v2275 = vld [vmem:[%s2212 + $0x169] sm:$0xff]
      %v2276 = vld [vmem:[%s2212 + $0x171] sm:$0xff]
      %2309 = vrot.lane.b32.xlu0 %v2180, 4
      %v2310 = vpop.permute.xlu0 %2309
      %2311 = vrot.lane.b32.xlu0 %v2181, 4
      %v2312 = vpop.permute.xlu0 %2311
      %2313 = vrot.lane.b32.xlu0 %v2182, 4
      %v2314 = vpop.permute.xlu0 %2313
      %2315 = vrot.lane.b32.xlu0 %v2183, 4
      %v2316 = vpop.permute.xlu0 %2315
      %2317 = vrot.lane.b32.xlu0 %v2184, 4
      %v2318 = vpop.permute.xlu0 %2317
      %2319 = vrot.lane.b32.xlu0 %v2185, 4
      %v2320 = vpop.permute.xlu0 %2319
      %2321 = vrot.lane.b32.xlu0 %v2186, 4
      %v2322 = vpop.permute.xlu0 %2321
      %2323 = vrot.lane.b32.xlu0 %v2187, 4
      %v2324 = vpop.permute.xlu0 %2323
      %2325 = vrot.lane.b32.xlu0 %v2188, 4
      %v2326 = vpop.permute.xlu0 %2325
      %2327 = vrot.lane.b32.xlu0 %v2189, 4
      %v2328 = vpop.permute.xlu0 %2327
      %2329 = vrot.lane.b32.xlu0 %v2190, 4
      %v2330 = vpop.permute.xlu0 %2329
      %2331 = vrot.lane.b32.xlu0 %v2191, 4
      %v2332 = vpop.permute.xlu0 %2331
      %2333 = vrot.lane.b32.xlu0 %v2192, 4
      %v2334 = vpop.permute.xlu0 %2333
      %2335 = vrot.lane.b32.xlu0 %v2193, 4
      %v2336 = vpop.permute.xlu0 %2335
      %2337 = vrot.lane.b32.xlu0 %v2194, 4
      %v2338 = vpop.permute.xlu0 %2337
      %2339 = vrot.lane.b32.xlu0 %v2195, 4
      %v2340 = vpop.permute.xlu0 %2339
      %2341 = vrot.lane.b32.xlu0 %v2196, 4
      %v2342 = vpop.permute.xlu0 %2341
      %2343 = vrot.lane.b32.xlu0 %v2197, 4
      %v2344 = vpop.permute.xlu0 %2343
      %2345 = vrot.lane.b32.xlu0 %v2198, 4
      %v2346 = vpop.permute.xlu0 %2345
      %2347 = vrot.lane.b32.xlu0 %v2199, 4
      %v2348 = vpop.permute.xlu0 %2347
      %2349 = vrot.lane.b32.xlu0 %v2200, 4
      %v2350 = vpop.permute.xlu0 %2349
      %2351 = vrot.lane.b32.xlu0 %v2201, 4
      %v2352 = vpop.permute.xlu0 %2351
      %2353 = vrot.lane.b32.xlu0 %v2202, 4
      %v2354 = vpop.permute.xlu0 %2353
      %2355 = vrot.lane.b32.xlu0 %v2203, 4
      %v2356 = vpop.permute.xlu0 %2355
      %2357 = vrot.lane.b32.xlu0 %v2204, 4
      %v2358 = vpop.permute.xlu0 %2357
      %2359 = vrot.lane.b32.xlu0 %v2205, 4
      %v2360 = vpop.permute.xlu0 %2359
      %2361 = vrot.lane.b32.xlu0 %v2206, 4
      %v2362 = vpop.permute.xlu0 %2361
      %2363 = vrot.lane.b32.xlu0 %v2207, 4
      %v2364 = vpop.permute.xlu0 %2363
      %2365 = vrot.lane.b32.xlu0 %v2208, 4
      %v2366 = vpop.permute.xlu0 %2365
      %2367 = vrot.lane.b32.xlu0 %v2209, 4
      %v2368 = vpop.permute.xlu0 %2367
      %2369 = vrot.lane.b32.xlu0 %v2210, 4
      %v2370 = vpop.permute.xlu0 %2369
      %2371 = vrot.lane.b32.xlu0 %v2211, 4
      %v2372 = vpop.permute.xlu0 %2371
      %2437 = vrot.lane.b32.xlu0 %v2213, 8
      %v2438 = vpop.permute.xlu0 %2437
      %2439 = vrot.lane.b32.xlu0 %v2214, 8
      %v2440 = vpop.permute.xlu0 %2439
      %2441 = vrot.lane.b32.xlu0 %v2215, 8
      %v2442 = vpop.permute.xlu0 %2441
      %2443 = vrot.lane.b32.xlu0 %v2216, 8
      %v2444 = vpop.permute.xlu0 %2443
      %2445 = vrot.lane.b32.xlu0 %v2217, 8
      %v2446 = vpop.permute.xlu0 %2445
      %2447 = vrot.lane.b32.xlu0 %v2218, 8
      %v2448 = vpop.permute.xlu0 %2447
      %2449 = vrot.lane.b32.xlu0 %v2219, 8
      %v2450 = vpop.permute.xlu0 %2449
      %2451 = vrot.lane.b32.xlu0 %v2220, 8
      %v2452 = vpop.permute.xlu0 %2451
      %2453 = vrot.lane.b32.xlu0 %v2221, 8
      %v2454 = vpop.permute.xlu0 %2453
      %2455 = vrot.lane.b32.xlu0 %v2222, 8
      %v2456 = vpop.permute.xlu0 %2455
      %2457 = vrot.lane.b32.xlu0 %v2223, 8
      %v2458 = vpop.permute.xlu0 %2457
      %2459 = vrot.lane.b32.xlu0 %v2224, 8
      %v2460 = vpop.permute.xlu0 %2459
      %2461 = vrot.lane.b32.xlu0 %v2225, 8
      %v2462 = vpop.permute.xlu0 %2461
      %2463 = vrot.lane.b32.xlu0 %v2226, 8
      %v2464 = vpop.permute.xlu0 %2463
      %2465 = vrot.lane.b32.xlu0 %v2227, 8
      %v2466 = vpop.permute.xlu0 %2465
      %2467 = vrot.lane.b32.xlu0 %v2228, 8
      %v2468 = vpop.permute.xlu0 %2467
      %2469 = vrot.lane.b32.xlu0 %v2229, 8
      %v2470 = vpop.permute.xlu0 %2469
      %2471 = vrot.lane.b32.xlu0 %v2230, 8
      %v2472 = vpop.permute.xlu0 %2471
      %2473 = vrot.lane.b32.xlu0 %v2231, 8
      %v2474 = vpop.permute.xlu0 %2473
      %2475 = vrot.lane.b32.xlu0 %v2232, 8
      %v2476 = vpop.permute.xlu0 %2475
      %2477 = vrot.lane.b32.xlu0 %v2233, 8
      %v2478 = vpop.permute.xlu0 %2477
      %2479 = vrot.lane.b32.xlu0 %v2234, 8
      %v2480 = vpop.permute.xlu0 %2479
      %2481 = vrot.lane.b32.xlu0 %v2235, 8
      %v2482 = vpop.permute.xlu0 %2481
      %2483 = vrot.lane.b32.xlu0 %v2236, 8
      %v2484 = vpop.permute.xlu0 %2483
      %2485 = vrot.lane.b32.xlu0 %v2237, 8
      %v2486 = vpop.permute.xlu0 %2485
      %2487 = vrot.lane.b32.xlu0 %v2238, 8
      %v2488 = vpop.permute.xlu0 %2487
      %2489 = vrot.lane.b32.xlu0 %v2239, 8
      %v2490 = vpop.permute.xlu0 %2489
      %2491 = vrot.lane.b32.xlu0 %v2240, 8
      %v2492 = vpop.permute.xlu0 %2491
      %2493 = vrot.lane.b32.xlu0 %v2241, 8
      %v2494 = vpop.permute.xlu0 %2493
      %2495 = vrot.lane.b32.xlu0 %v2242, 8
      %v2496 = vpop.permute.xlu0 %2495
      %2497 = vrot.lane.b32.xlu0 %v2243, 8
      %v2498 = vpop.permute.xlu0 %2497
      %2499 = vrot.lane.b32.xlu0 %v2244, 8
      %v2500 = vpop.permute.xlu0 %2499
      %2565 = vrot.lane.b32.xlu0 %v2245, 12
      %v2566 = vpop.permute.xlu0 %2565
      %2567 = vrot.lane.b32.xlu0 %v2246, 12
      %v2568 = vpop.permute.xlu0 %2567
      %2569 = vrot.lane.b32.xlu0 %v2247, 12
      %v2570 = vpop.permute.xlu0 %2569
      %2571 = vrot.lane.b32.xlu0 %v2248, 12
      %v2572 = vpop.permute.xlu0 %2571
      %2573 = vrot.lane.b32.xlu0 %v2249, 12
      %v2574 = vpop.permute.xlu0 %2573
      %2575 = vrot.lane.b32.xlu0 %v2250, 12
      %v2576 = vpop.permute.xlu0 %2575
      %2577 = vrot.lane.b32.xlu0 %v2251, 12
      %v2578 = vpop.permute.xlu0 %2577
      %2579 = vrot.lane.b32.xlu0 %v2252, 12
      %v2580 = vpop.permute.xlu0 %2579
      %2581 = vrot.lane.b32.xlu0 %v2253, 12
      %v2582 = vpop.permute.xlu0 %2581
      %2583 = vrot.lane.b32.xlu0 %v2254, 12
      %v2584 = vpop.permute.xlu0 %2583
      %2585 = vrot.lane.b32.xlu0 %v2255, 12
      %v2586 = vpop.permute.xlu0 %2585
      %2587 = vrot.lane.b32.xlu0 %v2256, 12
      %v2588 = vpop.permute.xlu0 %2587
      %2589 = vrot.lane.b32.xlu0 %v2257, 12
      %v2590 = vpop.permute.xlu0 %2589
      %2591 = vrot.lane.b32.xlu0 %v2258, 12
      %v2592 = vpop.permute.xlu0 %2591
      %2593 = vrot.lane.b32.xlu0 %v2259, 12
      %v2594 = vpop.permute.xlu0 %2593
      %2595 = vrot.lane.b32.xlu0 %v2260, 12
      %v2596 = vpop.permute.xlu0 %2595
      %2597 = vrot.lane.b32.xlu0 %v2261, 12
      %v2598 = vpop.permute.xlu0 %2597
      %2599 = vrot.lane.b32.xlu0 %v2262, 12
      %v2600 = vpop.permute.xlu0 %2599
      %2601 = vrot.lane.b32.xlu0 %v2263, 12
      %v2602 = vpop.permute.xlu0 %2601
      %2603 = vrot.lane.b32.xlu0 %v2264, 12
      %v2604 = vpop.permute.xlu0 %2603
      %2605 = vrot.lane.b32.xlu0 %v2265, 12
      %v2606 = vpop.permute.xlu0 %2605
      %2607 = vrot.lane.b32.xlu0 %v2266, 12
      %v2608 = vpop.permute.xlu0 %2607
      %2609 = vrot.lane.b32.xlu0 %v2267, 12
      %v2610 = vpop.permute.xlu0 %2609
      %2611 = vrot.lane.b32.xlu0 %v2268, 12
      %v2612 = vpop.permute.xlu0 %2611
      %2613 = vrot.lane.b32.xlu0 %v2269, 12
      %v2614 = vpop.permute.xlu0 %2613
      %2615 = vrot.lane.b32.xlu0 %v2270, 12
      %v2616 = vpop.permute.xlu0 %2615
      %2617 = vrot.lane.b32.xlu0 %v2271, 12
      %v2618 = vpop.permute.xlu0 %2617
      %2619 = vrot.lane.b32.xlu0 %v2272, 12
      %v2620 = vpop.permute.xlu0 %2619
      %2621 = vrot.lane.b32.xlu0 %v2273, 12
      %v2622 = vpop.permute.xlu0 %2621
      %2623 = vrot.lane.b32.xlu0 %v2274, 12
      %v2624 = vpop.permute.xlu0 %2623
      %2625 = vrot.lane.b32.xlu0 %v2275, 12
      %v2626 = vpop.permute.xlu0 %2625
      %2627 = vrot.lane.b32.xlu0 %v2276, 12
      %v2628 = vpop.permute.xlu0 %2627
      %v2661 = vsel %vm722, %v2148, %v2310
      %v2662 = vsel %vm722, %v2149, %v2312
      %v2663 = vsel %vm722, %v2150, %v2314
      %v2664 = vsel %vm722, %v2151, %v2316
      %v2665 = vsel %vm722, %v2152, %v2318
      %v2666 = vsel %vm722, %v2153, %v2320
      %v2667 = vsel %vm722, %v2154, %v2322
      %v2668 = vsel %vm722, %v2155, %v2324
      %v2669 = vsel %vm722, %v2156, %v2326
      %v2670 = vsel %vm722, %v2157, %v2328
      %v2671 = vsel %vm722, %v2158, %v2330
      %v2672 = vsel %vm722, %v2159, %v2332
      %v2673 = vsel %vm722, %v2160, %v2334
      %v2674 = vsel %vm722, %v2161, %v2336
      %v2675 = vsel %vm722, %v2162, %v2338
      %v2676 = vsel %vm722, %v2163, %v2340
      %v2677 = vsel %vm722, %v2164, %v2342
      %v2678 = vsel %vm722, %v2165, %v2344
      %v2679 = vsel %vm722, %v2166, %v2346
      %v2680 = vsel %vm722, %v2167, %v2348
      %v2681 = vsel %vm722, %v2168, %v2350
      %v2682 = vsel %vm722, %v2169, %v2352
      %v2683 = vsel %vm722, %v2170, %v2354
      %v2684 = vsel %vm722, %v2171, %v2356
      %v2685 = vsel %vm722, %v2172, %v2358
      %v2686 = vsel %vm722, %v2173, %v2360
      %v2687 = vsel %vm722, %v2174, %v2362
      %v2688 = vsel %vm722, %v2175, %v2364
      %v2689 = vsel %vm722, %v2176, %v2366
      %v2690 = vsel %vm722, %v2177, %v2368
      %v2691 = vsel %vm722, %v2178, %v2370
      %v2692 = vsel %vm722, %v2179, %v2372
      %v2693 = vsel %vm755, %v2661, %v2438
      %v2694 = vsel %vm755, %v2662, %v2440
      %v2695 = vsel %vm755, %v2663, %v2442
      %v2696 = vsel %vm755, %v2664, %v2444
      %v2697 = vsel %vm755, %v2665, %v2446
      %v2698 = vsel %vm755, %v2666, %v2448
      %v2699 = vsel %vm755, %v2667, %v2450
      %v2700 = vsel %vm755, %v2668, %v2452
      %v2701 = vsel %vm755, %v2669, %v2454
      %v2702 = vsel %vm755, %v2670, %v2456
      %v2703 = vsel %vm755, %v2671, %v2458
      %v2704 = vsel %vm755, %v2672, %v2460
      %v2705 = vsel %vm755, %v2673, %v2462
      %v2706 = vsel %vm755, %v2674, %v2464
      %v2707 = vsel %vm755, %v2675, %v2466
      %v2708 = vsel %vm755, %v2676, %v2468
      %v2709 = vsel %vm755, %v2677, %v2470
      %v2710 = vsel %vm755, %v2678, %v2472
      %v2711 = vsel %vm755, %v2679, %v2474
      %v2712 = vsel %vm755, %v2680, %v2476
      %v2713 = vsel %vm755, %v2681, %v2478
      %v2714 = vsel %vm755, %v2682, %v2480
      %v2715 = vsel %vm755, %v2683, %v2482
      %v2716 = vsel %vm755, %v2684, %v2484
      %v2717 = vsel %vm755, %v2685, %v2486
      %v2718 = vsel %vm755, %v2686, %v2488
      %v2719 = vsel %vm755, %v2687, %v2490
      %v2720 = vsel %vm755, %v2688, %v2492
      %v2721 = vsel %vm755, %v2689, %v2494
      %v2722 = vsel %vm755, %v2690, %v2496
      %v2723 = vsel %vm755, %v2691, %v2498
      %v2724 = vsel %vm755, %v2692, %v2500
      %v2725 = vsel %vm788, %v2693, %v2566
      %v2726 = vsel %vm788, %v2694, %v2568
      %v2727 = vsel %vm788, %v2695, %v2570
      %v2728 = vsel %vm788, %v2696, %v2572
      %v2729 = vsel %vm788, %v2697, %v2574
      %v2730 = vsel %vm788, %v2698, %v2576
      %v2731 = vsel %vm788, %v2699, %v2578
      %v2732 = vsel %vm788, %v2700, %v2580
      %v2733 = vsel %vm788, %v2701, %v2582
      %v2734 = vsel %vm788, %v2702, %v2584
      %v2735 = vsel %vm788, %v2703, %v2586
      %v2736 = vsel %vm788, %v2704, %v2588
      %v2737 = vsel %vm788, %v2705, %v2590
      %v2738 = vsel %vm788, %v2706, %v2592
      %v2739 = vsel %vm788, %v2707, %v2594
      %v2740 = vsel %vm788, %v2708, %v2596
      %v2741 = vsel %vm788, %v2709, %v2598
      %v2742 = vsel %vm788, %v2710, %v2600
      %v2743 = vsel %vm788, %v2711, %v2602
      %v2744 = vsel %vm788, %v2712, %v2604
      %v2745 = vsel %vm788, %v2713, %v2606
      %v2746 = vsel %vm788, %v2714, %v2608
      %v2747 = vsel %vm788, %v2715, %v2610
      %v2748 = vsel %vm788, %v2716, %v2612
      %v2749 = vsel %vm788, %v2717, %v2614
      %v2750 = vsel %vm788, %v2718, %v2616
      %v2751 = vsel %vm788, %v2719, %v2618
      %v2752 = vsel %vm788, %v2720, %v2620
      %v2753 = vsel %vm788, %v2721, %v2622
      %v2754 = vsel %vm788, %v2722, %v2624
      %v2755 = vsel %vm788, %v2723, %v2626
      %v2756 = vsel %vm788, %v2724, %v2628
      %s2757 = scalar_lea.vmem %s1, 32
      %v2758 = vld [vmem:[%s2757] sm:$0xff]
      %v2759 = vld [vmem:[%s2757 + $0x8] sm:$0xff]
      %v2761 = vsel %vm829, %v2725, 0
      %v2764 = vsel %vm829, %v2726, 0
      %v2767 = vsel %vm829, %v2727, 0
      %v2770 = vsel %vm829, %v2728, 0
      %v2773 = vsel %vm829, %v2729, 0
      %v2776 = vsel %vm829, %v2730, 0
      %v2779 = vsel %vm829, %v2731, 0
      %v2782 = vsel %vm829, %v2732, 0
      %v2785 = vsel %vm829, %v2733, 0
      %v2788 = vsel %vm829, %v2734, 0
      %v2791 = vsel %vm829, %v2735, 0
      %v2794 = vsel %vm829, %v2736, 0
      %v2797 = vsel %vm829, %v2737, 0
      %v2800 = vsel %vm829, %v2738, 0
      %v2803 = vsel %vm829, %v2739, 0
      %v2806 = vsel %vm829, %v2740, 0
      %v2809 = vsel %vm829, %v2741, 0
      %v2812 = vsel %vm829, %v2742, 0
      %v2815 = vsel %vm829, %v2743, 0
      %v2818 = vsel %vm829, %v2744, 0
      %v2821 = vsel %vm829, %v2745, 0
      %v2824 = vsel %vm829, %v2746, 0
      %v2827 = vsel %vm829, %v2747, 0
      %v2830 = vsel %vm829, %v2748, 0
      %v2833 = vsel %vm829, %v2749, 0
      %v2836 = vsel %vm829, %v2750, 0
      %v2839 = vsel %vm829, %v2751, 0
      %v2842 = vsel %vm829, %v2752, 0
      %v2845 = vsel %vm829, %v2753, 0
      %v2848 = vsel %vm829, %v2754, 0
      %v2851 = vsel %vm829, %v2755, 0
      %v2854 = vsel %vm829, %v2756, 0
      %2856 = vmatprep.subr.mxu0 0.0
      %2857 = vmatpush1.msra.mxu0 0.0
      %2858 = vmatprep.subr.mxu0 0.0
      %2859 = vmatpush1.msra.mxu0 0.0
      %2860 = vmatprep.subr.mxu0 0.0
      %2861 = vmatpush1.msra.mxu0 0.0
      %2862 = vmatprep.subr.mxu0 0.0
      %2863 = vmatpush1.msra.mxu0 0.0
      %2864 = vmatprep.subr.mxu0 0.0
      %2865 = vmatpush1.msra.mxu0 0.0
      %2866 = vmatprep.subr.mxu0 0.0
      %2867 = vmatpush1.msra.mxu0 0.0
      %2868 = vmatprep.subr.mxu0 0.0
      %2869 = vmatpush1.msra.mxu0 0.0
      %2870 = vmatprep.subr.mxu0 0.0
      %2871 = vmatpush1.msra.mxu0 0.0
      %2872 = vmatprep.subr.mxu0 0.0
      %2873 = vmatpush1.msra.mxu0 0.0
      %2874 = vmatprep.subr.mxu0 0.0
      %2875 = vmatpush1.msra.mxu0 0.0
      %2876 = vmatprep.subr.mxu0 0.0
      %2877 = vmatpush1.msra.mxu0 0.0
      %2878 = vmatprep.subr.mxu0 0.0
      %2879 = vmatpush1.msra.mxu0 0.0
      %2880 = vmatprep.subr.mxu0 0.0
      %2881 = vmatpush1.msra.mxu0 0.0
      %2882 = vmatprep.subr.mxu0 0.0
      %2883 = vmatpush1.msra.mxu0 0.0
      %2884 = vmatprep.subr.mxu0 0.0
      %2885 = vmatpush1.msra.mxu0 %v2759
      %2886 = vmatprep.subr.mxu0 0.0
      %2887 = vmatpush1.msra.mxu0 %v2758
      %2888 = vmatprep.subr.mxu0 0.0
      %2889 = vmatpush2.msra.mxu0 0.0
      %2890 = vmatprep.subr.mxu0 0.0
      %2891 = vmatpush2.msra.mxu0 0.0
      %2892 = vmatprep.subr.mxu0 0.0
      %2893 = vmatpush2.msra.mxu0 0.0
      %2894 = vmatprep.subr.mxu0 0.0
      %2895 = vmatpush2.msra.mxu0 0.0
      %2896 = vmatprep.subr.mxu0 0.0
      %2897 = vmatpush2.msra.mxu0 0.0
      %2898 = vmatprep.subr.mxu0 0.0
      %2899 = vmatpush2.msra.mxu0 0.0
      %2900 = vmatprep.subr.mxu0 0.0
      %2901 = vmatpush2.msra.mxu0 0.0
      %2902 = vmatprep.subr.mxu0 0.0
      %2903 = vmatpush2.msra.mxu0 0.0
      %2904 = vmatprep.subr.mxu0 0.0
      %2905 = vmatpush2.msra.mxu0 0.0
      %2906 = vmatprep.subr.mxu0 0.0
      %2907 = vmatpush2.msra.mxu0 0.0
      %2908 = vmatprep.subr.mxu0 0.0
      %2909 = vmatpush2.msra.mxu0 0.0
      %2910 = vmatprep.subr.mxu0 0.0
      %2911 = vmatpush2.msra.mxu0 0.0
      %2912 = vmatprep.subr.mxu0 0.0
      %2913 = vmatpush2.msra.mxu0 0.0
      %2914 = vmatprep.subr.mxu0 0.0
      %2915 = vmatpush2.msra.mxu0 0.0
      %2916 = vmatprep.subr.mxu0 0.0
      %2917 = vmatpush2.msra.mxu0 0.0
      %2918 = vmatprep.subr.mxu0 0.0
      %2919 = vmatpush2.msra.mxu0 0.0
      %2920 = vmatprep.mubr.f32.mxu0 0.0
      %2921 = vmatmul.mubr.f32.gmra.mxu0 %v2761
      %v2922 = vpop.f32.mrf.mxu0
      %v2923 = vadd.f32 %v827, %v2922
      %v2924 = vpop.f32.mrf.mxu0
      %2925 = vmatprep.mubr.f32.mxu0 0.0
      %2926 = vmatmul.mubr.f32.gmra.mxu0 %v2764
      %v2927 = vpop.f32.mrf.mxu0
      %v2928 = vadd.f32 %v827, %v2927
      %v2929 = vpop.f32.mrf.mxu0
      %2930 = vmatprep.mubr.f32.mxu0 0.0
      %2931 = vmatmul.mubr.f32.gmra.mxu0 %v2767
      %v2932 = vpop.f32.mrf.mxu0
      %v2933 = vadd.f32 %v827, %v2932
      %v2934 = vpop.f32.mrf.mxu0
      %2935 = vmatprep.mubr.f32.mxu0 0.0
      %2936 = vmatmul.mubr.f32.gmra.mxu0 %v2770
      %v2937 = vpop.f32.mrf.mxu0
      %v2938 = vadd.f32 %v827, %v2937
      %v2939 = vpop.f32.mrf.mxu0
      %2940 = vmatprep.mubr.f32.mxu0 0.0
      %2941 = vmatmul.mubr.f32.gmra.mxu0 %v2773
      %v2942 = vpop.f32.mrf.mxu0
      %v2943 = vadd.f32 %v827, %v2942
      %v2944 = vpop.f32.mrf.mxu0
      %2945 = vmatprep.mubr.f32.mxu0 0.0
      %2946 = vmatmul.mubr.f32.gmra.mxu0 %v2776
      %v2947 = vpop.f32.mrf.mxu0
      %v2948 = vadd.f32 %v827, %v2947
      %v2949 = vpop.f32.mrf.mxu0
      %2950 = vmatprep.mubr.f32.mxu0 0.0
      %2951 = vmatmul.mubr.f32.gmra.mxu0 %v2779
      %v2952 = vpop.f32.mrf.mxu0
      %v2953 = vadd.f32 %v827, %v2952
      %v2954 = vpop.f32.mrf.mxu0
      %2955 = vmatprep.mubr.f32.mxu0 0.0
      %2956 = vmatmul.mubr.f32.gmra.mxu0 %v2782
      %v2957 = vpop.f32.mrf.mxu0
      %v2958 = vadd.f32 %v827, %v2957
      %v2959 = vpop.f32.mrf.mxu0
      %2960 = vmatprep.mubr.f32.mxu0 0.0
      %2961 = vmatmul.mubr.f32.gmra.mxu0 %v2785
      %v2962 = vpop.f32.mrf.mxu0
      %v2963 = vadd.f32 %v827, %v2962
      %v2964 = vpop.f32.mrf.mxu0
      %2965 = vmatprep.mubr.f32.mxu0 0.0
      %2966 = vmatmul.mubr.f32.gmra.mxu0 %v2788
      %v2967 = vpop.f32.mrf.mxu0
      %v2968 = vadd.f32 %v827, %v2967
      %v2969 = vpop.f32.mrf.mxu0
      %2970 = vmatprep.mubr.f32.mxu0 0.0
      %2971 = vmatmul.mubr.f32.gmra.mxu0 %v2791
      %v2972 = vpop.f32.mrf.mxu0
      %v2973 = vadd.f32 %v827, %v2972
      %v2974 = vpop.f32.mrf.mxu0
      %2975 = vmatprep.mubr.f32.mxu0 0.0
      %2976 = vmatmul.mubr.f32.gmra.mxu0 %v2794
      %v2977 = vpop.f32.mrf.mxu0
      %v2978 = vadd.f32 %v827, %v2977
      %v2979 = vpop.f32.mrf.mxu0
      %2980 = vmatprep.mubr.f32.mxu0 0.0
      %2981 = vmatmul.mubr.f32.gmra.mxu0 %v2797
      %v2982 = vpop.f32.mrf.mxu0
      %v2983 = vadd.f32 %v827, %v2982
      %v2984 = vpop.f32.mrf.mxu0
      %2985 = vmatprep.mubr.f32.mxu0 0.0
      %2986 = vmatmul.mubr.f32.gmra.mxu0 %v2800
      %v2987 = vpop.f32.mrf.mxu0
      %v2988 = vadd.f32 %v827, %v2987
      %v2989 = vpop.f32.mrf.mxu0
      %2990 = vmatprep.mubr.f32.mxu0 0.0
      %2991 = vmatmul.mubr.f32.gmra.mxu0 %v2803
      %v2992 = vpop.f32.mrf.mxu0
      %v2993 = vadd.f32 %v827, %v2992
      %v2994 = vpop.f32.mrf.mxu0
      %2995 = vmatprep.mubr.f32.mxu0 0.0
      %2996 = vmatmul.mubr.f32.gmra.mxu0 %v2806
      %v2997 = vpop.f32.mrf.mxu0
      %v2998 = vadd.f32 %v827, %v2997
      %v2999 = vpop.f32.mrf.mxu0
      %3000 = vmatprep.mubr.f32.mxu0 0.0
      %3001 = vmatmul.mubr.f32.gmra.mxu0 %v2809
      %v3002 = vpop.f32.mrf.mxu0
      %v3003 = vadd.f32 %v827, %v3002
      %v3004 = vpop.f32.mrf.mxu0
      %3005 = vmatprep.mubr.f32.mxu0 0.0
      %3006 = vmatmul.mubr.f32.gmra.mxu0 %v2812
      %v3007 = vpop.f32.mrf.mxu0
      %v3008 = vadd.f32 %v827, %v3007
      %v3009 = vpop.f32.mrf.mxu0
      %3010 = vmatprep.mubr.f32.mxu0 0.0
      %3011 = vmatmul.mubr.f32.gmra.mxu0 %v2815
      %v3012 = vpop.f32.mrf.mxu0
      %v3013 = vadd.f32 %v827, %v3012
      %v3014 = vpop.f32.mrf.mxu0
      %3015 = vmatprep.mubr.f32.mxu0 0.0
      %3016 = vmatmul.mubr.f32.gmra.mxu0 %v2818
      %v3017 = vpop.f32.mrf.mxu0
      %v3018 = vadd.f32 %v827, %v3017
      %v3019 = vpop.f32.mrf.mxu0
      %3020 = vmatprep.mubr.f32.mxu0 0.0
      %3021 = vmatmul.mubr.f32.gmra.mxu0 %v2821
      %v3022 = vpop.f32.mrf.mxu0
      %v3023 = vadd.f32 %v827, %v3022
      %v3024 = vpop.f32.mrf.mxu0
      %3025 = vmatprep.mubr.f32.mxu0 0.0
      %3026 = vmatmul.mubr.f32.gmra.mxu0 %v2824
      %v3027 = vpop.f32.mrf.mxu0
      %v3028 = vadd.f32 %v827, %v3027
      %v3029 = vpop.f32.mrf.mxu0
      %3030 = vmatprep.mubr.f32.mxu0 0.0
      %3031 = vmatmul.mubr.f32.gmra.mxu0 %v2827
      %v3032 = vpop.f32.mrf.mxu0
      %v3033 = vadd.f32 %v827, %v3032
      %v3034 = vpop.f32.mrf.mxu0
      %3035 = vmatprep.mubr.f32.mxu0 0.0
      %3036 = vmatmul.mubr.f32.gmra.mxu0 %v2830
      %v3037 = vpop.f32.mrf.mxu0
      %v3038 = vadd.f32 %v827, %v3037
      %v3039 = vpop.f32.mrf.mxu0
      %3040 = vmatprep.mubr.f32.mxu0 0.0
      %3041 = vmatmul.mubr.f32.gmra.mxu0 %v2833
      %v3042 = vpop.f32.mrf.mxu0
      %v3043 = vadd.f32 %v827, %v3042
      %v3044 = vpop.f32.mrf.mxu0
      %3045 = vmatprep.mubr.f32.mxu0 0.0
      %3046 = vmatmul.mubr.f32.gmra.mxu0 %v2836
      %v3047 = vpop.f32.mrf.mxu0
      %v3048 = vadd.f32 %v827, %v3047
      %v3049 = vpop.f32.mrf.mxu0
      %3050 = vmatprep.mubr.f32.mxu0 0.0
      %3051 = vmatmul.mubr.f32.gmra.mxu0 %v2839
      %v3052 = vpop.f32.mrf.mxu0
      %v3053 = vadd.f32 %v827, %v3052
      %v3054 = vpop.f32.mrf.mxu0
      %3055 = vmatprep.mubr.f32.mxu0 0.0
      %3056 = vmatmul.mubr.f32.gmra.mxu0 %v2842
      %v3057 = vpop.f32.mrf.mxu0
      %v3058 = vadd.f32 %v827, %v3057
      %v3059 = vpop.f32.mrf.mxu0
      %3060 = vmatprep.mubr.f32.mxu0 0.0
      %3061 = vmatmul.mubr.f32.gmra.mxu0 %v2845
      %v3062 = vpop.f32.mrf.mxu0
      %v3063 = vadd.f32 %v827, %v3062
      %v3064 = vpop.f32.mrf.mxu0
      %3065 = vmatprep.mubr.f32.mxu0 0.0
      %3066 = vmatmul.mubr.f32.gmra.mxu0 %v2848
      %v3067 = vpop.f32.mrf.mxu0
      %v3068 = vadd.f32 %v827, %v3067
      %v3069 = vpop.f32.mrf.mxu0
      %3070 = vmatprep.mubr.f32.mxu0 0.0
      %3071 = vmatmul.mubr.f32.gmra.mxu0 %v2851
      %v3072 = vpop.f32.mrf.mxu0
      %v3073 = vadd.f32 %v827, %v3072
      %v3074 = vpop.f32.mrf.mxu0
      %3075 = vmatprep.mubr.f32.mxu0 0.0
      %3076 = vmatmul.mubr.f32.gmra.mxu0 %v2854
      %v3077 = vpop.f32.mrf.mxu0
      %v3078 = vadd.f32 %v827, %v3077
      %v3079 = vpop.f32.mrf.mxu0
      %3080 = vdwg.mxu0
      %s3081 = scalar_lea.vmem %s206, 512
      %3082 = vst.msk [vmem:[%s3081] sm:$0xff] %vm722, %v2923
      %3083 = vst.msk [vmem:[%s3081 + $0x8] sm:$0xff] %vm722, %v2928
      %3084 = vst.msk [vmem:[%s3081 + $0x10] sm:$0xff] %vm722, %v2933
      %3085 = vst.msk [vmem:[%s3081 + $0x18] sm:$0xff] %vm722, %v2938
      %3086 = vst.msk [vmem:[%s3081 + $0x20] sm:$0xff] %vm722, %v2943
      %3087 = vst.msk [vmem:[%s3081 + $0x28] sm:$0xff] %vm722, %v2948
      %3088 = vst.msk [vmem:[%s3081 + $0x30] sm:$0xff] %vm722, %v2953
      %3089 = vst.msk [vmem:[%s3081 + $0x38] sm:$0xff] %vm722, %v2958
      %3090 = vst.msk [vmem:[%s3081 + $0x40] sm:$0xff] %vm722, %v2963
      %3091 = vst.msk [vmem:[%s3081 + $0x48] sm:$0xff] %vm722, %v2968
      %3092 = vst.msk [vmem:[%s3081 + $0x50] sm:$0xff] %vm722, %v2973
      %3093 = vst.msk [vmem:[%s3081 + $0x58] sm:$0xff] %vm722, %v2978
      %3094 = vst.msk [vmem:[%s3081 + $0x60] sm:$0xff] %vm722, %v2983
      %3095 = vst.msk [vmem:[%s3081 + $0x68] sm:$0xff] %vm722, %v2988
      %3096 = vst.msk [vmem:[%s3081 + $0x70] sm:$0xff] %vm722, %v2993
      %3097 = vst.msk [vmem:[%s3081 + $0x78] sm:$0xff] %vm722, %v2998
      %3098 = vst.msk [vmem:[%s3081 + $0x80] sm:$0xff] %vm722, %v3003
      %3099 = vst.msk [vmem:[%s3081 + $0x88] sm:$0xff] %vm722, %v3008
      %3100 = vst.msk [vmem:[%s3081 + $0x90] sm:$0xff] %vm722, %v3013
      %3101 = vst.msk [vmem:[%s3081 + $0x98] sm:$0xff] %vm722, %v3018
      %3102 = vst.msk [vmem:[%s3081 + $0xa0] sm:$0xff] %vm722, %v3023
      %3103 = vst.msk [vmem:[%s3081 + $0xa8] sm:$0xff] %vm722, %v3028
      %3104 = vst.msk [vmem:[%s3081 + $0xb0] sm:$0xff] %vm722, %v3033
      %3105 = vst.msk [vmem:[%s3081 + $0xb8] sm:$0xff] %vm722, %v3038
      %3106 = vst.msk [vmem:[%s3081 + $0xc0] sm:$0xff] %vm722, %v3043
      %3107 = vst.msk [vmem:[%s3081 + $0xc8] sm:$0xff] %vm722, %v3048
      %3108 = vst.msk [vmem:[%s3081 + $0xd0] sm:$0xff] %vm722, %v3053
      %3109 = vst.msk [vmem:[%s3081 + $0xd8] sm:$0xff] %vm722, %v3058
      %3110 = vst.msk [vmem:[%s3081 + $0xe0] sm:$0xff] %vm722, %v3063
      %3111 = vst.msk [vmem:[%s3081 + $0xe8] sm:$0xff] %vm722, %v3068
      %3112 = vst.msk [vmem:[%s3081 + $0xf0] sm:$0xff] %vm722, %v3073
      %3113 = vst.msk [vmem:[%s3081 + $0xf8] sm:$0xff] %vm722, %v3078
      %v3114 = vld [vmem:[%s273 + $0x1] sm:$0xff]
      %v3115 = vld [vmem:[%s273 + $0x9] sm:$0xff]
      %v3116 = vld [vmem:[%s273 + $0x19] sm:$0xff]
      %v3117 = vld [vmem:[%s273 + $0x21] sm:$0xff]
      %v3118 = vld [vmem:[%s273 + $0x31] sm:$0xff]
      %v3119 = vld [vmem:[%s273 + $0x39] sm:$0xff]
      %v3120 = vld [vmem:[%s273 + $0x49] sm:$0xff]
      %v3121 = vld [vmem:[%s273 + $0x51] sm:$0xff]
      %v3122 = vld [vmem:[%s273 + $0x61] sm:$0xff]
      %v3123 = vld [vmem:[%s273 + $0x69] sm:$0xff]
      %v3124 = vld [vmem:[%s273 + $0x79] sm:$0xff]
      %v3125 = vld [vmem:[%s273 + $0x81] sm:$0xff]
      %v3126 = vld [vmem:[%s273 + $0x91] sm:$0xff]
      %v3127 = vld [vmem:[%s273 + $0x99] sm:$0xff]
      %v3128 = vld [vmem:[%s273 + $0xa9] sm:$0xff]
      %v3129 = vld [vmem:[%s273 + $0xb1] sm:$0xff]
      %v3130 = vld [vmem:[%s273 + $0xc1] sm:$0xff]
      %v3131 = vld [vmem:[%s273 + $0xc9] sm:$0xff]
      %v3132 = vld [vmem:[%s273 + $0xd9] sm:$0xff]
      %v3133 = vld [vmem:[%s273 + $0xe1] sm:$0xff]
      %v3134 = vld [vmem:[%s273 + $0xf1] sm:$0xff]
      %v3135 = vld [vmem:[%s273 + $0xf9] sm:$0xff]
      %v3136 = vld [vmem:[%s273 + $0x109] sm:$0xff]
      %v3137 = vld [vmem:[%s273 + $0x111] sm:$0xff]
      %v3138 = vld [vmem:[%s273 + $0x121] sm:$0xff]
      %v3139 = vld [vmem:[%s273 + $0x129] sm:$0xff]
      %v3140 = vld [vmem:[%s273 + $0x139] sm:$0xff]
      %v3141 = vld [vmem:[%s273 + $0x141] sm:$0xff]
      %v3142 = vld [vmem:[%s273 + $0x151] sm:$0xff]
      %v3143 = vld [vmem:[%s273 + $0x159] sm:$0xff]
      %v3144 = vld [vmem:[%s273 + $0x169] sm:$0xff]
      %v3145 = vld [vmem:[%s273 + $0x171] sm:$0xff]
      %v3146 = vld [vmem:[%s273 + $0x2] sm:$0xff]
      %v3147 = vld [vmem:[%s273 + $0xa] sm:$0xff]
      %v3148 = vld [vmem:[%s273 + $0x1a] sm:$0xff]
      %v3149 = vld [vmem:[%s273 + $0x22] sm:$0xff]
      %v3150 = vld [vmem:[%s273 + $0x32] sm:$0xff]
      %v3151 = vld [vmem:[%s273 + $0x3a] sm:$0xff]
      %v3152 = vld [vmem:[%s273 + $0x4a] sm:$0xff]
      %v3153 = vld [vmem:[%s273 + $0x52] sm:$0xff]
      %v3154 = vld [vmem:[%s273 + $0x62] sm:$0xff]
      %v3155 = vld [vmem:[%s273 + $0x6a] sm:$0xff]
      %v3156 = vld [vmem:[%s273 + $0x7a] sm:$0xff]
      %v3157 = vld [vmem:[%s273 + $0x82] sm:$0xff]
      %v3158 = vld [vmem:[%s273 + $0x92] sm:$0xff]
      %v3159 = vld [vmem:[%s273 + $0x9a] sm:$0xff]
      %v3160 = vld [vmem:[%s273 + $0xaa] sm:$0xff]
      %v3161 = vld [vmem:[%s273 + $0xb2] sm:$0xff]
      %v3162 = vld [vmem:[%s273 + $0xc2] sm:$0xff]
      %v3163 = vld [vmem:[%s273 + $0xca] sm:$0xff]
      %v3164 = vld [vmem:[%s273 + $0xda] sm:$0xff]
      %v3165 = vld [vmem:[%s273 + $0xe2] sm:$0xff]
      %v3166 = vld [vmem:[%s273 + $0xf2] sm:$0xff]
      %v3167 = vld [vmem:[%s273 + $0xfa] sm:$0xff]
      %v3168 = vld [vmem:[%s273 + $0x10a] sm:$0xff]
      %v3169 = vld [vmem:[%s273 + $0x112] sm:$0xff]
      %v3170 = vld [vmem:[%s273 + $0x122] sm:$0xff]
      %v3171 = vld [vmem:[%s273 + $0x12a] sm:$0xff]
      %v3172 = vld [vmem:[%s273 + $0x13a] sm:$0xff]
      %v3173 = vld [vmem:[%s273 + $0x142] sm:$0xff]
      %v3174 = vld [vmem:[%s273 + $0x152] sm:$0xff]
      %v3175 = vld [vmem:[%s273 + $0x15a] sm:$0xff]
      %v3176 = vld [vmem:[%s273 + $0x16a] sm:$0xff]
      %v3177 = vld [vmem:[%s273 + $0x172] sm:$0xff]
      %v3178 = vld [vmem:[%s2212 + $0x1] sm:$0xff]
      %v3179 = vld [vmem:[%s2212 + $0x9] sm:$0xff]
      %v3180 = vld [vmem:[%s2212 + $0x19] sm:$0xff]
      %v3181 = vld [vmem:[%s2212 + $0x21] sm:$0xff]
      %v3182 = vld [vmem:[%s2212 + $0x31] sm:$0xff]
      %v3183 = vld [vmem:[%s2212 + $0x39] sm:$0xff]
      %v3184 = vld [vmem:[%s2212 + $0x49] sm:$0xff]
      %v3185 = vld [vmem:[%s2212 + $0x51] sm:$0xff]
      %v3186 = vld [vmem:[%s2212 + $0x61] sm:$0xff]
      %v3187 = vld [vmem:[%s2212 + $0x69] sm:$0xff]
      %v3188 = vld [vmem:[%s2212 + $0x79] sm:$0xff]
      %v3189 = vld [vmem:[%s2212 + $0x81] sm:$0xff]
      %v3190 = vld [vmem:[%s2212 + $0x91] sm:$0xff]
      %v3191 = vld [vmem:[%s2212 + $0x99] sm:$0xff]
      %v3192 = vld [vmem:[%s2212 + $0xa9] sm:$0xff]
      %v3193 = vld [vmem:[%s2212 + $0xb1] sm:$0xff]
      %v3194 = vld [vmem:[%s2212 + $0xc1] sm:$0xff]
      %v3195 = vld [vmem:[%s2212 + $0xc9] sm:$0xff]
      %v3196 = vld [vmem:[%s2212 + $0xd9] sm:$0xff]
      %v3197 = vld [vmem:[%s2212 + $0xe1] sm:$0xff]
      %v3198 = vld [vmem:[%s2212 + $0xf1] sm:$0xff]
      %v3199 = vld [vmem:[%s2212 + $0xf9] sm:$0xff]
      %v3200 = vld [vmem:[%s2212 + $0x109] sm:$0xff]
      %v3201 = vld [vmem:[%s2212 + $0x111] sm:$0xff]
      %v3202 = vld [vmem:[%s2212 + $0x121] sm:$0xff]
      %v3203 = vld [vmem:[%s2212 + $0x129] sm:$0xff]
      %v3204 = vld [vmem:[%s2212 + $0x139] sm:$0xff]
      %v3205 = vld [vmem:[%s2212 + $0x141] sm:$0xff]
      %v3206 = vld [vmem:[%s2212 + $0x151] sm:$0xff]
      %v3207 = vld [vmem:[%s2212 + $0x159] sm:$0xff]
      %v3208 = vld [vmem:[%s2212 + $0x169] sm:$0xff]
      %v3209 = vld [vmem:[%s2212 + $0x171] sm:$0xff]
      %v3210 = vld [vmem:[%s2212 + $0x2] sm:$0xff]
      %v3211 = vld [vmem:[%s2212 + $0xa] sm:$0xff]
      %v3212 = vld [vmem:[%s2212 + $0x1a] sm:$0xff]
      %v3213 = vld [vmem:[%s2212 + $0x22] sm:$0xff]
      %v3214 = vld [vmem:[%s2212 + $0x32] sm:$0xff]
      %v3215 = vld [vmem:[%s2212 + $0x3a] sm:$0xff]
      %v3216 = vld [vmem:[%s2212 + $0x4a] sm:$0xff]
      %v3217 = vld [vmem:[%s2212 + $0x52] sm:$0xff]
      %v3218 = vld [vmem:[%s2212 + $0x62] sm:$0xff]
      %v3219 = vld [vmem:[%s2212 + $0x6a] sm:$0xff]
      %v3220 = vld [vmem:[%s2212 + $0x7a] sm:$0xff]
      %v3221 = vld [vmem:[%s2212 + $0x82] sm:$0xff]
      %v3222 = vld [vmem:[%s2212 + $0x92] sm:$0xff]
      %v3223 = vld [vmem:[%s2212 + $0x9a] sm:$0xff]
      %v3224 = vld [vmem:[%s2212 + $0xaa] sm:$0xff]
      %v3225 = vld [vmem:[%s2212 + $0xb2] sm:$0xff]
      %v3226 = vld [vmem:[%s2212 + $0xc2] sm:$0xff]
      %v3227 = vld [vmem:[%s2212 + $0xca] sm:$0xff]
      %v3228 = vld [vmem:[%s2212 + $0xda] sm:$0xff]
      %v3229 = vld [vmem:[%s2212 + $0xe2] sm:$0xff]
      %v3230 = vld [vmem:[%s2212 + $0xf2] sm:$0xff]
      %v3231 = vld [vmem:[%s2212 + $0xfa] sm:$0xff]
      %v3232 = vld [vmem:[%s2212 + $0x10a] sm:$0xff]
      %v3233 = vld [vmem:[%s2212 + $0x112] sm:$0xff]
      %v3234 = vld [vmem:[%s2212 + $0x122] sm:$0xff]
      %v3235 = vld [vmem:[%s2212 + $0x12a] sm:$0xff]
      %v3236 = vld [vmem:[%s2212 + $0x13a] sm:$0xff]
      %v3237 = vld [vmem:[%s2212 + $0x142] sm:$0xff]
      %v3238 = vld [vmem:[%s2212 + $0x152] sm:$0xff]
      %v3239 = vld [vmem:[%s2212 + $0x15a] sm:$0xff]
      %v3240 = vld [vmem:[%s2212 + $0x16a] sm:$0xff]
      %v3241 = vld [vmem:[%s2212 + $0x172] sm:$0xff]
      %3274 = vrot.lane.b32.xlu0 %v3146, 4
      %v3275 = vpop.permute.xlu0 %3274
      %3276 = vrot.lane.b32.xlu0 %v3147, 4
      %v3277 = vpop.permute.xlu0 %3276
      %3278 = vrot.lane.b32.xlu0 %v3148, 4
      %v3279 = vpop.permute.xlu0 %3278
      %3280 = vrot.lane.b32.xlu0 %v3149, 4
      %v3281 = vpop.permute.xlu0 %3280
      %3282 = vrot.lane.b32.xlu0 %v3150, 4
      %v3283 = vpop.permute.xlu0 %3282
      %3284 = vrot.lane.b32.xlu0 %v3151, 4
      %v3285 = vpop.permute.xlu0 %3284
      %3286 = vrot.lane.b32.xlu0 %v3152, 4
      %v3287 = vpop.permute.xlu0 %3286
      %3288 = vrot.lane.b32.xlu0 %v3153, 4
      %v3289 = vpop.permute.xlu0 %3288
      %3290 = vrot.lane.b32.xlu0 %v3154, 4
      %v3291 = vpop.permute.xlu0 %3290
      %3292 = vrot.lane.b32.xlu0 %v3155, 4
      %v3293 = vpop.permute.xlu0 %3292
      %3294 = vrot.lane.b32.xlu0 %v3156, 4
      %v3295 = vpop.permute.xlu0 %3294
      %3296 = vrot.lane.b32.xlu0 %v3157, 4
      %v3297 = vpop.permute.xlu0 %3296
      %3298 = vrot.lane.b32.xlu0 %v3158, 4
      %v3299 = vpop.permute.xlu0 %3298
      %3300 = vrot.lane.b32.xlu0 %v3159, 4
      %v3301 = vpop.permute.xlu0 %3300
      %3302 = vrot.lane.b32.xlu0 %v3160, 4
      %v3303 = vpop.permute.xlu0 %3302
      %3304 = vrot.lane.b32.xlu0 %v3161, 4
      %v3305 = vpop.permute.xlu0 %3304
      %3306 = vrot.lane.b32.xlu0 %v3162, 4
      %v3307 = vpop.permute.xlu0 %3306
      %3308 = vrot.lane.b32.xlu0 %v3163, 4
      %v3309 = vpop.permute.xlu0 %3308
      %3310 = vrot.lane.b32.xlu0 %v3164, 4
      %v3311 = vpop.permute.xlu0 %3310
      %3312 = vrot.lane.b32.xlu0 %v3165, 4
      %v3313 = vpop.permute.xlu0 %3312
      %3314 = vrot.lane.b32.xlu0 %v3166, 4
      %v3315 = vpop.permute.xlu0 %3314
      %3316 = vrot.lane.b32.xlu0 %v3167, 4
      %v3317 = vpop.permute.xlu0 %3316
      %3318 = vrot.lane.b32.xlu0 %v3168, 4
      %v3319 = vpop.permute.xlu0 %3318
      %3320 = vrot.lane.b32.xlu0 %v3169, 4
      %v3321 = vpop.permute.xlu0 %3320
      %3322 = vrot.lane.b32.xlu0 %v3170, 4
      %v3323 = vpop.permute.xlu0 %3322
      %3324 = vrot.lane.b32.xlu0 %v3171, 4
      %v3325 = vpop.permute.xlu0 %3324
      %3326 = vrot.lane.b32.xlu0 %v3172, 4
      %v3327 = vpop.permute.xlu0 %3326
      %3328 = vrot.lane.b32.xlu0 %v3173, 4
      %v3329 = vpop.permute.xlu0 %3328
      %3330 = vrot.lane.b32.xlu0 %v3174, 4
      %v3331 = vpop.permute.xlu0 %3330
      %3332 = vrot.lane.b32.xlu0 %v3175, 4
      %v3333 = vpop.permute.xlu0 %3332
      %3334 = vrot.lane.b32.xlu0 %v3176, 4
      %v3335 = vpop.permute.xlu0 %3334
      %3336 = vrot.lane.b32.xlu0 %v3177, 4
      %v3337 = vpop.permute.xlu0 %3336
      %3402 = vrot.lane.b32.xlu0 %v3178, 8
      %v3403 = vpop.permute.xlu0 %3402
      %3404 = vrot.lane.b32.xlu0 %v3179, 8
      %v3405 = vpop.permute.xlu0 %3404
      %3406 = vrot.lane.b32.xlu0 %v3180, 8
      %v3407 = vpop.permute.xlu0 %3406
      %3408 = vrot.lane.b32.xlu0 %v3181, 8
      %v3409 = vpop.permute.xlu0 %3408
      %3410 = vrot.lane.b32.xlu0 %v3182, 8
      %v3411 = vpop.permute.xlu0 %3410
      %3412 = vrot.lane.b32.xlu0 %v3183, 8
      %v3413 = vpop.permute.xlu0 %3412
      %3414 = vrot.lane.b32.xlu0 %v3184, 8
      %v3415 = vpop.permute.xlu0 %3414
      %3416 = vrot.lane.b32.xlu0 %v3185, 8
      %v3417 = vpop.permute.xlu0 %3416
      %3418 = vrot.lane.b32.xlu0 %v3186, 8
      %v3419 = vpop.permute.xlu0 %3418
      %3420 = vrot.lane.b32.xlu0 %v3187, 8
      %v3421 = vpop.permute.xlu0 %3420
      %3422 = vrot.lane.b32.xlu0 %v3188, 8
      %v3423 = vpop.permute.xlu0 %3422
      %3424 = vrot.lane.b32.xlu0 %v3189, 8
      %v3425 = vpop.permute.xlu0 %3424
      %3426 = vrot.lane.b32.xlu0 %v3190, 8
      %v3427 = vpop.permute.xlu0 %3426
      %3428 = vrot.lane.b32.xlu0 %v3191, 8
      %v3429 = vpop.permute.xlu0 %3428
      %3430 = vrot.lane.b32.xlu0 %v3192, 8
      %v3431 = vpop.permute.xlu0 %3430
      %3432 = vrot.lane.b32.xlu0 %v3193, 8
      %v3433 = vpop.permute.xlu0 %3432
      %3434 = vrot.lane.b32.xlu0 %v3194, 8
      %v3435 = vpop.permute.xlu0 %3434
      %3436 = vrot.lane.b32.xlu0 %v3195, 8
      %v3437 = vpop.permute.xlu0 %3436
      %3438 = vrot.lane.b32.xlu0 %v3196, 8
      %v3439 = vpop.permute.xlu0 %3438
      %3440 = vrot.lane.b32.xlu0 %v3197, 8
      %v3441 = vpop.permute.xlu0 %3440
      %3442 = vrot.lane.b32.xlu0 %v3198, 8
      %v3443 = vpop.permute.xlu0 %3442
      %3444 = vrot.lane.b32.xlu0 %v3199, 8
      %v3445 = vpop.permute.xlu0 %3444
      %3446 = vrot.lane.b32.xlu0 %v3200, 8
      %v3447 = vpop.permute.xlu0 %3446
      %3448 = vrot.lane.b32.xlu0 %v3201, 8
      %v3449 = vpop.permute.xlu0 %3448
      %3450 = vrot.lane.b32.xlu0 %v3202, 8
      %v3451 = vpop.permute.xlu0 %3450
      %3452 = vrot.lane.b32.xlu0 %v3203, 8
      %v3453 = vpop.permute.xlu0 %3452
      %3454 = vrot.lane.b32.xlu0 %v3204, 8
      %v3455 = vpop.permute.xlu0 %3454
      %3456 = vrot.lane.b32.xlu0 %v3205, 8
      %v3457 = vpop.permute.xlu0 %3456
      %3458 = vrot.lane.b32.xlu0 %v3206, 8
      %v3459 = vpop.permute.xlu0 %3458
      %3460 = vrot.lane.b32.xlu0 %v3207, 8
      %v3461 = vpop.permute.xlu0 %3460
      %3462 = vrot.lane.b32.xlu0 %v3208, 8
      %v3463 = vpop.permute.xlu0 %3462
      %3464 = vrot.lane.b32.xlu0 %v3209, 8
      %v3465 = vpop.permute.xlu0 %3464
      %3530 = vrot.lane.b32.xlu0 %v3210, 12
      %v3531 = vpop.permute.xlu0 %3530
      %3532 = vrot.lane.b32.xlu0 %v3211, 12
      %v3533 = vpop.permute.xlu0 %3532
      %3534 = vrot.lane.b32.xlu0 %v3212, 12
      %v3535 = vpop.permute.xlu0 %3534
      %3536 = vrot.lane.b32.xlu0 %v3213, 12
      %v3537 = vpop.permute.xlu0 %3536
      %3538 = vrot.lane.b32.xlu0 %v3214, 12
      %v3539 = vpop.permute.xlu0 %3538
      %3540 = vrot.lane.b32.xlu0 %v3215, 12
      %v3541 = vpop.permute.xlu0 %3540
      %3542 = vrot.lane.b32.xlu0 %v3216, 12
      %v3543 = vpop.permute.xlu0 %3542
      %3544 = vrot.lane.b32.xlu0 %v3217, 12
      %v3545 = vpop.permute.xlu0 %3544
      %3546 = vrot.lane.b32.xlu0 %v3218, 12
      %v3547 = vpop.permute.xlu0 %3546
      %3548 = vrot.lane.b32.xlu0 %v3219, 12
      %v3549 = vpop.permute.xlu0 %3548
      %3550 = vrot.lane.b32.xlu0 %v3220, 12
      %v3551 = vpop.permute.xlu0 %3550
      %3552 = vrot.lane.b32.xlu0 %v3221, 12
      %v3553 = vpop.permute.xlu0 %3552
      %3554 = vrot.lane.b32.xlu0 %v3222, 12
      %v3555 = vpop.permute.xlu0 %3554
      %3556 = vrot.lane.b32.xlu0 %v3223, 12
      %v3557 = vpop.permute.xlu0 %3556
      %3558 = vrot.lane.b32.xlu0 %v3224, 12
      %v3559 = vpop.permute.xlu0 %3558
      %3560 = vrot.lane.b32.xlu0 %v3225, 12
      %v3561 = vpop.permute.xlu0 %3560
      %3562 = vrot.lane.b32.xlu0 %v3226, 12
      %v3563 = vpop.permute.xlu0 %3562
      %3564 = vrot.lane.b32.xlu0 %v3227, 12
      %v3565 = vpop.permute.xlu0 %3564
      %3566 = vrot.lane.b32.xlu0 %v3228, 12
      %v3567 = vpop.permute.xlu0 %3566
      %3568 = vrot.lane.b32.xlu0 %v3229, 12
      %v3569 = vpop.permute.xlu0 %3568
      %3570 = vrot.lane.b32.xlu0 %v3230, 12
      %v3571 = vpop.permute.xlu0 %3570
      %3572 = vrot.lane.b32.xlu0 %v3231, 12
      %v3573 = vpop.permute.xlu0 %3572
      %3574 = vrot.lane.b32.xlu0 %v3232, 12
      %v3575 = vpop.permute.xlu0 %3574
      %3576 = vrot.lane.b32.xlu0 %v3233, 12
      %v3577 = vpop.permute.xlu0 %3576
      %3578 = vrot.lane.b32.xlu0 %v3234, 12
      %v3579 = vpop.permute.xlu0 %3578
      %3580 = vrot.lane.b32.xlu0 %v3235, 12
      %v3581 = vpop.permute.xlu0 %3580
      %3582 = vrot.lane.b32.xlu0 %v3236, 12
      %v3583 = vpop.permute.xlu0 %3582
      %3584 = vrot.lane.b32.xlu0 %v3237, 12
      %v3585 = vpop.permute.xlu0 %3584
      %3586 = vrot.lane.b32.xlu0 %v3238, 12
      %v3587 = vpop.permute.xlu0 %3586
      %3588 = vrot.lane.b32.xlu0 %v3239, 12
      %v3589 = vpop.permute.xlu0 %3588
      %3590 = vrot.lane.b32.xlu0 %v3240, 12
      %v3591 = vpop.permute.xlu0 %3590
      %3592 = vrot.lane.b32.xlu0 %v3241, 12
      %v3593 = vpop.permute.xlu0 %3592
      %v3626 = vsel %vm722, %v3114, %v3275
      %v3627 = vsel %vm722, %v3115, %v3277
      %v3628 = vsel %vm722, %v3116, %v3279
      %v3629 = vsel %vm722, %v3117, %v3281
      %v3630 = vsel %vm722, %v3118, %v3283
      %v3631 = vsel %vm722, %v3119, %v3285
      %v3632 = vsel %vm722, %v3120, %v3287
      %v3633 = vsel %vm722, %v3121, %v3289
      %v3634 = vsel %vm722, %v3122, %v3291
      %v3635 = vsel %vm722, %v3123, %v3293
      %v3636 = vsel %vm722, %v3124, %v3295
      %v3637 = vsel %vm722, %v3125, %v3297
      %v3638 = vsel %vm722, %v3126, %v3299
      %v3639 = vsel %vm722, %v3127, %v3301
      %v3640 = vsel %vm722, %v3128, %v3303
      %v3641 = vsel %vm722, %v3129, %v3305
      %v3642 = vsel %vm722, %v3130, %v3307
      %v3643 = vsel %vm722, %v3131, %v3309
      %v3644 = vsel %vm722, %v3132, %v3311
      %v3645 = vsel %vm722, %v3133, %v3313
      %v3646 = vsel %vm722, %v3134, %v3315
      %v3647 = vsel %vm722, %v3135, %v3317
      %v3648 = vsel %vm722, %v3136, %v3319
      %v3649 = vsel %vm722, %v3137, %v3321
      %v3650 = vsel %vm722, %v3138, %v3323
      %v3651 = vsel %vm722, %v3139, %v3325
      %v3652 = vsel %vm722, %v3140, %v3327
      %v3653 = vsel %vm722, %v3141, %v3329
      %v3654 = vsel %vm722, %v3142, %v3331
      %v3655 = vsel %vm722, %v3143, %v3333
      %v3656 = vsel %vm722, %v3144, %v3335
      %v3657 = vsel %vm722, %v3145, %v3337
      %v3658 = vsel %vm755, %v3626, %v3403
      %v3659 = vsel %vm755, %v3627, %v3405
      %v3660 = vsel %vm755, %v3628, %v3407
      %v3661 = vsel %vm755, %v3629, %v3409
      %v3662 = vsel %vm755, %v3630, %v3411
      %v3663 = vsel %vm755, %v3631, %v3413
      %v3664 = vsel %vm755, %v3632, %v3415
      %v3665 = vsel %vm755, %v3633, %v3417
      %v3666 = vsel %vm755, %v3634, %v3419
      %v3667 = vsel %vm755, %v3635, %v3421
      %v3668 = vsel %vm755, %v3636, %v3423
      %v3669 = vsel %vm755, %v3637, %v3425
      %v3670 = vsel %vm755, %v3638, %v3427
      %v3671 = vsel %vm755, %v3639, %v3429
      %v3672 = vsel %vm755, %v3640, %v3431
      %v3673 = vsel %vm755, %v3641, %v3433
      %v3674 = vsel %vm755, %v3642, %v3435
      %v3675 = vsel %vm755, %v3643, %v3437
      %v3676 = vsel %vm755, %v3644, %v3439
      %v3677 = vsel %vm755, %v3645, %v3441
      %v3678 = vsel %vm755, %v3646, %v3443
      %v3679 = vsel %vm755, %v3647, %v3445
      %v3680 = vsel %vm755, %v3648, %v3447
      %v3681 = vsel %vm755, %v3649, %v3449
      %v3682 = vsel %vm755, %v3650, %v3451
      %v3683 = vsel %vm755, %v3651, %v3453
      %v3684 = vsel %vm755, %v3652, %v3455
      %v3685 = vsel %vm755, %v3653, %v3457
      %v3686 = vsel %vm755, %v3654, %v3459
      %v3687 = vsel %vm755, %v3655, %v3461
      %v3688 = vsel %vm755, %v3656, %v3463
      %v3689 = vsel %vm755, %v3657, %v3465
      %v3690 = vsel %vm788, %v3658, %v3531
      %v3691 = vsel %vm788, %v3659, %v3533
      %v3692 = vsel %vm788, %v3660, %v3535
      %v3693 = vsel %vm788, %v3661, %v3537
      %v3694 = vsel %vm788, %v3662, %v3539
      %v3695 = vsel %vm788, %v3663, %v3541
      %v3696 = vsel %vm788, %v3664, %v3543
      %v3697 = vsel %vm788, %v3665, %v3545
      %v3698 = vsel %vm788, %v3666, %v3547
      %v3699 = vsel %vm788, %v3667, %v3549
      %v3700 = vsel %vm788, %v3668, %v3551
      %v3701 = vsel %vm788, %v3669, %v3553
      %v3702 = vsel %vm788, %v3670, %v3555
      %v3703 = vsel %vm788, %v3671, %v3557
      %v3704 = vsel %vm788, %v3672, %v3559
      %v3705 = vsel %vm788, %v3673, %v3561
      %v3706 = vsel %vm788, %v3674, %v3563
      %v3707 = vsel %vm788, %v3675, %v3565
      %v3708 = vsel %vm788, %v3676, %v3567
      %v3709 = vsel %vm788, %v3677, %v3569
      %v3710 = vsel %vm788, %v3678, %v3571
      %v3711 = vsel %vm788, %v3679, %v3573
      %v3712 = vsel %vm788, %v3680, %v3575
      %v3713 = vsel %vm788, %v3681, %v3577
      %v3714 = vsel %vm788, %v3682, %v3579
      %v3715 = vsel %vm788, %v3683, %v3581
      %v3716 = vsel %vm788, %v3684, %v3583
      %v3717 = vsel %vm788, %v3685, %v3585
      %v3718 = vsel %vm788, %v3686, %v3587
      %v3719 = vsel %vm788, %v3687, %v3589
      %v3720 = vsel %vm788, %v3688, %v3591
      %v3721 = vsel %vm788, %v3689, %v3593
      %s3722 = scalar_lea.vmem %s1, 48
      %v3723 = vld [vmem:[%s3722] sm:$0xff]
      %v3724 = vld [vmem:[%s3722 + $0x8] sm:$0xff]
      %v3726 = vsel %vm829, %v3690, 0
      %v3729 = vsel %vm829, %v3691, 0
      %v3732 = vsel %vm829, %v3692, 0
      %v3735 = vsel %vm829, %v3693, 0
      %v3738 = vsel %vm829, %v3694, 0
      %v3741 = vsel %vm829, %v3695, 0
      %v3744 = vsel %vm829, %v3696, 0
      %v3747 = vsel %vm829, %v3697, 0
      %v3750 = vsel %vm829, %v3698, 0
      %v3753 = vsel %vm829, %v3699, 0
      %v3756 = vsel %vm829, %v3700, 0
      %v3759 = vsel %vm829, %v3701, 0
      %v3762 = vsel %vm829, %v3702, 0
      %v3765 = vsel %vm829, %v3703, 0
      %v3768 = vsel %vm829, %v3704, 0
      %v3771 = vsel %vm829, %v3705, 0
      %v3774 = vsel %vm829, %v3706, 0
      %v3777 = vsel %vm829, %v3707, 0
      %v3780 = vsel %vm829, %v3708, 0
      %v3783 = vsel %vm829, %v3709, 0
      %v3786 = vsel %vm829, %v3710, 0
      %v3789 = vsel %vm829, %v3711, 0
      %v3792 = vsel %vm829, %v3712, 0
      %v3795 = vsel %vm829, %v3713, 0
      %v3798 = vsel %vm829, %v3714, 0
      %v3801 = vsel %vm829, %v3715, 0
      %v3804 = vsel %vm829, %v3716, 0
      %v3807 = vsel %vm829, %v3717, 0
      %v3810 = vsel %vm829, %v3718, 0
      %v3813 = vsel %vm829, %v3719, 0
      %v3816 = vsel %vm829, %v3720, 0
      %v3819 = vsel %vm829, %v3721, 0
      %3821 = vmatprep.subr.mxu0 0.0
      %3822 = vmatpush1.msra.mxu0 0.0
      %3823 = vmatprep.subr.mxu0 0.0
      %3824 = vmatpush1.msra.mxu0 0.0
      %3825 = vmatprep.subr.mxu0 0.0
      %3826 = vmatpush1.msra.mxu0 0.0
      %3827 = vmatprep.subr.mxu0 0.0
      %3828 = vmatpush1.msra.mxu0 0.0
      %3829 = vmatprep.subr.mxu0 0.0
      %3830 = vmatpush1.msra.mxu0 0.0
      %3831 = vmatprep.subr.mxu0 0.0
      %3832 = vmatpush1.msra.mxu0 0.0
      %3833 = vmatprep.subr.mxu0 0.0
      %3834 = vmatpush1.msra.mxu0 0.0
      %3835 = vmatprep.subr.mxu0 0.0
      %3836 = vmatpush1.msra.mxu0 0.0
      %3837 = vmatprep.subr.mxu0 0.0
      %3838 = vmatpush1.msra.mxu0 0.0
      %3839 = vmatprep.subr.mxu0 0.0
      %3840 = vmatpush1.msra.mxu0 0.0
      %3841 = vmatprep.subr.mxu0 0.0
      %3842 = vmatpush1.msra.mxu0 0.0
      %3843 = vmatprep.subr.mxu0 0.0
      %3844 = vmatpush1.msra.mxu0 0.0
      %3845 = vmatprep.subr.mxu0 0.0
      %3846 = vmatpush1.msra.mxu0 0.0
      %3847 = vmatprep.subr.mxu0 0.0
      %3848 = vmatpush1.msra.mxu0 0.0
      %3849 = vmatprep.subr.mxu0 0.0
      %3850 = vmatpush1.msra.mxu0 %v3724
      %3851 = vmatprep.subr.mxu0 0.0
      %3852 = vmatpush1.msra.mxu0 %v3723
      %3853 = vmatprep.subr.mxu0 0.0
      %3854 = vmatpush2.msra.mxu0 0.0
      %3855 = vmatprep.subr.mxu0 0.0
      %3856 = vmatpush2.msra.mxu0 0.0
      %3857 = vmatprep.subr.mxu0 0.0
      %3858 = vmatpush2.msra.mxu0 0.0
      %3859 = vmatprep.subr.mxu0 0.0
      %3860 = vmatpush2.msra.mxu0 0.0
      %3861 = vmatprep.subr.mxu0 0.0
      %3862 = vmatpush2.msra.mxu0 0.0
      %3863 = vmatprep.subr.mxu0 0.0
      %3864 = vmatpush2.msra.mxu0 0.0
      %3865 = vmatprep.subr.mxu0 0.0
      %3866 = vmatpush2.msra.mxu0 0.0
      %3867 = vmatprep.subr.mxu0 0.0
      %3868 = vmatpush2.msra.mxu0 0.0
      %3869 = vmatprep.subr.mxu0 0.0
      %3870 = vmatpush2.msra.mxu0 0.0
      %3871 = vmatprep.subr.mxu0 0.0
      %3872 = vmatpush2.msra.mxu0 0.0
      %3873 = vmatprep.subr.mxu0 0.0
      %3874 = vmatpush2.msra.mxu0 0.0
      %3875 = vmatprep.subr.mxu0 0.0
      %3876 = vmatpush2.msra.mxu0 0.0
      %3877 = vmatprep.subr.mxu0 0.0
      %3878 = vmatpush2.msra.mxu0 0.0
      %3879 = vmatprep.subr.mxu0 0.0
      %3880 = vmatpush2.msra.mxu0 0.0
      %3881 = vmatprep.subr.mxu0 0.0
      %3882 = vmatpush2.msra.mxu0 0.0
      %3883 = vmatprep.subr.mxu0 0.0
      %3884 = vmatpush2.msra.mxu0 0.0
      %3885 = vmatprep.mubr.f32.mxu0 0.0
      %3886 = vmatmul.mubr.f32.gmra.mxu0 %v3726
      %v3887 = vpop.f32.mrf.mxu0
      %v3888 = vadd.f32 %v827, %v3887
      %v3889 = vpop.f32.mrf.mxu0
      %3890 = vmatprep.mubr.f32.mxu0 0.0
      %3891 = vmatmul.mubr.f32.gmra.mxu0 %v3729
      %v3892 = vpop.f32.mrf.mxu0
      %v3893 = vadd.f32 %v827, %v3892
      %v3894 = vpop.f32.mrf.mxu0
      %3895 = vmatprep.mubr.f32.mxu0 0.0
      %3896 = vmatmul.mubr.f32.gmra.mxu0 %v3732
      %v3897 = vpop.f32.mrf.mxu0
      %v3898 = vadd.f32 %v827, %v3897
      %v3899 = vpop.f32.mrf.mxu0
      %3900 = vmatprep.mubr.f32.mxu0 0.0
      %3901 = vmatmul.mubr.f32.gmra.mxu0 %v3735
      %v3902 = vpop.f32.mrf.mxu0
      %v3903 = vadd.f32 %v827, %v3902
      %v3904 = vpop.f32.mrf.mxu0
      %3905 = vmatprep.mubr.f32.mxu0 0.0
      %3906 = vmatmul.mubr.f32.gmra.mxu0 %v3738
      %v3907 = vpop.f32.mrf.mxu0
      %v3908 = vadd.f32 %v827, %v3907
      %v3909 = vpop.f32.mrf.mxu0
      %3910 = vmatprep.mubr.f32.mxu0 0.0
      %3911 = vmatmul.mubr.f32.gmra.mxu0 %v3741
      %v3912 = vpop.f32.mrf.mxu0
      %v3913 = vadd.f32 %v827, %v3912
      %v3914 = vpop.f32.mrf.mxu0
      %3915 = vmatprep.mubr.f32.mxu0 0.0
      %3916 = vmatmul.mubr.f32.gmra.mxu0 %v3744
      %v3917 = vpop.f32.mrf.mxu0
      %v3918 = vadd.f32 %v827, %v3917
      %v3919 = vpop.f32.mrf.mxu0
      %3920 = vmatprep.mubr.f32.mxu0 0.0
      %3921 = vmatmul.mubr.f32.gmra.mxu0 %v3747
      %v3922 = vpop.f32.mrf.mxu0
      %v3923 = vadd.f32 %v827, %v3922
      %v3924 = vpop.f32.mrf.mxu0
      %3925 = vmatprep.mubr.f32.mxu0 0.0
      %3926 = vmatmul.mubr.f32.gmra.mxu0 %v3750
      %v3927 = vpop.f32.mrf.mxu0
      %v3928 = vadd.f32 %v827, %v3927
      %v3929 = vpop.f32.mrf.mxu0
      %3930 = vmatprep.mubr.f32.mxu0 0.0
      %3931 = vmatmul.mubr.f32.gmra.mxu0 %v3753
      %v3932 = vpop.f32.mrf.mxu0
      %v3933 = vadd.f32 %v827, %v3932
      %v3934 = vpop.f32.mrf.mxu0
      %3935 = vmatprep.mubr.f32.mxu0 0.0
      %3936 = vmatmul.mubr.f32.gmra.mxu0 %v3756
      %v3937 = vpop.f32.mrf.mxu0
      %v3938 = vadd.f32 %v827, %v3937
      %v3939 = vpop.f32.mrf.mxu0
      %3940 = vmatprep.mubr.f32.mxu0 0.0
      %3941 = vmatmul.mubr.f32.gmra.mxu0 %v3759
      %v3942 = vpop.f32.mrf.mxu0
      %v3943 = vadd.f32 %v827, %v3942
      %v3944 = vpop.f32.mrf.mxu0
      %3945 = vmatprep.mubr.f32.mxu0 0.0
      %3946 = vmatmul.mubr.f32.gmra.mxu0 %v3762
      %v3947 = vpop.f32.mrf.mxu0
      %v3948 = vadd.f32 %v827, %v3947
      %v3949 = vpop.f32.mrf.mxu0
      %3950 = vmatprep.mubr.f32.mxu0 0.0
      %3951 = vmatmul.mubr.f32.gmra.mxu0 %v3765
      %v3952 = vpop.f32.mrf.mxu0
      %v3953 = vadd.f32 %v827, %v3952
      %v3954 = vpop.f32.mrf.mxu0
      %3955 = vmatprep.mubr.f32.mxu0 0.0
      %3956 = vmatmul.mubr.f32.gmra.mxu0 %v3768
      %v3957 = vpop.f32.mrf.mxu0
      %v3958 = vadd.f32 %v827, %v3957
      %v3959 = vpop.f32.mrf.mxu0
      %3960 = vmatprep.mubr.f32.mxu0 0.0
      %3961 = vmatmul.mubr.f32.gmra.mxu0 %v3771
      %v3962 = vpop.f32.mrf.mxu0
      %v3963 = vadd.f32 %v827, %v3962
      %v3964 = vpop.f32.mrf.mxu0
      %3965 = vmatprep.mubr.f32.mxu0 0.0
      %3966 = vmatmul.mubr.f32.gmra.mxu0 %v3774
      %v3967 = vpop.f32.mrf.mxu0
      %v3968 = vadd.f32 %v827, %v3967
      %v3969 = vpop.f32.mrf.mxu0
      %3970 = vmatprep.mubr.f32.mxu0 0.0
      %3971 = vmatmul.mubr.f32.gmra.mxu0 %v3777
      %v3972 = vpop.f32.mrf.mxu0
      %v3973 = vadd.f32 %v827, %v3972
      %v3974 = vpop.f32.mrf.mxu0
      %3975 = vmatprep.mubr.f32.mxu0 0.0
      %3976 = vmatmul.mubr.f32.gmra.mxu0 %v3780
      %v3977 = vpop.f32.mrf.mxu0
      %v3978 = vadd.f32 %v827, %v3977
      %v3979 = vpop.f32.mrf.mxu0
      %3980 = vmatprep.mubr.f32.mxu0 0.0
      %3981 = vmatmul.mubr.f32.gmra.mxu0 %v3783
      %v3982 = vpop.f32.mrf.mxu0
      %v3983 = vadd.f32 %v827, %v3982
      %v3984 = vpop.f32.mrf.mxu0
      %3985 = vmatprep.mubr.f32.mxu0 0.0
      %3986 = vmatmul.mubr.f32.gmra.mxu0 %v3786
      %v3987 = vpop.f32.mrf.mxu0
      %v3988 = vadd.f32 %v827, %v3987
      %v3989 = vpop.f32.mrf.mxu0
      %3990 = vmatprep.mubr.f32.mxu0 0.0
      %3991 = vmatmul.mubr.f32.gmra.mxu0 %v3789
      %v3992 = vpop.f32.mrf.mxu0
      %v3993 = vadd.f32 %v827, %v3992
      %v3994 = vpop.f32.mrf.mxu0
      %3995 = vmatprep.mubr.f32.mxu0 0.0
      %3996 = vmatmul.mubr.f32.gmra.mxu0 %v3792
      %v3997 = vpop.f32.mrf.mxu0
      %v3998 = vadd.f32 %v827, %v3997
      %v3999 = vpop.f32.mrf.mxu0
      %4000 = vmatprep.mubr.f32.mxu0 0.0
      %4001 = vmatmul.mubr.f32.gmra.mxu0 %v3795
      %v4002 = vpop.f32.mrf.mxu0
      %v4003 = vadd.f32 %v827, %v4002
      %v4004 = vpop.f32.mrf.mxu0
      %4005 = vmatprep.mubr.f32.mxu0 0.0
      %4006 = vmatmul.mubr.f32.gmra.mxu0 %v3798
      %v4007 = vpop.f32.mrf.mxu0
      %v4008 = vadd.f32 %v827, %v4007
      %v4009 = vpop.f32.mrf.mxu0
      %4010 = vmatprep.mubr.f32.mxu0 0.0
      %4011 = vmatmul.mubr.f32.gmra.mxu0 %v3801
      %v4012 = vpop.f32.mrf.mxu0
      %v4013 = vadd.f32 %v827, %v4012
      %v4014 = vpop.f32.mrf.mxu0
      %4015 = vmatprep.mubr.f32.mxu0 0.0
      %4016 = vmatmul.mubr.f32.gmra.mxu0 %v3804
      %v4017 = vpop.f32.mrf.mxu0
      %v4018 = vadd.f32 %v827, %v4017
      %v4019 = vpop.f32.mrf.mxu0
      %4020 = vmatprep.mubr.f32.mxu0 0.0
      %4021 = vmatmul.mubr.f32.gmra.mxu0 %v3807
      %v4022 = vpop.f32.mrf.mxu0
      %v4023 = vadd.f32 %v827, %v4022
      %v4024 = vpop.f32.mrf.mxu0
      %4025 = vmatprep.mubr.f32.mxu0 0.0
      %4026 = vmatmul.mubr.f32.gmra.mxu0 %v3810
      %v4027 = vpop.f32.mrf.mxu0
      %v4028 = vadd.f32 %v827, %v4027
      %v4029 = vpop.f32.mrf.mxu0
      %4030 = vmatprep.mubr.f32.mxu0 0.0
      %4031 = vmatmul.mubr.f32.gmra.mxu0 %v3813
      %v4032 = vpop.f32.mrf.mxu0
      %v4033 = vadd.f32 %v827, %v4032
      %v4034 = vpop.f32.mrf.mxu0
      %4035 = vmatprep.mubr.f32.mxu0 0.0
      %4036 = vmatmul.mubr.f32.gmra.mxu0 %v3816
      %v4037 = vpop.f32.mrf.mxu0
      %v4038 = vadd.f32 %v827, %v4037
      %v4039 = vpop.f32.mrf.mxu0
      %4040 = vmatprep.mubr.f32.mxu0 0.0
      %4041 = vmatmul.mubr.f32.gmra.mxu0 %v3819
      %v4042 = vpop.f32.mrf.mxu0
      %v4043 = vadd.f32 %v827, %v4042
      %v4044 = vpop.f32.mrf.mxu0
      %4045 = vdwg.mxu0
      %s4046 = scalar_lea.vmem %s206, 768
      %4047 = vst.msk [vmem:[%s4046] sm:$0xff] %vm722, %v3888
      %4048 = vst.msk [vmem:[%s4046 + $0x8] sm:$0xff] %vm722, %v3893
      %4049 = vst.msk [vmem:[%s4046 + $0x10] sm:$0xff] %vm722, %v3898
      %4050 = vst.msk [vmem:[%s4046 + $0x18] sm:$0xff] %vm722, %v3903
      %4051 = vst.msk [vmem:[%s4046 + $0x20] sm:$0xff] %vm722, %v3908
      %4052 = vst.msk [vmem:[%s4046 + $0x28] sm:$0xff] %vm722, %v3913
      %4053 = vst.msk [vmem:[%s4046 + $0x30] sm:$0xff] %vm722, %v3918
      %4054 = vst.msk [vmem:[%s4046 + $0x38] sm:$0xff] %vm722, %v3923
      %4055 = vst.msk [vmem:[%s4046 + $0x40] sm:$0xff] %vm722, %v3928
      %4056 = vst.msk [vmem:[%s4046 + $0x48] sm:$0xff] %vm722, %v3933
      %4057 = vst.msk [vmem:[%s4046 + $0x50] sm:$0xff] %vm722, %v3938
      %4058 = vst.msk [vmem:[%s4046 + $0x58] sm:$0xff] %vm722, %v3943
      %4059 = vst.msk [vmem:[%s4046 + $0x60] sm:$0xff] %vm722, %v3948
      %4060 = vst.msk [vmem:[%s4046 + $0x68] sm:$0xff] %vm722, %v3953
      %4061 = vst.msk [vmem:[%s4046 + $0x70] sm:$0xff] %vm722, %v3958
      %4062 = vst.msk [vmem:[%s4046 + $0x78] sm:$0xff] %vm722, %v3963
      %4063 = vst.msk [vmem:[%s4046 + $0x80] sm:$0xff] %vm722, %v3968
      %4064 = vst.msk [vmem:[%s4046 + $0x88] sm:$0xff] %vm722, %v3973
      %4065 = vst.msk [vmem:[%s4046 + $0x90] sm:$0xff] %vm722, %v3978
      %4066 = vst.msk [vmem:[%s4046 + $0x98] sm:$0xff] %vm722, %v3983
      %4067 = vst.msk [vmem:[%s4046 + $0xa0] sm:$0xff] %vm722, %v3988
      %4068 = vst.msk [vmem:[%s4046 + $0xa8] sm:$0xff] %vm722, %v3993
      %4069 = vst.msk [vmem:[%s4046 + $0xb0] sm:$0xff] %vm722, %v3998
      %4070 = vst.msk [vmem:[%s4046 + $0xb8] sm:$0xff] %vm722, %v4003
      %4071 = vst.msk [vmem:[%s4046 + $0xc0] sm:$0xff] %vm722, %v4008
      %4072 = vst.msk [vmem:[%s4046 + $0xc8] sm:$0xff] %vm722, %v4013
      %4073 = vst.msk [vmem:[%s4046 + $0xd0] sm:$0xff] %vm722, %v4018
      %4074 = vst.msk [vmem:[%s4046 + $0xd8] sm:$0xff] %vm722, %v4023
      %4075 = vst.msk [vmem:[%s4046 + $0xe0] sm:$0xff] %vm722, %v4028
      %4076 = vst.msk [vmem:[%s4046 + $0xe8] sm:$0xff] %vm722, %v4033
      %4077 = vst.msk [vmem:[%s4046 + $0xf0] sm:$0xff] %vm722, %v4038
      %4078 = vst.msk [vmem:[%s4046 + $0xf8] sm:$0xff] %vm722, %v4043
      %s4079 = smul.u32 32, %s19
      %p4080 = scmp.lt.s32.totalorder %s18, 1
      %s4081 = scalar_select %p4080, %s18, 1
      %p4082 = scmp.lt.s32.totalorder %s4079, 31
      %s4083 = scalar_select %p4082, %s4079, 31
      %s4084 = smul.addr %s4081, 128
      %s4085 = sadd.s32 %s4083, %s4084
      %s4086 = smul.addr %s4085, 8
      %s4087 = scalar_lea.vmem %s3, %s4086
      // Predicated region
      $region33: #{upsample_forward.1} parent=31 // pred_check
        %p4088 = pneg %p116
      $region34: #{upsample_forward.1} parent=31 // pred_check_branch
        %4090 = sbr.rel (%p4088) target = $region36
      $region35: #{upsample_forward.1} parent=31 // pred_region
        %s4091 = smul.u32 32, %s19
      $region36: #{upsample_forward.1} parent=31 // pred_fallthru
        _
    $region32: #{upsample_forward.1} parent=5 // pred_fallthru
      _
    %p4092 = scmp.le.s32.totalorder 2, %s9
    // Predicated region
    $region37: #{upsample_forward.1} parent=5 // pred_check
      %p4093 = pneg %p4092
    $region38: #{upsample_forward.1} parent=5 // pred_check_branch
      %4095 = sbr.rel (%p4093) target = $region40
    $region39: #{upsample_forward.1} parent=5 // pred_region
      %s4096 = ssub.s32 %s9, 2
      // Predicated region
      $region41: #{upsample_forward.1} parent=39 // pred_check
        %p4097 = pneg %p122
      $region42: #{upsample_forward.1} parent=39 // pred_check_branch
        %4099 = sbr.rel (%p4097) target = $region44
      $region43: #{upsample_forward.1} parent=39 // pred_region
        %s4100 = smul.u32 32, %s21
        %p4101 = scmp.lt.s32.totalorder %s20, 1
        %s4102 = scalar_select %p4101, %s20, 1
        %p4103 = scmp.lt.s32.totalorder %s4100, 31
        %s4104 = scalar_select %p4103, %s4100, 31
        %s4105 = smul.addr %s4102, 128
        %s4106 = sadd.s32 %s4104, %s4105
        %s4107 = smul.addr %s4106, 8
        %s4108 = scalar_lea.vmem %s3, %s4107
      $region44: #{upsample_forward.1} parent=39 // pred_fallthru
        _
    $region40: #{upsample_forward.1} parent=5 // pred_fallthru
      _
  $region6: #{upsample_forward.1} parent=0 // loop_footer
    %s13 = sadd.s32 1, %s9
  $region7: #{upsample_forward.1} parent=0 // loop_footer_branch
    %8 = sbr.rel target = $region3
  $region8: #{upsample_forward.1} parent=0 // loop_exit
    _

</llo_original>
